<compile_context>
chip_gen: v5e
topology: v5e:2x2
jax: 0.10.0
libtpu: 0.0.40
codegen_flags: <defaults>
</compile_context>

<pallas_src>
import jax
import jax.numpy as jnp
from jax.experimental import pallas as pl
from jax.experimental.pallas import tpu as pltpu

NUM_LAYERS = 12
NO_RESIDUAL = (0, 4, 8)   # 0-indexed: GraphConv1 / GraphConv5 / GraphConv9


# ----------------------------------------------------------------------------
# Fused kernel: 12x GraphConv (relu(A h W + b) [+ res]) + readout + fc + logsm
# Processes G graphs per grid step. Activations are lane-dense [G*V, T*C].
# ----------------------------------------------------------------------------
def st_gcn_kernel(adj_ref, sel_ref, h_ref, *refs):
    w_refs = refs[:NUM_LAYERS]                      # kron(I_T, W_i): (T*Cin, T*Cout)
    b_refs = refs[NUM_LAYERS:2 * NUM_LAYERS]        # time-tiled bias: (1, T*Cout) f32
    wexp_ref = refs[2 * NUM_LAYERS]                 # (T*C3, n_class), mean folded in
    bfc_ref = refs[2 * NUM_LAYERS + 1]              # (1, n_class)
    out_ref = refs[2 * NUM_LAYERS + 2]              # (G, n_class)

    adj = adj_ref[...]                              # (G*V, G*V) kron(I_G, A_hat)
    cdtype = adj.dtype                              # matmul operand dtype (f32 or bf16)
    h = h_ref[...].astype(jnp.float32)              # (G*V, T*Cin0), carried in f32

    for i in range(NUM_LAYERS):                     # static unroll (shapes differ)
        agg = jnp.dot(adj, h.astype(cdtype), preferred_element_type=jnp.float32)
        y = jnp.dot(agg.astype(cdtype), w_refs[i][...],
                    preferred_element_type=jnp.float32)
        y = jnp.maximum(y + b_refs[i][...], 0.0)    # single bias+ReLU epilogue (f32)
        if i not in NO_RESIDUAL:
            y = y + h                               # residual; no zeros tensor
        h = y

    # Readout: per-graph node sum via selector matmul, then fc (1/(V*T) mean is
    # pre-folded into wexp). Kept in f32 for accuracy.
    pooled = jnp.dot(sel_ref[...], h, preferred_element_type=jnp.float32)  # (G, T*C3)
    logits = jnp.dot(pooled, wexp_ref[...],
                     preferred_element_type=jnp.float32) + bfc_ref[...]    # (G, n_class)
    m = jnp.max(logits, axis=-1, keepdims=True)
    lse = jnp.log(jnp.sum(jnp.exp(logits - m), axis=-1, keepdims=True)) + m
    out_ref[...] = logits - lse                     # log_softmax (dim=1)


# ----------------------------------------------------------------------------
# One-time parameter preprocessing (outside the per-call jitted forward)
# ----------------------------------------------------------------------------
def _pad_channels(c, T):
    """Smallest c' >= c such that T*c' is a multiple of 128 (when possible)."""
    if (T * c) % 128 == 0:
        return c
    if 128 % T == 0:
        unit = 128 // T
        return ((c + unit - 1) // unit) * unit
    return c


def prepare_st_gcn_params(a_hat, layers, fc, *, T, G, use_bf16=False):
    """Build the grid-invariant, padded, kron'd parameter set (computed once)."""
    V = a_hat.shape[0]
    cdtype = jnp.bfloat16 if use_bf16 else jnp.float32

    cins = [w.shape[0] for (w, _) in layers]
    couts = [w.shape[1] for (w, _) in layers]
    cin_p = [_pad_channels(c, T) for c in cins]
    cout_p = [_pad_channels(c, T) for c in couts]

    eye_t = jnp.eye(T, dtype=jnp.float32)
    ws, bs = [], []
    for (w, b), cip, cop in zip(layers, cin_p, cout_p):
        w_pad = jnp.zeros((cip, cop), jnp.float32).at[:w.shape[0], :w.shape[1]].set(w)
        b_pad = jnp.zeros((cop,), jnp.float32).at[:b.shape[0]].set(b)
        ws.append(jnp.kron(eye_t, w_pad).astype(cdtype))     # (T*Cin_p, T*Cout_p)
        bs.append(jnp.tile(b_pad[None, :], (1, T)))          # (1, T*Cout_p) f32

    wfc, bfc = fc
    c3_p = cout_p[-1]
    wfc_pad = jnp.zeros((wfc.shape[0], c3_p), jnp.float32).at[:, :wfc.shape[1]].set(wfc)
    wexp = jnp.tile(wfc_pad.T, (T, 1)) / float(V * T)        # (T*C3_p, n_class) f32
    bfc2 = bfc[None, :].astype(jnp.float32)                  # (1, n_class)

    # Block-diagonal batched adjacency + per-graph node-sum selector, built once.
    adjG = jnp.kron(jnp.eye(G, dtype=jnp.float32), a_hat).astype(cdtype)   # (G*V, G*V)
    sel = jnp.kron(jnp.eye(G, dtype=jnp.float32),
                   jnp.ones((1, V), jnp.float32))                          # (G, G*V)

    return dict(adjG=adjG, sel=sel, ws=tuple(ws), bs=tuple(bs),
                wexp=wexp, bfc2=bfc2)


def choose_graphs_per_step(B, V, target_rows=128):
    """G so that G*V ~ target MXU rows while keeping >= 2 grid steps (v7x: 2 TCs)."""
    G = max(1, min(B, max(1, target_rows // V)))
    while G > 1 and -(-B // G) < 2:
        G //= 2
    return G


# ----------------------------------------------------------------------------
# Jitted forward (only data-dependent work happens here)
# ----------------------------------------------------------------------------
@jax.jit
def st_gcn_forward(x, params):
    """x: (B, V, T, C0) node features. Returns (B, n_class) log-probs."""
    adjG, sel = params["adjG"], params["sel"]
    ws, bs = params["ws"], params["bs"]
    wexp, bfc2 = params["wexp"], params["bfc2"]

    B, V, T, C0 = x.shape
    G = sel.shape[0]
    GV = adjG.shape[0]
    assert GV == G * V, "adjacency block does not match graph size"
    c0_p = ws[0].shape[0] // T
    n_class = bfc2.shape[1]

    # Pad channels (lane density) and batch (to a multiple of G), lane-dense reshape.
    x = x.astype(jnp.float32)
    if c0_p != C0:
        x = jnp.pad(x, ((0, 0), (0, 0), (0, 0), (0, c0_p - C0)))
    B_pad = ((B + G - 1) // G) * G
    if B_pad != B:
        x = jnp.pad(x, ((0, B_pad - B), (0, 0), (0, 0), (0, 0)))
    h0 = x.reshape(B_pad * V, T * c0_p)
    num_steps = B_pad // G

    def inv_spec(a):                                # grid-invariant: loaded once
        return pl.BlockSpec(a.shape, lambda s: (0, 0))

    in_specs = (
        [inv_spec(adjG), inv_spec(sel),
         pl.BlockSpec((GV, T * c0_p), lambda s: (s, 0))]     # G graphs per step
        + [inv_spec(w) for w in ws]
        + [inv_spec(b_) for b_ in bs]
        + [inv_spec(wexp), inv_spec(bfc2)]
    )
    out_spec = pl.BlockSpec((G, n_class), lambda s: (s, 0))  # dense per-step slab

    # Cost estimate + explicit VMEM limit.
    flops = 0
    for w in ws:
        tk, tn = w.shape
        flops += 2 * B_pad * V * (GV * tk + tk * tn)
    l3 = ws[-1].shape[1]
    flops += 2 * B_pad * (GV * l3 + l3 * n_class)
    param_arrays = (adjG, sel, wexp, bfc2) + tuple(ws) + tuple(bs)
    param_bytes = sum(int(a.size) * a.dtype.itemsize for a in param_arrays)
    max_lane = max([w.shape[1] for w in ws] + [T * c0_p])
    act_slab = GV * max_lane * 4
    vmem_limit = int(min(64 << 20, 3 * param_bytes + 16 * act_slab + (8 << 20)))
    cost = pl.CostEstimate(
        flops=int(flops),
        transcendentals=int(2 * B_pad * n_class),
        bytes_accessed=int(h0.size * 4 + param_bytes + B_pad * n_class * 4),
    )

    out = pl.pallas_call(
        st_gcn_kernel,
        out_shape=jax.ShapeDtypeStruct((B_pad, n_class), jnp.float32),
        grid=(num_steps,),
        in_specs=in_specs,
        out_specs=out_spec,
        compiler_params=pltpu.CompilerParams(
            dimension_semantics=("parallel",),    # steps independent -> megacore
            vmem_limit_bytes=vmem_limit),
        cost_estimate=cost,
    )(adjG, sel, h0, *ws, *bs, wexp, bfc2)
    return out[:B]


# ----------------------------------------------------------------------------
# Pure-JAX reference (matches the PyTorch/DGL Cartesian branch semantics)
# ----------------------------------------------------------------------------
def ref_forward(a_hat, x, layers, fc):
    h = x                                                       # (B, V, T, C)
    for i, (w, b) in enumerate(layers):
        agg = jnp.einsum('uv,bvtc->butc', a_hat, h)             # D^-1/2 A D^-1/2 H
        y = jax.nn.relu(jnp.einsum('butc,cd->butd', agg, w) + b)
        if i not in NO_RESIDUAL:
            y = y + h
        h = y
    readout = jnp.mean(h, axis=(1, 2))                          # mean_nodes + mean(dim=1)
    wfc, bfc = fc
    logits = readout @ wfc.T + bfc
    return jax.nn.log_softmax(logits, axis=-1)


# ----------------------------------------------------------------------------
# Parameter / graph construction helpers
# ----------------------------------------------------------------------------
def make_params(key, in_dim, h1, h2, h3, n_class):
    dims = [(in_dim, h1), (h1, h1), (h1, h1), (h1, h1),
            (h1, h2), (h2, h2), (h2, h2), (h2, h2),
            (h2, h3), (h3, h3), (h3, h3), (h3, h3)]
    keys = jax.random.split(key, 2 * len(dims) + 2)
    layers = []
    for li, (ci, co) in enumerate(dims):
        lim = (6.0 / (ci + co)) ** 0.5
        w = jax.random.uniform(keys[2 * li], (ci, co), jnp.float32, -lim, lim)
        b = 0.1 * jax.random.normal(keys[2 * li + 1], (co,), jnp.float32)
        layers.append((w, b))
    lim = (6.0 / (h3 + n_class)) ** 0.5
    wfc = jax.random.uniform(keys[-2], (n_class, h3), jnp.float32, -lim, lim)
    bfc = 0.1 * jax.random.normal(keys[-1], (n_class,), jnp.float32)
    return layers, (wfc, bfc)


def normalized_chain_adjacency(V):
    """Bidirectional chain 'skeleton', DGL GraphConv norm='both' (no self loops)."""
    A = jnp.zeros((V, V), jnp.float32)
    idx = jnp.arange(V - 1)
    A = A.at[idx, idx + 1].set(1.0)
    A = A.at[idx + 1, idx].set(1.0)
    deg = jnp.sum(A, axis=1)
    dinv = jnp.where(deg > 0, deg ** -0.5, 0.0)   # guard isolated nodes
    return dinv[:, None] * A * dinv[None, :]


# ----------------------------------------------------------------------------
if __name__ == "__main__":
    B, V, T = 16, 16, 8                # graphs, joints per graph, time frames
    in_dim_1, hidden1, hidden2, hidden3, n_class = 4, 16, 24, 32, 8

    key = jax.random.PRNGKey(0)
    k_x, k_p = jax.random.split(key)

    N = B * V
    location = jax.random.normal(k_x, (N, T, in_dim_1), jnp.float32)  # DGL-style feats
    x = location.reshape(B, V, T, in_dim_1)
    a_hat = normalized_chain_adjacency(V)
    layers, fc = make_params(k_p, in_dim_1, hidden1, hidden2, hidden3, n_class)

    G = choose_graphs_per_step(B, V)   # -> 8: G*V = 128 MXU rows, grid = (2,)
    ref = ref_forward(a_hat, x, layers, fc)

    # ---- f32 path: strict semantic check against the reference ----
    params_f32 = prepare_st_gcn_params(a_hat, layers, fc, T=T, G=G, use_bf16=False)
    out = jax.block_until_ready(st_gcn_forward(x, params_f32))
    assert out.shape == (B, n_class)
    assert bool(jnp.all(jnp.isfinite(out)))
    assert bool(jnp.allclose(jnp.sum(jnp.exp(out), axis=-1), 1.0, atol=1e-4))
    assert bool(jnp.allclose(out, ref, atol=1e-4, rtol=1e-4)), (out, ref)

    # ---- bf16 MXU-operand path: sanity check (strict gate is the f32 path) ----
    params_bf16 = prepare_st_gcn_params(a_hat, layers, fc, T=T, G=G, use_bf16=True)
    out_bf = jax.block_until_ready(st_gcn_forward(x, params_bf16))
    assert out_bf.shape == (B, n_class)
    assert bool(jnp.all(jnp.isfinite(out_bf)))
    assert bool(jnp.allclose(jnp.sum(jnp.exp(out_bf), axis=-1), 1.0, atol=1e-3))
    assert float(jnp.max(jnp.abs(out_bf - ref))) < 0.25   # bf16 matmul tolerance

    print("KERNEL_OK")
</pallas_src>

<mosaic_0001>
module attributes {stable_mosaic.version = 11 : i64} {
  func.func @st_gcn_kernel(%arg0: i32, %arg1: memref<128x128xf32, #tpu.memory_space<vmem>>, %arg2: memref<8x128xf32, #tpu.memory_space<vmem>>, %arg3: memref<128x128xf32, #tpu.memory_space<vmem>>, %arg4: memref<128x128xf32, #tpu.memory_space<vmem>>, %arg5: memref<128x128xf32, #tpu.memory_space<vmem>>, %arg6: memref<128x128xf32, #tpu.memory_space<vmem>>, %arg7: memref<128x128xf32, #tpu.memory_space<vmem>>, %arg8: memref<128x256xf32, #tpu.memory_space<vmem>>, %arg9: memref<256x256xf32, #tpu.memory_space<vmem>>, %arg10: memref<256x256xf32, #tpu.memory_space<vmem>>, %arg11: memref<256x256xf32, #tpu.memory_space<vmem>>, %arg12: memref<256x256xf32, #tpu.memory_space<vmem>>, %arg13: memref<256x256xf32, #tpu.memory_space<vmem>>, %arg14: memref<256x256xf32, #tpu.memory_space<vmem>>, %arg15: memref<256x256xf32, #tpu.memory_space<vmem>>, %arg16: memref<1x128xf32, #tpu.memory_space<vmem>>, %arg17: memref<1x128xf32, #tpu.memory_space<vmem>>, %arg18: memref<1x128xf32, #tpu.memory_space<vmem>>, %arg19: memref<1x128xf32, #tpu.memory_space<vmem>>, %arg20: memref<1x256xf32, #tpu.memory_space<vmem>>, %arg21: memref<1x256xf32, #tpu.memory_space<vmem>>, %arg22: memref<1x256xf32, #tpu.memory_space<vmem>>, %arg23: memref<1x256xf32, #tpu.memory_space<vmem>>, %arg24: memref<1x256xf32, #tpu.memory_space<vmem>>, %arg25: memref<1x256xf32, #tpu.memory_space<vmem>>, %arg26: memref<1x256xf32, #tpu.memory_space<vmem>>, %arg27: memref<1x256xf32, #tpu.memory_space<vmem>>, %arg28: memref<256x8xf32, #tpu.memory_space<vmem>>, %arg29: memref<1x8xf32, #tpu.memory_space<vmem>>, %arg30: memref<8x8xf32, #tpu.memory_space<vmem>>) attributes {dimension_semantics = [#tpu.dimension_semantics<parallel>], iteration_bounds = array<i64: 2>, scalar_prefetch = 0 : i64, scratch_operands = 0 : i64, tpu.core_type = #tpu.core_type<tc>, window_params = [{pipeline_mode = #tpu.pipeline_mode<synchronous>, transform_indices = @transform_0, window_bounds = array<i64: 128, 128>}, {pipeline_mode = #tpu.pipeline_mode<synchronous>, transform_indices = @transform_1, window_bounds = array<i64: 8, 128>}, {transform_indices = @transform_2, window_bounds = array<i64: 128, 128>}, {pipeline_mode = #tpu.pipeline_mode<synchronous>, transform_indices = @transform_3, window_bounds = array<i64: 128, 128>}, {pipeline_mode = #tpu.pipeline_mode<synchronous>, transform_indices = @transform_4, window_bounds = array<i64: 128, 128>}, {pipeline_mode = #tpu.pipeline_mode<synchronous>, transform_indices = @transform_5, window_bounds = array<i64: 128, 128>}, {pipeline_mode = #tpu.pipeline_mode<synchronous>, transform_indices = @transform_6, window_bounds = array<i64: 128, 128>}, {pipeline_mode = #tpu.pipeline_mode<synchronous>, transform_indices = @transform_7, window_bounds = array<i64: 128, 256>}, {pipeline_mode = #tpu.pipeline_mode<synchronous>, transform_indices = @transform_8, window_bounds = array<i64: 256, 256>}, {pipeline_mode = #tpu.pipeline_mode<synchronous>, transform_indices = @transform_9, window_bounds = array<i64: 256, 256>}, {pipeline_mode = #tpu.pipeline_mode<synchronous>, transform_indices = @transform_10, window_bounds = array<i64: 256, 256>}, {pipeline_mode = #tpu.pipeline_mode<synchronous>, transform_indices = @transform_11, window_bounds = array<i64: 256, 256>}, {pipeline_mode = #tpu.pipeline_mode<synchronous>, transform_indices = @transform_12, window_bounds = array<i64: 256, 256>}, {pipeline_mode = #tpu.pipeline_mode<synchronous>, transform_indices = @transform_13, window_bounds = array<i64: 256, 256>}, {pipeline_mode = #tpu.pipeline_mode<synchronous>, transform_indices = @transform_14, window_bounds = array<i64: 256, 256>}, {pipeline_mode = #tpu.pipeline_mode<synchronous>, transform_indices = @transform_15, window_bounds = array<i64: 1, 128>}, {pipeline_mode = #tpu.pipeline_mode<synchronous>, transform_indices = @transform_16, window_bounds = array<i64: 1, 128>}, {pipeline_mode = #tpu.pipeline_mode<synchronous>, transform_indices = @transform_17, window_bounds = array<i64: 1, 128>}, {pipeline_mode = #tpu.pipeline_mode<synchronous>, transform_indices = @transform_18, window_bounds = array<i64: 1, 128>}, {pipeline_mode = #tpu.pipeline_mode<synchronous>, transform_indices = @transform_19, window_bounds = array<i64: 1, 256>}, {pipeline_mode = #tpu.pipeline_mode<synchronous>, transform_indices = @transform_20, window_bounds = array<i64: 1, 256>}, {pipeline_mode = #tpu.pipeline_mode<synchronous>, transform_indices = @transform_21, window_bounds = array<i64: 1, 256>}, {pipeline_mode = #tpu.pipeline_mode<synchronous>, transform_indices = @transform_22, window_bounds = array<i64: 1, 256>}, {pipeline_mode = #tpu.pipeline_mode<synchronous>, transform_indices = @transform_23, window_bounds = array<i64: 1, 256>}, {pipeline_mode = #tpu.pipeline_mode<synchronous>, transform_indices = @transform_24, window_bounds = array<i64: 1, 256>}, {pipeline_mode = #tpu.pipeline_mode<synchronous>, transform_indices = @transform_25, window_bounds = array<i64: 1, 256>}, {pipeline_mode = #tpu.pipeline_mode<synchronous>, transform_indices = @transform_26, window_bounds = array<i64: 1, 256>}, {pipeline_mode = #tpu.pipeline_mode<synchronous>, transform_indices = @transform_27, window_bounds = array<i64: 256, 8>}, {pipeline_mode = #tpu.pipeline_mode<synchronous>, transform_indices = @transform_28, window_bounds = array<i64: 1, 8>}, {transform_indices = @transform_29, window_bounds = array<i64: 8, 8>}]} {
    %c0 = arith.constant 0 : index
    %c0_0 = arith.constant 0 : index
    %0 = vector.load %arg1[%c0, %c0_0] : memref<128x128xf32, #tpu.memory_space<vmem>>, vector<128x128xf32>
    %c0_1 = arith.constant 0 : index
    %c0_2 = arith.constant 0 : index
    %1 = vector.load %arg3[%c0_1, %c0_2] : memref<128x128xf32, #tpu.memory_space<vmem>>, vector<128x128xf32>
    %cst = arith.constant dense<0.000000e+00> : vector<128x128xf32>
    %2 = tpu.matmul %0, %1, %cst {dimension_numbers = #tpu.dot_dimension_numbers<[1], [0], [0], [1], [0, 0, 1, 1], [], []>} : vector<128x128xf32>, vector<128x128xf32>, vector<128x128xf32> -> vector<128x128xf32>
    %c0_3 = arith.constant 0 : index
    %c0_4 = arith.constant 0 : index
    %3 = vector.load %arg4[%c0_3, %c0_4] : memref<128x128xf32, #tpu.memory_space<vmem>>, vector<128x128xf32>
    %cst_5 = arith.constant dense<0.000000e+00> : vector<128x128xf32>
    %4 = tpu.matmul %2, %3, %cst_5 {dimension_numbers = #tpu.dot_dimension_numbers<[1], [0], [0], [1], [0, 0, 1, 1], [], []>} : vector<128x128xf32>, vector<128x128xf32>, vector<128x128xf32> -> vector<128x128xf32>
    %c0_6 = arith.constant 0 : index
    %c0_7 = arith.constant 0 : index
    %5 = vector.load %arg16[%c0_6, %c0_7] : memref<1x128xf32, #tpu.memory_space<vmem>>, vector<1x128xf32>
    %6 = vector.broadcast %5 : vector<1x128xf32> to vector<128x128xf32>
    %7 = arith.addf %4, %6 : vector<128x128xf32>
    %cst_8 = arith.constant 0.000000e+00 : f32
    %8 = vector.broadcast %cst_8 : f32 to vector<128x128xf32>
    %9 = arith.maximumf %7, %8 : vector<128x128xf32>
    %cst_9 = arith.constant dense<0.000000e+00> : vector<128x128xf32>
    %10 = tpu.matmul %0, %9, %cst_9 {dimension_numbers = #tpu.dot_dimension_numbers<[1], [0], [0], [1], [0, 0, 1, 1], [], []>} : vector<128x128xf32>, vector<128x128xf32>, vector<128x128xf32> -> vector<128x128xf32>
    %c0_10 = arith.constant 0 : index
    %c0_11 = arith.constant 0 : index
    %11 = vector.load %arg5[%c0_10, %c0_11] : memref<128x128xf32, #tpu.memory_space<vmem>>, vector<128x128xf32>
    %cst_12 = arith.constant dense<0.000000e+00> : vector<128x128xf32>
    %12 = tpu.matmul %10, %11, %cst_12 {dimension_numbers = #tpu.dot_dimension_numbers<[1], [0], [0], [1], [0, 0, 1, 1], [], []>} : vector<128x128xf32>, vector<128x128xf32>, vector<128x128xf32> -> vector<128x128xf32>
    %c0_13 = arith.constant 0 : index
    %c0_14 = arith.constant 0 : index
    %13 = vector.load %arg17[%c0_13, %c0_14] : memref<1x128xf32, #tpu.memory_space<vmem>>, vector<1x128xf32>
    %14 = vector.broadcast %13 : vector<1x128xf32> to vector<128x128xf32>
    %15 = arith.addf %12, %14 : vector<128x128xf32>
    %cst_15 = arith.constant 0.000000e+00 : f32
    %16 = vector.broadcast %cst_15 : f32 to vector<128x128xf32>
    %17 = arith.maximumf %15, %16 : vector<128x128xf32>
    %18 = arith.addf %17, %9 : vector<128x128xf32>
    %cst_16 = arith.constant dense<0.000000e+00> : vector<128x128xf32>
    %19 = tpu.matmul %0, %18, %cst_16 {dimension_numbers = #tpu.dot_dimension_numbers<[1], [0], [0], [1], [0, 0, 1, 1], [], []>} : vector<128x128xf32>, vector<128x128xf32>, vector<128x128xf32> -> vector<128x128xf32>
    %c0_17 = arith.constant 0 : index
    %c0_18 = arith.constant 0 : index
    %20 = vector.load %arg6[%c0_17, %c0_18] : memref<128x128xf32, #tpu.memory_space<vmem>>, vector<128x128xf32>
    %cst_19 = arith.constant dense<0.000000e+00> : vector<128x128xf32>
    %21 = tpu.matmul %19, %20, %cst_19 {dimension_numbers = #tpu.dot_dimension_numbers<[1], [0], [0], [1], [0, 0, 1, 1], [], []>} : vector<128x128xf32>, vector<128x128xf32>, vector<128x128xf32> -> vector<128x128xf32>
    %c0_20 = arith.constant 0 : index
    %c0_21 = arith.constant 0 : index
    %22 = vector.load %arg18[%c0_20, %c0_21] : memref<1x128xf32, #tpu.memory_space<vmem>>, vector<1x128xf32>
    %23 = vector.broadcast %22 : vector<1x128xf32> to vector<128x128xf32>
    %24 = arith.addf %21, %23 : vector<128x128xf32>
    %cst_22 = arith.constant 0.000000e+00 : f32
    %25 = vector.broadcast %cst_22 : f32 to vector<128x128xf32>
    %26 = arith.maximumf %24, %25 : vector<128x128xf32>
    %27 = arith.addf %26, %18 : vector<128x128xf32>
    %cst_23 = arith.constant dense<0.000000e+00> : vector<128x128xf32>
    %28 = tpu.matmul %0, %27, %cst_23 {dimension_numbers = #tpu.dot_dimension_numbers<[1], [0], [0], [1], [0, 0, 1, 1], [], []>} : vector<128x128xf32>, vector<128x128xf32>, vector<128x128xf32> -> vector<128x128xf32>
    %c0_24 = arith.constant 0 : index
    %c0_25 = arith.constant 0 : index
    %29 = vector.load %arg7[%c0_24, %c0_25] : memref<128x128xf32, #tpu.memory_space<vmem>>, vector<128x128xf32>
    %cst_26 = arith.constant dense<0.000000e+00> : vector<128x128xf32>
    %30 = tpu.matmul %28, %29, %cst_26 {dimension_numbers = #tpu.dot_dimension_numbers<[1], [0], [0], [1], [0, 0, 1, 1], [], []>} : vector<128x128xf32>, vector<128x128xf32>, vector<128x128xf32> -> vector<128x128xf32>
    %c0_27 = arith.constant 0 : index
    %c0_28 = arith.constant 0 : index
    %31 = vector.load %arg19[%c0_27, %c0_28] : memref<1x128xf32, #tpu.memory_space<vmem>>, vector<1x128xf32>
    %32 = vector.broadcast %31 : vector<1x128xf32> to vector<128x128xf32>
    %33 = arith.addf %30, %32 : vector<128x128xf32>
    %cst_29 = arith.constant 0.000000e+00 : f32
    %34 = vector.broadcast %cst_29 : f32 to vector<128x128xf32>
    %35 = arith.maximumf %33, %34 : vector<128x128xf32>
    %36 = arith.addf %35, %27 : vector<128x128xf32>
    %cst_30 = arith.constant dense<0.000000e+00> : vector<128x128xf32>
    %37 = tpu.matmul %0, %36, %cst_30 {dimension_numbers = #tpu.dot_dimension_numbers<[1], [0], [0], [1], [0, 0, 1, 1], [], []>} : vector<128x128xf32>, vector<128x128xf32>, vector<128x128xf32> -> vector<128x128xf32>
    %c0_31 = arith.constant 0 : index
    %c0_32 = arith.constant 0 : index
    %38 = vector.load %arg8[%c0_31, %c0_32] : memref<128x256xf32, #tpu.memory_space<vmem>>, vector<128x256xf32>
    %cst_33 = arith.constant dense<0.000000e+00> : vector<128x256xf32>
    %39 = tpu.matmul %37, %38, %cst_33 {dimension_numbers = #tpu.dot_dimension_numbers<[1], [0], [0], [1], [0, 0, 1, 1], [], []>} : vector<128x128xf32>, vector<128x256xf32>, vector<128x256xf32> -> vector<128x256xf32>
    %c0_34 = arith.constant 0 : index
    %c0_35 = arith.constant 0 : index
    %40 = vector.load %arg20[%c0_34, %c0_35] : memref<1x256xf32, #tpu.memory_space<vmem>>, vector<1x256xf32>
    %41 = vector.broadcast %40 : vector<1x256xf32> to vector<128x256xf32>
    %42 = arith.addf %39, %41 : vector<128x256xf32>
    %cst_36 = arith.constant 0.000000e+00 : f32
    %43 = vector.broadcast %cst_36 : f32 to vector<128x256xf32>
    %44 = arith.maximumf %42, %43 : vector<128x256xf32>
    %cst_37 = arith.constant dense<0.000000e+00> : vector<128x256xf32>
    %45 = tpu.matmul %0, %44, %cst_37 {dimension_numbers = #tpu.dot_dimension_numbers<[1], [0], [0], [1], [0, 0, 1, 1], [], []>} : vector<128x128xf32>, vector<128x256xf32>, vector<128x256xf32> -> vector<128x256xf32>
    %c0_38 = arith.constant 0 : index
    %c0_39 = arith.constant 0 : index
    %46 = vector.load %arg9[%c0_38, %c0_39] : memref<256x256xf32, #tpu.memory_space<vmem>>, vector<256x256xf32>
    %cst_40 = arith.constant dense<0.000000e+00> : vector<128x256xf32>
    %47 = tpu.matmul %45, %46, %cst_40 {dimension_numbers = #tpu.dot_dimension_numbers<[1], [0], [0], [1], [0, 0, 1, 1], [], []>} : vector<128x256xf32>, vector<256x256xf32>, vector<128x256xf32> -> vector<128x256xf32>
    %c0_41 = arith.constant 0 : index
    %c0_42 = arith.constant 0 : index
    %48 = vector.load %arg21[%c0_41, %c0_42] : memref<1x256xf32, #tpu.memory_space<vmem>>, vector<1x256xf32>
    %49 = vector.broadcast %48 : vector<1x256xf32> to vector<128x256xf32>
    %50 = arith.addf %47, %49 : vector<128x256xf32>
    %cst_43 = arith.constant 0.000000e+00 : f32
    %51 = vector.broadcast %cst_43 : f32 to vector<128x256xf32>
    %52 = arith.maximumf %50, %51 : vector<128x256xf32>
    %53 = arith.addf %52, %44 : vector<128x256xf32>
    %cst_44 = arith.constant dense<0.000000e+00> : vector<128x256xf32>
    %54 = tpu.matmul %0, %53, %cst_44 {dimension_numbers = #tpu.dot_dimension_numbers<[1], [0], [0], [1], [0, 0, 1, 1], [], []>} : vector<128x128xf32>, vector<128x256xf32>, vector<128x256xf32> -> vector<128x256xf32>
    %c0_45 = arith.constant 0 : index
    %c0_46 = arith.constant 0 : index
    %55 = vector.load %arg10[%c0_45, %c0_46] : memref<256x256xf32, #tpu.memory_space<vmem>>, vector<256x256xf32>
    %cst_47 = arith.constant dense<0.000000e+00> : vector<128x256xf32>
    %56 = tpu.matmul %54, %55, %cst_47 {dimension_numbers = #tpu.dot_dimension_numbers<[1], [0], [0], [1], [0, 0, 1, 1], [], []>} : vector<128x256xf32>, vector<256x256xf32>, vector<128x256xf32> -> vector<128x256xf32>
    %c0_48 = arith.constant 0 : index
    %c0_49 = arith.constant 0 : index
    %57 = vector.load %arg22[%c0_48, %c0_49] : memref<1x256xf32, #tpu.memory_space<vmem>>, vector<1x256xf32>
    %58 = vector.broadcast %57 : vector<1x256xf32> to vector<128x256xf32>
    %59 = arith.addf %56, %58 : vector<128x256xf32>
    %cst_50 = arith.constant 0.000000e+00 : f32
    %60 = vector.broadcast %cst_50 : f32 to vector<128x256xf32>
    %61 = arith.maximumf %59, %60 : vector<128x256xf32>
    %62 = arith.addf %61, %53 : vector<128x256xf32>
    %cst_51 = arith.constant dense<0.000000e+00> : vector<128x256xf32>
    %63 = tpu.matmul %0, %62, %cst_51 {dimension_numbers = #tpu.dot_dimension_numbers<[1], [0], [0], [1], [0, 0, 1, 1], [], []>} : vector<128x128xf32>, vector<128x256xf32>, vector<128x256xf32> -> vector<128x256xf32>
    %c0_52 = arith.constant 0 : index
    %c0_53 = arith.constant 0 : index
    %64 = vector.load %arg11[%c0_52, %c0_53] : memref<256x256xf32, #tpu.memory_space<vmem>>, vector<256x256xf32>
    %cst_54 = arith.constant dense<0.000000e+00> : vector<128x256xf32>
    %65 = tpu.matmul %63, %64, %cst_54 {dimension_numbers = #tpu.dot_dimension_numbers<[1], [0], [0], [1], [0, 0, 1, 1], [], []>} : vector<128x256xf32>, vector<256x256xf32>, vector<128x256xf32> -> vector<128x256xf32>
    %c0_55 = arith.constant 0 : index
    %c0_56 = arith.constant 0 : index
    %66 = vector.load %arg23[%c0_55, %c0_56] : memref<1x256xf32, #tpu.memory_space<vmem>>, vector<1x256xf32>
    %67 = vector.broadcast %66 : vector<1x256xf32> to vector<128x256xf32>
    %68 = arith.addf %65, %67 : vector<128x256xf32>
    %cst_57 = arith.constant 0.000000e+00 : f32
    %69 = vector.broadcast %cst_57 : f32 to vector<128x256xf32>
    %70 = arith.maximumf %68, %69 : vector<128x256xf32>
    %71 = arith.addf %70, %62 : vector<128x256xf32>
    %cst_58 = arith.constant dense<0.000000e+00> : vector<128x256xf32>
    %72 = tpu.matmul %0, %71, %cst_58 {dimension_numbers = #tpu.dot_dimension_numbers<[1], [0], [0], [1], [0, 0, 1, 1], [], []>} : vector<128x128xf32>, vector<128x256xf32>, vector<128x256xf32> -> vector<128x256xf32>
    %c0_59 = arith.constant 0 : index
    %c0_60 = arith.constant 0 : index
    %73 = vector.load %arg12[%c0_59, %c0_60] : memref<256x256xf32, #tpu.memory_space<vmem>>, vector<256x256xf32>
    %cst_61 = arith.constant dense<0.000000e+00> : vector<128x256xf32>
    %74 = tpu.matmul %72, %73, %cst_61 {dimension_numbers = #tpu.dot_dimension_numbers<[1], [0], [0], [1], [0, 0, 1, 1], [], []>} : vector<128x256xf32>, vector<256x256xf32>, vector<128x256xf32> -> vector<128x256xf32>
    %c0_62 = arith.constant 0 : index
    %c0_63 = arith.constant 0 : index
    %75 = vector.load %arg24[%c0_62, %c0_63] : memref<1x256xf32, #tpu.memory_space<vmem>>, vector<1x256xf32>
    %76 = vector.broadcast %75 : vector<1x256xf32> to vector<128x256xf32>
    %77 = arith.addf %74, %76 : vector<128x256xf32>
    %cst_64 = arith.constant 0.000000e+00 : f32
    %78 = vector.broadcast %cst_64 : f32 to vector<128x256xf32>
    %79 = arith.maximumf %77, %78 : vector<128x256xf32>
    %cst_65 = arith.constant dense<0.000000e+00> : vector<128x256xf32>
    %80 = tpu.matmul %0, %79, %cst_65 {dimension_numbers = #tpu.dot_dimension_numbers<[1], [0], [0], [1], [0, 0, 1, 1], [], []>} : vector<128x128xf32>, vector<128x256xf32>, vector<128x256xf32> -> vector<128x256xf32>
    %c0_66 = arith.constant 0 : index
    %c0_67 = arith.constant 0 : index
    %81 = vector.load %arg13[%c0_66, %c0_67] : memref<256x256xf32, #tpu.memory_space<vmem>>, vector<256x256xf32>
    %cst_68 = arith.constant dense<0.000000e+00> : vector<128x256xf32>
    %82 = tpu.matmul %80, %81, %cst_68 {dimension_numbers = #tpu.dot_dimension_numbers<[1], [0], [0], [1], [0, 0, 1, 1], [], []>} : vector<128x256xf32>, vector<256x256xf32>, vector<128x256xf32> -> vector<128x256xf32>
    %c0_69 = arith.constant 0 : index
    %c0_70 = arith.constant 0 : index
    %83 = vector.load %arg25[%c0_69, %c0_70] : memref<1x256xf32, #tpu.memory_space<vmem>>, vector<1x256xf32>
    %84 = vector.broadcast %83 : vector<1x256xf32> to vector<128x256xf32>
    %85 = arith.addf %82, %84 : vector<128x256xf32>
    %cst_71 = arith.constant 0.000000e+00 : f32
    %86 = vector.broadcast %cst_71 : f32 to vector<128x256xf32>
    %87 = arith.maximumf %85, %86 : vector<128x256xf32>
    %88 = arith.addf %87, %79 : vector<128x256xf32>
    %cst_72 = arith.constant dense<0.000000e+00> : vector<128x256xf32>
    %89 = tpu.matmul %0, %88, %cst_72 {dimension_numbers = #tpu.dot_dimension_numbers<[1], [0], [0], [1], [0, 0, 1, 1], [], []>} : vector<128x128xf32>, vector<128x256xf32>, vector<128x256xf32> -> vector<128x256xf32>
    %c0_73 = arith.constant 0 : index
    %c0_74 = arith.constant 0 : index
    %90 = vector.load %arg14[%c0_73, %c0_74] : memref<256x256xf32, #tpu.memory_space<vmem>>, vector<256x256xf32>
    %cst_75 = arith.constant dense<0.000000e+00> : vector<128x256xf32>
    %91 = tpu.matmul %89, %90, %cst_75 {dimension_numbers = #tpu.dot_dimension_numbers<[1], [0], [0], [1], [0, 0, 1, 1], [], []>} : vector<128x256xf32>, vector<256x256xf32>, vector<128x256xf32> -> vector<128x256xf32>
    %c0_76 = arith.constant 0 : index
    %c0_77 = arith.constant 0 : index
    %92 = vector.load %arg26[%c0_76, %c0_77] : memref<1x256xf32, #tpu.memory_space<vmem>>, vector<1x256xf32>
    %93 = vector.broadcast %92 : vector<1x256xf32> to vector<128x256xf32>
    %94 = arith.addf %91, %93 : vector<128x256xf32>
    %cst_78 = arith.constant 0.000000e+00 : f32
    %95 = vector.broadcast %cst_78 : f32 to vector<128x256xf32>
    %96 = arith.maximumf %94, %95 : vector<128x256xf32>
    %97 = arith.addf %96, %88 : vector<128x256xf32>
    %cst_79 = arith.constant dense<0.000000e+00> : vector<128x256xf32>
    %98 = tpu.matmul %0, %97, %cst_79 {dimension_numbers = #tpu.dot_dimension_numbers<[1], [0], [0], [1], [0, 0, 1, 1], [], []>} : vector<128x128xf32>, vector<128x256xf32>, vector<128x256xf32> -> vector<128x256xf32>
    %c0_80 = arith.constant 0 : index
    %c0_81 = arith.constant 0 : index
    %99 = vector.load %arg15[%c0_80, %c0_81] : memref<256x256xf32, #tpu.memory_space<vmem>>, vector<256x256xf32>
    %cst_82 = arith.constant dense<0.000000e+00> : vector<128x256xf32>
    %100 = tpu.matmul %98, %99, %cst_82 {dimension_numbers = #tpu.dot_dimension_numbers<[1], [0], [0], [1], [0, 0, 1, 1], [], []>} : vector<128x256xf32>, vector<256x256xf32>, vector<128x256xf32> -> vector<128x256xf32>
    %c0_83 = arith.constant 0 : index
    %c0_84 = arith.constant 0 : index
    %101 = vector.load %arg27[%c0_83, %c0_84] : memref<1x256xf32, #tpu.memory_space<vmem>>, vector<1x256xf32>
    %102 = vector.broadcast %101 : vector<1x256xf32> to vector<128x256xf32>
    %103 = arith.addf %100, %102 : vector<128x256xf32>
    %cst_85 = arith.constant 0.000000e+00 : f32
    %104 = vector.broadcast %cst_85 : f32 to vector<128x256xf32>
    %105 = arith.maximumf %103, %104 : vector<128x256xf32>
    %106 = arith.addf %105, %97 : vector<128x256xf32>
    %c0_86 = arith.constant 0 : index
    %c0_87 = arith.constant 0 : index
    %107 = vector.load %arg2[%c0_86, %c0_87] : memref<8x128xf32, #tpu.memory_space<vmem>>, vector<8x128xf32>
    %cst_88 = arith.constant dense<0.000000e+00> : vector<8x256xf32>
    %108 = tpu.matmul %107, %106, %cst_88 {dimension_numbers = #tpu.dot_dimension_numbers<[1], [0], [0], [1], [0, 0, 1, 1], [], []>} : vector<8x128xf32>, vector<128x256xf32>, vector<8x256xf32> -> vector<8x256xf32>
    %c0_89 = arith.constant 0 : index
    %c0_90 = arith.constant 0 : index
    %109 = vector.load %arg28[%c0_89, %c0_90] : memref<256x8xf32, #tpu.memory_space<vmem>>, vector<256x8xf32>
    %cst_91 = arith.constant dense<0.000000e+00> : vector<8x8xf32>
    %110 = tpu.matmul %108, %109, %cst_91 {dimension_numbers = #tpu.dot_dimension_numbers<[1], [0], [0], [1], [0, 0, 1, 1], [], []>} : vector<8x256xf32>, vector<256x8xf32>, vector<8x8xf32> -> vector<8x8xf32>
    %c0_92 = arith.constant 0 : index
    %c0_93 = arith.constant 0 : index
    %111 = vector.load %arg29[%c0_92, %c0_93] : memref<1x8xf32, #tpu.memory_space<vmem>>, vector<1x8xf32>
    %112 = vector.broadcast %111 : vector<1x8xf32> to vector<8x8xf32>
    %113 = arith.addf %110, %112 : vector<8x8xf32>
    %cst_94 = arith.constant dense<0xFF800000> : vector<8xf32>
    %114 = vector.multi_reduction <maximumf>, %113, %cst_94 [1] : vector<8x8xf32> to vector<8xf32>
    %115 = vector.shape_cast %114 : vector<8xf32> to vector<8x1xf32>
    %116 = vector.broadcast %115 : vector<8x1xf32> to vector<8x8xf32>
    %117 = arith.subf %113, %116 : vector<8x8xf32>
    %118 = math.exp %117 : vector<8x8xf32>
    %cst_95 = arith.constant dense<0.000000e+00> : vector<8xf32>
    %119 = vector.multi_reduction <add>, %118, %cst_95 [1] : vector<8x8xf32> to vector<8xf32>
    %120 = vector.shape_cast %119 : vector<8xf32> to vector<8x1xf32>
    %121 = math.log %120 : vector<8x1xf32>
    %122 = arith.addf %121, %115 : vector<8x1xf32>
    %123 = vector.broadcast %122 : vector<8x1xf32> to vector<8x8xf32>
    %124 = arith.subf %113, %123 : vector<8x8xf32>
    %c0_96 = arith.constant 0 : index
    %c0_97 = arith.constant 0 : index
    %125 = vector.load %arg30[%c0_96, %c0_97] : memref<8x8xf32, #tpu.memory_space<vmem>>, vector<8x8xf32>
    tpu.vector_store %arg30[%c0_96, %c0_97], %124 {strides = array<i32>} : memref<8x8xf32, #tpu.memory_space<vmem>>, vector<8x8xf32>,
    return
  }
  func.func @transform_0(%arg0: i32) -> (i32, i32) {
    %c0_i32 = arith.constant 0 : i32
    %c0_i32_0 = arith.constant 0 : i32
    %c0_i32_1 = arith.constant 0 : i32
    return %c0_i32, %c0_i32_0 : i32, i32
  }
  func.func @transform_1(%arg0: i32) -> (i32, i32) {
    %c0_i32 = arith.constant 0 : i32
    %c0_i32_0 = arith.constant 0 : i32
    %c0_i32_1 = arith.constant 0 : i32
    return %c0_i32, %c0_i32_0 : i32, i32
  }
  func.func @transform_2(%arg0: i32) -> (i32, i32) {
    %c0_i32 = arith.constant 0 : i32
    %c0_i32_0 = arith.constant 0 : i32
    return %arg0, %c0_i32 : i32, i32
  }
  func.func @transform_3(%arg0: i32) -> (i32, i32) {
    %c0_i32 = arith.constant 0 : i32
    %c0_i32_0 = arith.constant 0 : i32
    %c0_i32_1 = arith.constant 0 : i32
    return %c0_i32, %c0_i32_0 : i32, i32
  }
  func.func @transform_4(%arg0: i32) -> (i32, i32) {
    %c0_i32 = arith.constant 0 : i32
    %c0_i32_0 = arith.constant 0 : i32
    %c0_i32_1 = arith.constant 0 : i32
    return %c0_i32, %c0_i32_0 : i32, i32
  }
  func.func @transform_5(%arg0: i32) -> (i32, i32) {
    %c0_i32 = arith.constant 0 : i32
    %c0_i32_0 = arith.constant 0 : i32
    %c0_i32_1 = arith.constant 0 : i32
    return %c0_i32, %c0_i32_0 : i32, i32
  }
  func.func @transform_6(%arg0: i32) -> (i32, i32) {
    %c0_i32 = arith.constant 0 : i32
    %c0_i32_0 = arith.constant 0 : i32
    %c0_i32_1 = arith.constant 0 : i32
    return %c0_i32, %c0_i32_0 : i32, i32
  }
  func.func @transform_7(%arg0: i32) -> (i32, i32) {
    %c0_i32 = arith.constant 0 : i32
    %c0_i32_0 = arith.constant 0 : i32
    %c0_i32_1 = arith.constant 0 : i32
    return %c0_i32, %c0_i32_0 : i32, i32
  }
  func.func @transform_8(%arg0: i32) -> (i32, i32) {
    %c0_i32 = arith.constant 0 : i32
    %c0_i32_0 = arith.constant 0 : i32
    %c0_i32_1 = arith.constant 0 : i32
    return %c0_i32, %c0_i32_0 : i32, i32
  }
  func.func @transform_9(%arg0: i32) -> (i32, i32) {
    %c0_i32 = arith.constant 0 : i32
    %c0_i32_0 = arith.constant 0 : i32
    %c0_i32_1 = arith.constant 0 : i32
    return %c0_i32, %c0_i32_0 : i32, i32
  }
  func.func @transform_10(%arg0: i32) -> (i32, i32) {
    %c0_i32 = arith.constant 0 : i32
    %c0_i32_0 = arith.constant 0 : i32
    %c0_i32_1 = arith.constant 0 : i32
    return %c0_i32, %c0_i32_0 : i32, i32
  }
  func.func @transform_11(%arg0: i32) -> (i32, i32) {
    %c0_i32 = arith.constant 0 : i32
    %c0_i32_0 = arith.constant 0 : i32
    %c0_i32_1 = arith.constant 0 : i32
    return %c0_i32, %c0_i32_0 : i32, i32
  }
  func.func @transform_12(%arg0: i32) -> (i32, i32) {
    %c0_i32 = arith.constant 0 : i32
    %c0_i32_0 = arith.constant 0 : i32
    %c0_i32_1 = arith.constant 0 : i32
    return %c0_i32, %c0_i32_0 : i32, i32
  }
  func.func @transform_13(%arg0: i32) -> (i32, i32) {
    %c0_i32 = arith.constant 0 : i32
    %c0_i32_0 = arith.constant 0 : i32
    %c0_i32_1 = arith.constant 0 : i32
    return %c0_i32, %c0_i32_0 : i32, i32
  }
  func.func @transform_14(%arg0: i32) -> (i32, i32) {
    %c0_i32 = arith.constant 0 : i32
    %c0_i32_0 = arith.constant 0 : i32
    %c0_i32_1 = arith.constant 0 : i32
    return %c0_i32, %c0_i32_0 : i32, i32
  }
  func.func @transform_15(%arg0: i32) -> (i32, i32) {
    %c0_i32 = arith.constant 0 : i32
    %c0_i32_0 = arith.constant 0 : i32
    %c0_i32_1 = arith.constant 0 : i32
    return %c0_i32, %c0_i32_0 : i32, i32
  }
  func.func @transform_16(%arg0: i32) -> (i32, i32) {
    %c0_i32 = arith.constant 0 : i32
    %c0_i32_0 = arith.constant 0 : i32
    %c0_i32_1 = arith.constant 0 : i32
    return %c0_i32, %c0_i32_0 : i32, i32
  }
  func.func @transform_17(%arg0: i32) -> (i32, i32) {
    %c0_i32 = arith.constant 0 : i32
    %c0_i32_0 = arith.constant 0 : i32
    %c0_i32_1 = arith.constant 0 : i32
    return %c0_i32, %c0_i32_0 : i32, i32
  }
  func.func @transform_18(%arg0: i32) -> (i32, i32) {
    %c0_i32 = arith.constant 0 : i32
    %c0_i32_0 = arith.constant 0 : i32
    %c0_i32_1 = arith.constant 0 : i32
    return %c0_i32, %c0_i32_0 : i32, i32
  }
  func.func @transform_19(%arg0: i32) -> (i32, i32) {
    %c0_i32 = arith.constant 0 : i32
    %c0_i32_0 = arith.constant 0 : i32
    %c0_i32_1 = arith.constant 0 : i32
    return %c0_i32, %c0_i32_0 : i32, i32
  }
  func.func @transform_20(%arg0: i32) -> (i32, i32) {
    %c0_i32 = arith.constant 0 : i32
    %c0_i32_0 = arith.constant 0 : i32
    %c0_i32_1 = arith.constant 0 : i32
    return %c0_i32, %c0_i32_0 : i32, i32
  }
  func.func @transform_21(%arg0: i32) -> (i32, i32) {
    %c0_i32 = arith.constant 0 : i32
    %c0_i32_0 = arith.constant 0 : i32
    %c0_i32_1 = arith.constant 0 : i32
    return %c0_i32, %c0_i32_0 : i32, i32
  }
  func.func @transform_22(%arg0: i32) -> (i32, i32) {
    %c0_i32 = arith.constant 0 : i32
    %c0_i32_0 = arith.constant 0 : i32
    %c0_i32_1 = arith.constant 0 : i32
    return %c0_i32, %c0_i32_0 : i32, i32
  }
  func.func @transform_23(%arg0: i32) -> (i32, i32) {
    %c0_i32 = arith.constant 0 : i32
    %c0_i32_0 = arith.constant 0 : i32
    %c0_i32_1 = arith.constant 0 : i32
    return %c0_i32, %c0_i32_0 : i32, i32
  }
  func.func @transform_24(%arg0: i32) -> (i32, i32) {
    %c0_i32 = arith.constant 0 : i32
    %c0_i32_0 = arith.constant 0 : i32
    %c0_i32_1 = arith.constant 0 : i32
    return %c0_i32, %c0_i32_0 : i32, i32
  }
  func.func @transform_25(%arg0: i32) -> (i32, i32) {
    %c0_i32 = arith.constant 0 : i32
    %c0_i32_0 = arith.constant 0 : i32
    %c0_i32_1 = arith.constant 0 : i32
    return %c0_i32, %c0_i32_0 : i32, i32
  }
  func.func @transform_26(%arg0: i32) -> (i32, i32) {
    %c0_i32 = arith.constant 0 : i32
    %c0_i32_0 = arith.constant 0 : i32
    %c0_i32_1 = arith.constant 0 : i32
    return %c0_i32, %c0_i32_0 : i32, i32
  }
  func.func @transform_27(%arg0: i32) -> (i32, i32) {
    %c0_i32 = arith.constant 0 : i32
    %c0_i32_0 = arith.constant 0 : i32
    %c0_i32_1 = arith.constant 0 : i32
    return %c0_i32, %c0_i32_0 : i32, i32
  }
  func.func @transform_28(%arg0: i32) -> (i32, i32) {
    %c0_i32 = arith.constant 0 : i32
    %c0_i32_0 = arith.constant 0 : i32
    %c0_i32_1 = arith.constant 0 : i32
    return %c0_i32, %c0_i32_0 : i32, i32
  }
  func.func @transform_29(%arg0: i32) -> (i32, i32) {
    %c0_i32 = arith.constant 0 : i32
    %c0_i32_0 = arith.constant 0 : i32
    return %arg0, %c0_i32 : i32, i32
  }
}

</mosaic_0001>

<llo_original>
// kernel: st_gcn_forward.1
$region0: #{st_gcn_forward.1}
  #allocation0 [shape = 'u32[]', space=smem, size = 0x4, offset = 0x4, fixed_abs, tag = 'smem constant byte address 0x4 - core index']
  #allocation1 [shape = 'u32[72,128]{1,0:T(1,128)}', space=vmem, size = 0x9000, scoped, tag = 'internal scratch']
  %s0 = inlined_call_operand.smem [shape: u32[30], index: -1, kind: input, shape index: {}]
  %s1 = sld [smem:[%s0]]
  %s2 = scalar_lea.smem %s0, 1
  %s3 = sld [smem:[%s2]]
  %s4 = scalar_lea.smem %s0, 2
  %s5 = sld [smem:[%s4]]
  %s6 = scalar_lea.smem %s0, 3
  %s7 = sld [smem:[%s6]]
  %s8 = scalar_lea.smem %s0, 4
  %s9 = sld [smem:[%s8]]
  %s10 = scalar_lea.smem %s0, 5
  %s11 = sld [smem:[%s10]]
  %s12 = scalar_lea.smem %s0, 6
  %s13 = sld [smem:[%s12]]
  %s14 = scalar_lea.smem %s0, 7
  %s15 = sld [smem:[%s14]]
  %s16 = scalar_lea.smem %s0, 8
  %s17 = sld [smem:[%s16]]
  %s18 = scalar_lea.smem %s0, 9
  %s19 = sld [smem:[%s18]]
  %s20 = scalar_lea.smem %s0, 10
  %s21 = sld [smem:[%s20]]
  %s22 = scalar_lea.smem %s0, 11
  %s23 = sld [smem:[%s22]]
  %s24 = scalar_lea.smem %s0, 12
  %s25 = sld [smem:[%s24]]
  %s26 = scalar_lea.smem %s0, 13
  %s27 = sld [smem:[%s26]]
  %s28 = scalar_lea.smem %s0, 14
  %s29 = sld [smem:[%s28]]
  %s30 = scalar_lea.smem %s0, 15
  %s31 = sld [smem:[%s30]]
  %s32 = scalar_lea.smem %s0, 16
  %s33 = sld [smem:[%s32]]
  %s34 = scalar_lea.smem %s0, 17
  %s35 = sld [smem:[%s34]]
  %s36 = scalar_lea.smem %s0, 18
  %s37 = sld [smem:[%s36]]
  %s38 = scalar_lea.smem %s0, 19
  %s39 = sld [smem:[%s38]]
  %s40 = scalar_lea.smem %s0, 20
  %s41 = sld [smem:[%s40]]
  %s42 = scalar_lea.smem %s0, 21
  %s43 = sld [smem:[%s42]]
  %s44 = scalar_lea.smem %s0, 22
  %s45 = sld [smem:[%s44]]
  %s46 = scalar_lea.smem %s0, 23
  %s47 = sld [smem:[%s46]]
  %s48 = scalar_lea.smem %s0, 24
  %s49 = sld [smem:[%s48]]
  %s50 = scalar_lea.smem %s0, 25
  %s51 = sld [smem:[%s50]]
  %s52 = scalar_lea.smem %s0, 26
  %s53 = sld [smem:[%s52]]
  %s54 = scalar_lea.smem %s0, 27
  %s55 = sld [smem:[%s54]]
  %s56 = scalar_lea.smem %s0, 28
  %s57 = sld [smem:[%s56]]
  %s58 = scalar_lea.smem %s0, 29
  %s59 = sld [smem:[%s58]]
  %s60 = sld [smem:[#allocation0]]
  $region149: #{st_gcn_forward.1} parent=0
    _
  %s62 = ssub.s32 1, %s60
  %s63 = scalar_select 0, %s62, %s60
  loop: start=0, step=1, limit=4
  $region2: #{st_gcn_forward.1} parent=0 // loop_pre_header
    _
  $region3: #{st_gcn_forward.1} parent=0 // loop_header
    %s65 = sphi 0, %s69
    %p66 = scmp.ge.s32.totalorder %s65, 4
    %s73 = sphi 0, %s73
    %s75 = sphi 0, %s73
    %s76 = sphi 0, %s75
    %s90 = sphi 0, %s76
    %s94 = sphi 0, %s94
    %s96 = sphi 0, %s94
    %s97 = sphi 0, %s96
    %s111 = sphi 0, %s97
    %s117 = sphi 0, %s119
    %s120 = sphi 0, %s117
    %s121 = sphi 0, %s120
    %s137 = sphi 0, %s121
    %s141 = sphi 0, %s141
    %s143 = sphi 0, %s141
    %s144 = sphi 0, %s143
    %s158 = sphi 0, %s144
    %s162 = sphi 0, %s162
    %s164 = sphi 0, %s162
    %s165 = sphi 0, %s164
    %s179 = sphi 0, %s165
    %s183 = sphi 0, %s183
    %s185 = sphi 0, %s183
    %s186 = sphi 0, %s185
    %s200 = sphi 0, %s186
    %s204 = sphi 0, %s204
    %s206 = sphi 0, %s204
    %s207 = sphi 0, %s206
    %s221 = sphi 0, %s207
    %s225 = sphi 0, %s225
    %s227 = sphi 0, %s225
    %s228 = sphi 0, %s227
    %s242 = sphi 0, %s228
    %s246 = sphi 0, %s246
    %s248 = sphi 0, %s246
    %s249 = sphi 0, %s248
    %s263 = sphi 0, %s249
    %s267 = sphi 0, %s267
    %s269 = sphi 0, %s267
    %s270 = sphi 0, %s269
    %s284 = sphi 0, %s270
    %s288 = sphi 0, %s288
    %s290 = sphi 0, %s288
    %s291 = sphi 0, %s290
    %s305 = sphi 0, %s291
    %s309 = sphi 0, %s309
    %s311 = sphi 0, %s309
    %s312 = sphi 0, %s311
    %s326 = sphi 0, %s312
    %s330 = sphi 0, %s330
    %s332 = sphi 0, %s330
    %s333 = sphi 0, %s332
    %s347 = sphi 0, %s333
    %s351 = sphi 0, %s351
    %s353 = sphi 0, %s351
    %s354 = sphi 0, %s353
    %s368 = sphi 0, %s354
    %s372 = sphi 0, %s372
    %s374 = sphi 0, %s372
    %s375 = sphi 0, %s374
    %s389 = sphi 0, %s375
    %s393 = sphi 0, %s393
    %s395 = sphi 0, %s393
    %s396 = sphi 0, %s395
    %s410 = sphi 0, %s396
    %s414 = sphi 0, %s414
    %s416 = sphi 0, %s414
    %s417 = sphi 0, %s416
    %s431 = sphi 0, %s417
    %s435 = sphi 0, %s435
    %s437 = sphi 0, %s435
    %s438 = sphi 0, %s437
    %s452 = sphi 0, %s438
    %s456 = sphi 0, %s456
    %s458 = sphi 0, %s456
    %s459 = sphi 0, %s458
    %s473 = sphi 0, %s459
    %s477 = sphi 0, %s477
    %s479 = sphi 0, %s477
    %s480 = sphi 0, %s479
    %s494 = sphi 0, %s480
    %s498 = sphi 0, %s498
    %s500 = sphi 0, %s498
    %s501 = sphi 0, %s500
    %s515 = sphi 0, %s501
    %s519 = sphi 0, %s519
    %s521 = sphi 0, %s519
    %s522 = sphi 0, %s521
    %s536 = sphi 0, %s522
    %s540 = sphi 0, %s540
    %s542 = sphi 0, %s540
    %s543 = sphi 0, %s542
    %s557 = sphi 0, %s543
    %s561 = sphi 0, %s561
    %s563 = sphi 0, %s561
    %s564 = sphi 0, %s563
    %s578 = sphi 0, %s564
    %s582 = sphi 0, %s582
    %s584 = sphi 0, %s582
    %s585 = sphi 0, %s584
    %s599 = sphi 0, %s585
    %s603 = sphi 0, %s603
    %s605 = sphi 0, %s603
    %s606 = sphi 0, %s605
    %s620 = sphi 0, %s606
    %s624 = sphi 0, %s624
    %s626 = sphi 0, %s624
    %s627 = sphi 0, %s626
    %s641 = sphi 0, %s627
    %s645 = sphi 0, %s645
    %s647 = sphi 0, %s645
    %s648 = sphi 0, %s647
    %s662 = sphi 0, %s648
    %s666 = sphi 0, %s666
    %s668 = sphi 0, %s666
    %s669 = sphi 0, %s668
    %s683 = sphi 0, %s669
    %s689 = sphi 0, %s691
    %s692 = sphi 0, %s689
    %s693 = sphi 0, %s692
    %s709 = sphi 0, %s693
  $region4: #{st_gcn_forward.1} parent=0 // loop_header_branch
    %68 = sbr.rel (%p66) target = $region8
  $region5: #{st_gcn_forward.1} parent=0 // loop_body
    %s70 = ssub.s32 %s65, 1
    %s71 = ssub.s32 %s65, 2
    %s72 = sadd.s32 %s65, 1
    %s74 = sadd.s32 %s73, 1
    %p77 = scmp.eq.s32.totalorder %s65, 1
    %p78 = scmp.ne.s32.totalorder %s73, %s75
    %p79 = scmp.eq.s32.totalorder %s65, 0
    %p80 = por %p78, %p79
    %p81 = scmp.ne.s32.totalorder %s73, %s75
    %p82 = scmp.eq.s32.totalorder %s70, 1
    %p83 = por %p81, %p82
    %p84 = scmp.ne.s32.totalorder %s75, %s76
    %p85 = scmp.eq.s32.totalorder %s70, 0
    %p86 = por %p84, %p85
    %p87 = scmp.ne.s32.totalorder %s75, %s76
    %p88 = scmp.eq.s32.totalorder %s71, 1
    %p89 = por %p87, %p88
    %p91 = scmp.ne.s32.totalorder %s76, %s90
    %p92 = scmp.eq.s32.totalorder %s71, 0
    %p93 = por %p91, %p92
    %s95 = sadd.s32 %s94, 1
    %p98 = scmp.eq.s32.totalorder %s65, 1
    %p99 = scmp.ne.s32.totalorder %s94, %s96
    %p100 = scmp.eq.s32.totalorder %s65, 0
    %p101 = por %p99, %p100
    %p102 = scmp.ne.s32.totalorder %s94, %s96
    %p103 = scmp.eq.s32.totalorder %s70, 1
    %p104 = por %p102, %p103
    %p105 = scmp.ne.s32.totalorder %s96, %s97
    %p106 = scmp.eq.s32.totalorder %s70, 0
    %p107 = por %p105, %p106
    %p108 = scmp.ne.s32.totalorder %s96, %s97
    %p109 = scmp.eq.s32.totalorder %s71, 1
    %p110 = por %p108, %p109
    %p112 = scmp.ne.s32.totalorder %s97, %s111
    %p113 = scmp.eq.s32.totalorder %s71, 0
    %p114 = por %p112, %p113
    %s115 = ssub.s32 %s65, %s72
    %p116 = scmp.eq.s32.totalorder %s115, 0
    %s118 = sadd.s32 %s117, 1
    %s119 = scalar_select %p116, %s117, %s118
    %p122 = pneg %p116
    %p123 = scmp.eq.s32.totalorder %s65, 1
    %p124 = por %p122, %p123
    %p125 = scmp.ne.s32.totalorder %s117, %s120
    %p126 = scmp.eq.s32.totalorder %s65, 0
    %p127 = por %p125, %p126
    %p128 = scmp.ne.s32.totalorder %s117, %s120
    %p129 = scmp.eq.s32.totalorder %s70, 1
    %p130 = por %p128, %p129
    %p131 = scmp.ne.s32.totalorder %s120, %s121
    %p132 = scmp.eq.s32.totalorder %s70, 0
    %p133 = por %p131, %p132
    %p134 = scmp.ne.s32.totalorder %s120, %s121
    %p135 = scmp.eq.s32.totalorder %s71, 1
    %p136 = por %p134, %p135
    %p138 = scmp.ne.s32.totalorder %s121, %s137
    %p139 = scmp.eq.s32.totalorder %s71, 0
    %p140 = por %p138, %p139
    %s142 = sadd.s32 %s141, 1
    %p145 = scmp.eq.s32.totalorder %s65, 1
    %p146 = scmp.ne.s32.totalorder %s141, %s143
    %p147 = scmp.eq.s32.totalorder %s65, 0
    %p148 = por %p146, %p147
    %p149 = scmp.ne.s32.totalorder %s141, %s143
    %p150 = scmp.eq.s32.totalorder %s70, 1
    %p151 = por %p149, %p150
    %p152 = scmp.ne.s32.totalorder %s143, %s144
    %p153 = scmp.eq.s32.totalorder %s70, 0
    %p154 = por %p152, %p153
    %p155 = scmp.ne.s32.totalorder %s143, %s144
    %p156 = scmp.eq.s32.totalorder %s71, 1
    %p157 = por %p155, %p156
    %p159 = scmp.ne.s32.totalorder %s144, %s158
    %p160 = scmp.eq.s32.totalorder %s71, 0
    %p161 = por %p159, %p160
    %s163 = sadd.s32 %s162, 1
    %p166 = scmp.eq.s32.totalorder %s65, 1
    %p167 = scmp.ne.s32.totalorder %s162, %s164
    %p168 = scmp.eq.s32.totalorder %s65, 0
    %p169 = por %p167, %p168
    %p170 = scmp.ne.s32.totalorder %s162, %s164
    %p171 = scmp.eq.s32.totalorder %s70, 1
    %p172 = por %p170, %p171
    %p173 = scmp.ne.s32.totalorder %s164, %s165
    %p174 = scmp.eq.s32.totalorder %s70, 0
    %p175 = por %p173, %p174
    %p176 = scmp.ne.s32.totalorder %s164, %s165
    %p177 = scmp.eq.s32.totalorder %s71, 1
    %p178 = por %p176, %p177
    %p180 = scmp.ne.s32.totalorder %s165, %s179
    %p181 = scmp.eq.s32.totalorder %s71, 0
    %p182 = por %p180, %p181
    %s184 = sadd.s32 %s183, 1
    %p187 = scmp.eq.s32.totalorder %s65, 1
    %p188 = scmp.ne.s32.totalorder %s183, %s185
    %p189 = scmp.eq.s32.totalorder %s65, 0
    %p190 = por %p188, %p189
    %p191 = scmp.ne.s32.totalorder %s183, %s185
    %p192 = scmp.eq.s32.totalorder %s70, 1
    %p193 = por %p191, %p192
    %p194 = scmp.ne.s32.totalorder %s185, %s186
    %p195 = scmp.eq.s32.totalorder %s70, 0
    %p196 = por %p194, %p195
    %p197 = scmp.ne.s32.totalorder %s185, %s186
    %p198 = scmp.eq.s32.totalorder %s71, 1
    %p199 = por %p197, %p198
    %p201 = scmp.ne.s32.totalorder %s186, %s200
    %p202 = scmp.eq.s32.totalorder %s71, 0
    %p203 = por %p201, %p202
    %s205 = sadd.s32 %s204, 1
    %p208 = scmp.eq.s32.totalorder %s65, 1
    %p209 = scmp.ne.s32.totalorder %s204, %s206
    %p210 = scmp.eq.s32.totalorder %s65, 0
    %p211 = por %p209, %p210
    %p212 = scmp.ne.s32.totalorder %s204, %s206
    %p213 = scmp.eq.s32.totalorder %s70, 1
    %p214 = por %p212, %p213
    %p215 = scmp.ne.s32.totalorder %s206, %s207
    %p216 = scmp.eq.s32.totalorder %s70, 0
    %p217 = por %p215, %p216
    %p218 = scmp.ne.s32.totalorder %s206, %s207
    %p219 = scmp.eq.s32.totalorder %s71, 1
    %p220 = por %p218, %p219
    %p222 = scmp.ne.s32.totalorder %s207, %s221
    %p223 = scmp.eq.s32.totalorder %s71, 0
    %p224 = por %p222, %p223
    %s226 = sadd.s32 %s225, 1
    %p229 = scmp.eq.s32.totalorder %s65, 1
    %p230 = scmp.ne.s32.totalorder %s225, %s227
    %p231 = scmp.eq.s32.totalorder %s65, 0
    %p232 = por %p230, %p231
    %p233 = scmp.ne.s32.totalorder %s225, %s227
    %p234 = scmp.eq.s32.totalorder %s70, 1
    %p235 = por %p233, %p234
    %p236 = scmp.ne.s32.totalorder %s227, %s228
    %p237 = scmp.eq.s32.totalorder %s70, 0
    %p238 = por %p236, %p237
    %p239 = scmp.ne.s32.totalorder %s227, %s228
    %p240 = scmp.eq.s32.totalorder %s71, 1
    %p241 = por %p239, %p240
    %p243 = scmp.ne.s32.totalorder %s228, %s242
    %p244 = scmp.eq.s32.totalorder %s71, 0
    %p245 = por %p243, %p244
    %s247 = sadd.s32 %s246, 1
    %p250 = scmp.eq.s32.totalorder %s65, 1
    %p251 = scmp.ne.s32.totalorder %s246, %s248
    %p252 = scmp.eq.s32.totalorder %s65, 0
    %p253 = por %p251, %p252
    %p254 = scmp.ne.s32.totalorder %s246, %s248
    %p255 = scmp.eq.s32.totalorder %s70, 1
    %p256 = por %p254, %p255
    %p257 = scmp.ne.s32.totalorder %s248, %s249
    %p258 = scmp.eq.s32.totalorder %s70, 0
    %p259 = por %p257, %p258
    %p260 = scmp.ne.s32.totalorder %s248, %s249
    %p261 = scmp.eq.s32.totalorder %s71, 1
    %p262 = por %p260, %p261
    %p264 = scmp.ne.s32.totalorder %s249, %s263
    %p265 = scmp.eq.s32.totalorder %s71, 0
    %p266 = por %p264, %p265
    %s268 = sadd.s32 %s267, 1
    %p271 = scmp.eq.s32.totalorder %s65, 1
    %p272 = scmp.ne.s32.totalorder %s267, %s269
    %p273 = scmp.eq.s32.totalorder %s65, 0
    %p274 = por %p272, %p273
    %p275 = scmp.ne.s32.totalorder %s267, %s269
    %p276 = scmp.eq.s32.totalorder %s70, 1
    %p277 = por %p275, %p276
    %p278 = scmp.ne.s32.totalorder %s269, %s270
    %p279 = scmp.eq.s32.totalorder %s70, 0
    %p280 = por %p278, %p279
    %p281 = scmp.ne.s32.totalorder %s269, %s270
    %p282 = scmp.eq.s32.totalorder %s71, 1
    %p283 = por %p281, %p282
    %p285 = scmp.ne.s32.totalorder %s270, %s284
    %p286 = scmp.eq.s32.totalorder %s71, 0
    %p287 = por %p285, %p286
    %s289 = sadd.s32 %s288, 1
    %p292 = scmp.eq.s32.totalorder %s65, 1
    %p293 = scmp.ne.s32.totalorder %s288, %s290
    %p294 = scmp.eq.s32.totalorder %s65, 0
    %p295 = por %p293, %p294
    %p296 = scmp.ne.s32.totalorder %s288, %s290
    %p297 = scmp.eq.s32.totalorder %s70, 1
    %p298 = por %p296, %p297
    %p299 = scmp.ne.s32.totalorder %s290, %s291
    %p300 = scmp.eq.s32.totalorder %s70, 0
    %p301 = por %p299, %p300
    %p302 = scmp.ne.s32.totalorder %s290, %s291
    %p303 = scmp.eq.s32.totalorder %s71, 1
    %p304 = por %p302, %p303
    %p306 = scmp.ne.s32.totalorder %s291, %s305
    %p307 = scmp.eq.s32.totalorder %s71, 0
    %p308 = por %p306, %p307
    %s310 = sadd.s32 %s309, 1
    %p313 = scmp.eq.s32.totalorder %s65, 1
    %p314 = scmp.ne.s32.totalorder %s309, %s311
    %p315 = scmp.eq.s32.totalorder %s65, 0
    %p316 = por %p314, %p315
    %p317 = scmp.ne.s32.totalorder %s309, %s311
    %p318 = scmp.eq.s32.totalorder %s70, 1
    %p319 = por %p317, %p318
    %p320 = scmp.ne.s32.totalorder %s311, %s312
    %p321 = scmp.eq.s32.totalorder %s70, 0
    %p322 = por %p320, %p321
    %p323 = scmp.ne.s32.totalorder %s311, %s312
    %p324 = scmp.eq.s32.totalorder %s71, 1
    %p325 = por %p323, %p324
    %p327 = scmp.ne.s32.totalorder %s312, %s326
    %p328 = scmp.eq.s32.totalorder %s71, 0
    %p329 = por %p327, %p328
    %s331 = sadd.s32 %s330, 1
    %p334 = scmp.eq.s32.totalorder %s65, 1
    %p335 = scmp.ne.s32.totalorder %s330, %s332
    %p336 = scmp.eq.s32.totalorder %s65, 0
    %p337 = por %p335, %p336
    %p338 = scmp.ne.s32.totalorder %s330, %s332
    %p339 = scmp.eq.s32.totalorder %s70, 1
    %p340 = por %p338, %p339
    %p341 = scmp.ne.s32.totalorder %s332, %s333
    %p342 = scmp.eq.s32.totalorder %s70, 0
    %p343 = por %p341, %p342
    %p344 = scmp.ne.s32.totalorder %s332, %s333
    %p345 = scmp.eq.s32.totalorder %s71, 1
    %p346 = por %p344, %p345
    %p348 = scmp.ne.s32.totalorder %s333, %s347
    %p349 = scmp.eq.s32.totalorder %s71, 0
    %p350 = por %p348, %p349
    %s352 = sadd.s32 %s351, 1
    %p355 = scmp.eq.s32.totalorder %s65, 1
    %p356 = scmp.ne.s32.totalorder %s351, %s353
    %p357 = scmp.eq.s32.totalorder %s65, 0
    %p358 = por %p356, %p357
    %p359 = scmp.ne.s32.totalorder %s351, %s353
    %p360 = scmp.eq.s32.totalorder %s70, 1
    %p361 = por %p359, %p360
    %p362 = scmp.ne.s32.totalorder %s353, %s354
    %p363 = scmp.eq.s32.totalorder %s70, 0
    %p364 = por %p362, %p363
    %p365 = scmp.ne.s32.totalorder %s353, %s354
    %p366 = scmp.eq.s32.totalorder %s71, 1
    %p367 = por %p365, %p366
    %p369 = scmp.ne.s32.totalorder %s354, %s368
    %p370 = scmp.eq.s32.totalorder %s71, 0
    %p371 = por %p369, %p370
    %s373 = sadd.s32 %s372, 1
    %p376 = scmp.eq.s32.totalorder %s65, 1
    %p377 = scmp.ne.s32.totalorder %s372, %s374
    %p378 = scmp.eq.s32.totalorder %s65, 0
    %p379 = por %p377, %p378
    %p380 = scmp.ne.s32.totalorder %s372, %s374
    %p381 = scmp.eq.s32.totalorder %s70, 1
    %p382 = por %p380, %p381
    %p383 = scmp.ne.s32.totalorder %s374, %s375
    %p384 = scmp.eq.s32.totalorder %s70, 0
    %p385 = por %p383, %p384
    %p386 = scmp.ne.s32.totalorder %s374, %s375
    %p387 = scmp.eq.s32.totalorder %s71, 1
    %p388 = por %p386, %p387
    %p390 = scmp.ne.s32.totalorder %s375, %s389
    %p391 = scmp.eq.s32.totalorder %s71, 0
    %p392 = por %p390, %p391
    %s394 = sadd.s32 %s393, 1
    %p397 = scmp.eq.s32.totalorder %s65, 1
    %p398 = scmp.ne.s32.totalorder %s393, %s395
    %p399 = scmp.eq.s32.totalorder %s65, 0
    %p400 = por %p398, %p399
    %p401 = scmp.ne.s32.totalorder %s393, %s395
    %p402 = scmp.eq.s32.totalorder %s70, 1
    %p403 = por %p401, %p402
    %p404 = scmp.ne.s32.totalorder %s395, %s396
    %p405 = scmp.eq.s32.totalorder %s70, 0
    %p406 = por %p404, %p405
    %p407 = scmp.ne.s32.totalorder %s395, %s396
    %p408 = scmp.eq.s32.totalorder %s71, 1
    %p409 = por %p407, %p408
    %p411 = scmp.ne.s32.totalorder %s396, %s410
    %p412 = scmp.eq.s32.totalorder %s71, 0
    %p413 = por %p411, %p412
    %s415 = sadd.s32 %s414, 1
    %p418 = scmp.eq.s32.totalorder %s65, 1
    %p419 = scmp.ne.s32.totalorder %s414, %s416
    %p420 = scmp.eq.s32.totalorder %s65, 0
    %p421 = por %p419, %p420
    %p422 = scmp.ne.s32.totalorder %s414, %s416
    %p423 = scmp.eq.s32.totalorder %s70, 1
    %p424 = por %p422, %p423
    %p425 = scmp.ne.s32.totalorder %s416, %s417
    %p426 = scmp.eq.s32.totalorder %s70, 0
    %p427 = por %p425, %p426
    %p428 = scmp.ne.s32.totalorder %s416, %s417
    %p429 = scmp.eq.s32.totalorder %s71, 1
    %p430 = por %p428, %p429
    %p432 = scmp.ne.s32.totalorder %s417, %s431
    %p433 = scmp.eq.s32.totalorder %s71, 0
    %p434 = por %p432, %p433
    %s436 = sadd.s32 %s435, 1
    %p439 = scmp.eq.s32.totalorder %s65, 1
    %p440 = scmp.ne.s32.totalorder %s435, %s437
    %p441 = scmp.eq.s32.totalorder %s65, 0
    %p442 = por %p440, %p441
    %p443 = scmp.ne.s32.totalorder %s435, %s437
    %p444 = scmp.eq.s32.totalorder %s70, 1
    %p445 = por %p443, %p444
    %p446 = scmp.ne.s32.totalorder %s437, %s438
    %p447 = scmp.eq.s32.totalorder %s70, 0
    %p448 = por %p446, %p447
    %p449 = scmp.ne.s32.totalorder %s437, %s438
    %p450 = scmp.eq.s32.totalorder %s71, 1
    %p451 = por %p449, %p450
    %p453 = scmp.ne.s32.totalorder %s438, %s452
    %p454 = scmp.eq.s32.totalorder %s71, 0
    %p455 = por %p453, %p454
    %s457 = sadd.s32 %s456, 1
    %p460 = scmp.eq.s32.totalorder %s65, 1
    %p461 = scmp.ne.s32.totalorder %s456, %s458
    %p462 = scmp.eq.s32.totalorder %s65, 0
    %p463 = por %p461, %p462
    %p464 = scmp.ne.s32.totalorder %s456, %s458
    %p465 = scmp.eq.s32.totalorder %s70, 1
    %p466 = por %p464, %p465
    %p467 = scmp.ne.s32.totalorder %s458, %s459
    %p468 = scmp.eq.s32.totalorder %s70, 0
    %p469 = por %p467, %p468
    %p470 = scmp.ne.s32.totalorder %s458, %s459
    %p471 = scmp.eq.s32.totalorder %s71, 1
    %p472 = por %p470, %p471
    %p474 = scmp.ne.s32.totalorder %s459, %s473
    %p475 = scmp.eq.s32.totalorder %s71, 0
    %p476 = por %p474, %p475
    %s478 = sadd.s32 %s477, 1
    %p481 = scmp.eq.s32.totalorder %s65, 1
    %p482 = scmp.ne.s32.totalorder %s477, %s479
    %p483 = scmp.eq.s32.totalorder %s65, 0
    %p484 = por %p482, %p483
    %p485 = scmp.ne.s32.totalorder %s477, %s479
    %p486 = scmp.eq.s32.totalorder %s70, 1
    %p487 = por %p485, %p486
    %p488 = scmp.ne.s32.totalorder %s479, %s480
    %p489 = scmp.eq.s32.totalorder %s70, 0
    %p490 = por %p488, %p489
    %p491 = scmp.ne.s32.totalorder %s479, %s480
    %p492 = scmp.eq.s32.totalorder %s71, 1
    %p493 = por %p491, %p492
    %p495 = scmp.ne.s32.totalorder %s480, %s494
    %p496 = scmp.eq.s32.totalorder %s71, 0
    %p497 = por %p495, %p496
    %s499 = sadd.s32 %s498, 1
    %p502 = scmp.eq.s32.totalorder %s65, 1
    %p503 = scmp.ne.s32.totalorder %s498, %s500
    %p504 = scmp.eq.s32.totalorder %s65, 0
    %p505 = por %p503, %p504
    %p506 = scmp.ne.s32.totalorder %s498, %s500
    %p507 = scmp.eq.s32.totalorder %s70, 1
    %p508 = por %p506, %p507
    %p509 = scmp.ne.s32.totalorder %s500, %s501
    %p510 = scmp.eq.s32.totalorder %s70, 0
    %p511 = por %p509, %p510
    %p512 = scmp.ne.s32.totalorder %s500, %s501
    %p513 = scmp.eq.s32.totalorder %s71, 1
    %p514 = por %p512, %p513
    %p516 = scmp.ne.s32.totalorder %s501, %s515
    %p517 = scmp.eq.s32.totalorder %s71, 0
    %p518 = por %p516, %p517
    %s520 = sadd.s32 %s519, 1
    %p523 = scmp.eq.s32.totalorder %s65, 1
    %p524 = scmp.ne.s32.totalorder %s519, %s521
    %p525 = scmp.eq.s32.totalorder %s65, 0
    %p526 = por %p524, %p525
    %p527 = scmp.ne.s32.totalorder %s519, %s521
    %p528 = scmp.eq.s32.totalorder %s70, 1
    %p529 = por %p527, %p528
    %p530 = scmp.ne.s32.totalorder %s521, %s522
    %p531 = scmp.eq.s32.totalorder %s70, 0
    %p532 = por %p530, %p531
    %p533 = scmp.ne.s32.totalorder %s521, %s522
    %p534 = scmp.eq.s32.totalorder %s71, 1
    %p535 = por %p533, %p534
    %p537 = scmp.ne.s32.totalorder %s522, %s536
    %p538 = scmp.eq.s32.totalorder %s71, 0
    %p539 = por %p537, %p538
    %s541 = sadd.s32 %s540, 1
    %p544 = scmp.eq.s32.totalorder %s65, 1
    %p545 = scmp.ne.s32.totalorder %s540, %s542
    %p546 = scmp.eq.s32.totalorder %s65, 0
    %p547 = por %p545, %p546
    %p548 = scmp.ne.s32.totalorder %s540, %s542
    %p549 = scmp.eq.s32.totalorder %s70, 1
    %p550 = por %p548, %p549
    %p551 = scmp.ne.s32.totalorder %s542, %s543
    %p552 = scmp.eq.s32.totalorder %s70, 0
    %p553 = por %p551, %p552
    %p554 = scmp.ne.s32.totalorder %s542, %s543
    %p555 = scmp.eq.s32.totalorder %s71, 1
    %p556 = por %p554, %p555
    %p558 = scmp.ne.s32.totalorder %s543, %s557
    %p559 = scmp.eq.s32.totalorder %s71, 0
    %p560 = por %p558, %p559
    %s562 = sadd.s32 %s561, 1
    %p565 = scmp.eq.s32.totalorder %s65, 1
    %p566 = scmp.ne.s32.totalorder %s561, %s563
    %p567 = scmp.eq.s32.totalorder %s65, 0
    %p568 = por %p566, %p567
    %p569 = scmp.ne.s32.totalorder %s561, %s563
    %p570 = scmp.eq.s32.totalorder %s70, 1
    %p571 = por %p569, %p570
    %p572 = scmp.ne.s32.totalorder %s563, %s564
    %p573 = scmp.eq.s32.totalorder %s70, 0
    %p574 = por %p572, %p573
    %p575 = scmp.ne.s32.totalorder %s563, %s564
    %p576 = scmp.eq.s32.totalorder %s71, 1
    %p577 = por %p575, %p576
    %p579 = scmp.ne.s32.totalorder %s564, %s578
    %p580 = scmp.eq.s32.totalorder %s71, 0
    %p581 = por %p579, %p580
    %s583 = sadd.s32 %s582, 1
    %p586 = scmp.eq.s32.totalorder %s65, 1
    %p587 = scmp.ne.s32.totalorder %s582, %s584
    %p588 = scmp.eq.s32.totalorder %s65, 0
    %p589 = por %p587, %p588
    %p590 = scmp.ne.s32.totalorder %s582, %s584
    %p591 = scmp.eq.s32.totalorder %s70, 1
    %p592 = por %p590, %p591
    %p593 = scmp.ne.s32.totalorder %s584, %s585
    %p594 = scmp.eq.s32.totalorder %s70, 0
    %p595 = por %p593, %p594
    %p596 = scmp.ne.s32.totalorder %s584, %s585
    %p597 = scmp.eq.s32.totalorder %s71, 1
    %p598 = por %p596, %p597
    %p600 = scmp.ne.s32.totalorder %s585, %s599
    %p601 = scmp.eq.s32.totalorder %s71, 0
    %p602 = por %p600, %p601
    %s604 = sadd.s32 %s603, 1
    %p607 = scmp.eq.s32.totalorder %s65, 1
    %p608 = scmp.ne.s32.totalorder %s603, %s605
    %p609 = scmp.eq.s32.totalorder %s65, 0
    %p610 = por %p608, %p609
    %p611 = scmp.ne.s32.totalorder %s603, %s605
    %p612 = scmp.eq.s32.totalorder %s70, 1
    %p613 = por %p611, %p612
    %p614 = scmp.ne.s32.totalorder %s605, %s606
    %p615 = scmp.eq.s32.totalorder %s70, 0
    %p616 = por %p614, %p615
    %p617 = scmp.ne.s32.totalorder %s605, %s606
    %p618 = scmp.eq.s32.totalorder %s71, 1
    %p619 = por %p617, %p618
    %p621 = scmp.ne.s32.totalorder %s606, %s620
    %p622 = scmp.eq.s32.totalorder %s71, 0
    %p623 = por %p621, %p622
    %s625 = sadd.s32 %s624, 1
    %p628 = scmp.eq.s32.totalorder %s65, 1
    %p629 = scmp.ne.s32.totalorder %s624, %s626
    %p630 = scmp.eq.s32.totalorder %s65, 0
    %p631 = por %p629, %p630
    %p632 = scmp.ne.s32.totalorder %s624, %s626
    %p633 = scmp.eq.s32.totalorder %s70, 1
    %p634 = por %p632, %p633
    %p635 = scmp.ne.s32.totalorder %s626, %s627
    %p636 = scmp.eq.s32.totalorder %s70, 0
    %p637 = por %p635, %p636
    %p638 = scmp.ne.s32.totalorder %s626, %s627
    %p639 = scmp.eq.s32.totalorder %s71, 1
    %p640 = por %p638, %p639
    %p642 = scmp.ne.s32.totalorder %s627, %s641
    %p643 = scmp.eq.s32.totalorder %s71, 0
    %p644 = por %p642, %p643
    %s646 = sadd.s32 %s645, 1
    %p649 = scmp.eq.s32.totalorder %s65, 1
    %p650 = scmp.ne.s32.totalorder %s645, %s647
    %p651 = scmp.eq.s32.totalorder %s65, 0
    %p652 = por %p650, %p651
    %p653 = scmp.ne.s32.totalorder %s645, %s647
    %p654 = scmp.eq.s32.totalorder %s70, 1
    %p655 = por %p653, %p654
    %p656 = scmp.ne.s32.totalorder %s647, %s648
    %p657 = scmp.eq.s32.totalorder %s70, 0
    %p658 = por %p656, %p657
    %p659 = scmp.ne.s32.totalorder %s647, %s648
    %p660 = scmp.eq.s32.totalorder %s71, 1
    %p661 = por %p659, %p660
    %p663 = scmp.ne.s32.totalorder %s648, %s662
    %p664 = scmp.eq.s32.totalorder %s71, 0
    %p665 = por %p663, %p664
    %s667 = sadd.s32 %s666, 1
    %p670 = scmp.eq.s32.totalorder %s65, 1
    %p671 = scmp.ne.s32.totalorder %s666, %s668
    %p672 = scmp.eq.s32.totalorder %s65, 0
    %p673 = por %p671, %p672
    %p674 = scmp.ne.s32.totalorder %s666, %s668
    %p675 = scmp.eq.s32.totalorder %s70, 1
    %p676 = por %p674, %p675
    %p677 = scmp.ne.s32.totalorder %s668, %s669
    %p678 = scmp.eq.s32.totalorder %s70, 0
    %p679 = por %p677, %p678
    %p680 = scmp.ne.s32.totalorder %s668, %s669
    %p681 = scmp.eq.s32.totalorder %s71, 1
    %p682 = por %p680, %p681
    %p684 = scmp.ne.s32.totalorder %s669, %s683
    %p685 = scmp.eq.s32.totalorder %s71, 0
    %p686 = por %p684, %p685
    %s687 = ssub.s32 %s65, %s72
    %p688 = scmp.eq.s32.totalorder %s687, 0
    %s690 = sadd.s32 %s689, 1
    %s691 = scalar_select %p688, %s689, %s690
    %p694 = pneg %p688
    %p695 = scmp.eq.s32.totalorder %s65, 1
    %p696 = por %p694, %p695
    %p697 = scmp.ne.s32.totalorder %s689, %s692
    %p698 = scmp.eq.s32.totalorder %s65, 0
    %p699 = por %p697, %p698
    %p700 = scmp.ne.s32.totalorder %s689, %s692
    %p701 = scmp.eq.s32.totalorder %s70, 1
    %p702 = por %p700, %p701
    %p703 = scmp.ne.s32.totalorder %s692, %s693
    %p704 = scmp.eq.s32.totalorder %s70, 0
    %p705 = por %p703, %p704
    %p706 = scmp.ne.s32.totalorder %s692, %s693
    %p707 = scmp.eq.s32.totalorder %s71, 1
    %p708 = por %p706, %p707
    %p710 = scmp.ne.s32.totalorder %s693, %s709
    %p711 = scmp.eq.s32.totalorder %s71, 0
    %p712 = por %p710, %p711
    %p713 = scmp.le.s32.totalorder 1, %s65
    %p714 = scmp.lt.s32.totalorder %s65, 3
    %p715 = pnand %p713, %p714
    %p716 = pneg %p715
    // Predicated region
    $region9: #{st_gcn_forward.1} parent=5 // pred_check
      _
    $region10: #{st_gcn_forward.1} parent=5 // pred_check_branch
      %718 = sbr.rel (%p715) target = $region12
    $region11: #{st_gcn_forward.1} parent=5 // pred_region
      %s719 = ssub.s32 %s65, 1
      // Predicated region
      $region13: #{st_gcn_forward.1} parent=11 // pred_check
        %p720 = pneg %p86
      $region14: #{st_gcn_forward.1} parent=11 // pred_check_branch
        %722 = sbr.rel (%p720) target = $region16
      $region15: #{st_gcn_forward.1} parent=11 // pred_region
        _
      $region16: #{st_gcn_forward.1} parent=11 // pred_fallthru
        _
      // Predicated region
      $region17: #{st_gcn_forward.1} parent=11 // pred_check
        %p723 = pneg %p107
      $region18: #{st_gcn_forward.1} parent=11 // pred_check_branch
        %725 = sbr.rel (%p723) target = $region20
      $region19: #{st_gcn_forward.1} parent=11 // pred_region
        _
      $region20: #{st_gcn_forward.1} parent=11 // pred_fallthru
        _
      // Predicated region
      $region21: #{st_gcn_forward.1} parent=11 // pred_check
        %p726 = pneg %p154
      $region22: #{st_gcn_forward.1} parent=11 // pred_check_branch
        %728 = sbr.rel (%p726) target = $region24
      $region23: #{st_gcn_forward.1} parent=11 // pred_region
        _
      $region24: #{st_gcn_forward.1} parent=11 // pred_fallthru
        _
      // Predicated region
      $region25: #{st_gcn_forward.1} parent=11 // pred_check
        %p729 = pneg %p175
      $region26: #{st_gcn_forward.1} parent=11 // pred_check_branch
        %731 = sbr.rel (%p729) target = $region28
      $region27: #{st_gcn_forward.1} parent=11 // pred_region
        _
      $region28: #{st_gcn_forward.1} parent=11 // pred_fallthru
        _
      // Predicated region
      $region29: #{st_gcn_forward.1} parent=11 // pred_check
        %p732 = pneg %p196
      $region30: #{st_gcn_forward.1} parent=11 // pred_check_branch
        %734 = sbr.rel (%p732) target = $region32
      $region31: #{st_gcn_forward.1} parent=11 // pred_region
        _
      $region32: #{st_gcn_forward.1} parent=11 // pred_fallthru
        _
      // Predicated region
      $region33: #{st_gcn_forward.1} parent=11 // pred_check
        %p735 = pneg %p217
      $region34: #{st_gcn_forward.1} parent=11 // pred_check_branch
        %737 = sbr.rel (%p735) target = $region36
      $region35: #{st_gcn_forward.1} parent=11 // pred_region
        _
      $region36: #{st_gcn_forward.1} parent=11 // pred_fallthru
        _
      // Predicated region
      $region37: #{st_gcn_forward.1} parent=11 // pred_check
        %p738 = pneg %p238
      $region38: #{st_gcn_forward.1} parent=11 // pred_check_branch
        %740 = sbr.rel (%p738) target = $region40
      $region39: #{st_gcn_forward.1} parent=11 // pred_region
        _
      $region40: #{st_gcn_forward.1} parent=11 // pred_fallthru
        _
      // Predicated region
      $region41: #{st_gcn_forward.1} parent=11 // pred_check
        %p741 = pneg %p259
      $region42: #{st_gcn_forward.1} parent=11 // pred_check_branch
        %743 = sbr.rel (%p741) target = $region44
      $region43: #{st_gcn_forward.1} parent=11 // pred_region
        _
      $region44: #{st_gcn_forward.1} parent=11 // pred_fallthru
        _
      // Predicated region
      $region45: #{st_gcn_forward.1} parent=11 // pred_check
        %p744 = pneg %p280
      $region46: #{st_gcn_forward.1} parent=11 // pred_check_branch
        %746 = sbr.rel (%p744) target = $region48
      $region47: #{st_gcn_forward.1} parent=11 // pred_region
        _
      $region48: #{st_gcn_forward.1} parent=11 // pred_fallthru
        _
      // Predicated region
      $region49: #{st_gcn_forward.1} parent=11 // pred_check
        %p747 = pneg %p301
      $region50: #{st_gcn_forward.1} parent=11 // pred_check_branch
        %749 = sbr.rel (%p747) target = $region52
      $region51: #{st_gcn_forward.1} parent=11 // pred_region
        _
      $region52: #{st_gcn_forward.1} parent=11 // pred_fallthru
        _
      // Predicated region
      $region53: #{st_gcn_forward.1} parent=11 // pred_check
        %p750 = pneg %p322
      $region54: #{st_gcn_forward.1} parent=11 // pred_check_branch
        %752 = sbr.rel (%p750) target = $region56
      $region55: #{st_gcn_forward.1} parent=11 // pred_region
        _
      $region56: #{st_gcn_forward.1} parent=11 // pred_fallthru
        _
      // Predicated region
      $region57: #{st_gcn_forward.1} parent=11 // pred_check
        %p753 = pneg %p343
      $region58: #{st_gcn_forward.1} parent=11 // pred_check_branch
        %755 = sbr.rel (%p753) target = $region60
      $region59: #{st_gcn_forward.1} parent=11 // pred_region
        _
      $region60: #{st_gcn_forward.1} parent=11 // pred_fallthru
        _
      // Predicated region
      $region61: #{st_gcn_forward.1} parent=11 // pred_check
        %p756 = pneg %p364
      $region62: #{st_gcn_forward.1} parent=11 // pred_check_branch
        %758 = sbr.rel (%p756) target = $region64
      $region63: #{st_gcn_forward.1} parent=11 // pred_region
        _
      $region64: #{st_gcn_forward.1} parent=11 // pred_fallthru
        _
      // Predicated region
      $region65: #{st_gcn_forward.1} parent=11 // pred_check
        %p759 = pneg %p385
      $region66: #{st_gcn_forward.1} parent=11 // pred_check_branch
        %761 = sbr.rel (%p759) target = $region68
      $region67: #{st_gcn_forward.1} parent=11 // pred_region
        _
      $region68: #{st_gcn_forward.1} parent=11 // pred_fallthru
        _
      // Predicated region
      $region69: #{st_gcn_forward.1} parent=11 // pred_check
        %p762 = pneg %p406
      $region70: #{st_gcn_forward.1} parent=11 // pred_check_branch
        %764 = sbr.rel (%p762) target = $region72
      $region71: #{st_gcn_forward.1} parent=11 // pred_region
        _
      $region72: #{st_gcn_forward.1} parent=11 // pred_fallthru
        _
      // Predicated region
      $region73: #{st_gcn_forward.1} parent=11 // pred_check
        %p765 = pneg %p427
      $region74: #{st_gcn_forward.1} parent=11 // pred_check_branch
        %767 = sbr.rel (%p765) target = $region76
      $region75: #{st_gcn_forward.1} parent=11 // pred_region
        _
      $region76: #{st_gcn_forward.1} parent=11 // pred_fallthru
        _
      // Predicated region
      $region77: #{st_gcn_forward.1} parent=11 // pred_check
        %p768 = pneg %p448
      $region78: #{st_gcn_forward.1} parent=11 // pred_check_branch
        %770 = sbr.rel (%p768) target = $region80
      $region79: #{st_gcn_forward.1} parent=11 // pred_region
        _
      $region80: #{st_gcn_forward.1} parent=11 // pred_fallthru
        _
      // Predicated region
      $region81: #{st_gcn_forward.1} parent=11 // pred_check
        %p771 = pneg %p469
      $region82: #{st_gcn_forward.1} parent=11 // pred_check_branch
        %773 = sbr.rel (%p771) target = $region84
      $region83: #{st_gcn_forward.1} parent=11 // pred_region
        _
      $region84: #{st_gcn_forward.1} parent=11 // pred_fallthru
        _
      // Predicated region
      $region85: #{st_gcn_forward.1} parent=11 // pred_check
        %p774 = pneg %p490
      $region86: #{st_gcn_forward.1} parent=11 // pred_check_branch
        %776 = sbr.rel (%p774) target = $region88
      $region87: #{st_gcn_forward.1} parent=11 // pred_region
        _
      $region88: #{st_gcn_forward.1} parent=11 // pred_fallthru
        _
      // Predicated region
      $region89: #{st_gcn_forward.1} parent=11 // pred_check
        %p777 = pneg %p511
      $region90: #{st_gcn_forward.1} parent=11 // pred_check_branch
        %779 = sbr.rel (%p777) target = $region92
      $region91: #{st_gcn_forward.1} parent=11 // pred_region
        _
      $region92: #{st_gcn_forward.1} parent=11 // pred_fallthru
        _
      // Predicated region
      $region93: #{st_gcn_forward.1} parent=11 // pred_check
        %p780 = pneg %p532
      $region94: #{st_gcn_forward.1} parent=11 // pred_check_branch
        %782 = sbr.rel (%p780) target = $region96
      $region95: #{st_gcn_forward.1} parent=11 // pred_region
        _
      $region96: #{st_gcn_forward.1} parent=11 // pred_fallthru
        _
      // Predicated region
      $region97: #{st_gcn_forward.1} parent=11 // pred_check
        %p783 = pneg %p553
      $region98: #{st_gcn_forward.1} parent=11 // pred_check_branch
        %785 = sbr.rel (%p783) target = $region100
      $region99: #{st_gcn_forward.1} parent=11 // pred_region
        _
      $region100: #{st_gcn_forward.1} parent=11 // pred_fallthru
        _
      // Predicated region
      $region101: #{st_gcn_forward.1} parent=11 // pred_check
        %p786 = pneg %p574
      $region102: #{st_gcn_forward.1} parent=11 // pred_check_branch
        %788 = sbr.rel (%p786) target = $region104
      $region103: #{st_gcn_forward.1} parent=11 // pred_region
        _
      $region104: #{st_gcn_forward.1} parent=11 // pred_fallthru
        _
      // Predicated region
      $region105: #{st_gcn_forward.1} parent=11 // pred_check
        %p789 = pneg %p595
      $region106: #{st_gcn_forward.1} parent=11 // pred_check_branch
        %791 = sbr.rel (%p789) target = $region108
      $region107: #{st_gcn_forward.1} parent=11 // pred_region
        _
      $region108: #{st_gcn_forward.1} parent=11 // pred_fallthru
        _
      // Predicated region
      $region109: #{st_gcn_forward.1} parent=11 // pred_check
        %p792 = pneg %p616
      $region110: #{st_gcn_forward.1} parent=11 // pred_check_branch
        %794 = sbr.rel (%p792) target = $region112
      $region111: #{st_gcn_forward.1} parent=11 // pred_region
        _
      $region112: #{st_gcn_forward.1} parent=11 // pred_fallthru
        _
      // Predicated region
      $region113: #{st_gcn_forward.1} parent=11 // pred_check
        %p795 = pneg %p637
      $region114: #{st_gcn_forward.1} parent=11 // pred_check_branch
        %797 = sbr.rel (%p795) target = $region116
      $region115: #{st_gcn_forward.1} parent=11 // pred_region
        _
      $region116: #{st_gcn_forward.1} parent=11 // pred_fallthru
        _
      // Predicated region
      $region117: #{st_gcn_forward.1} parent=11 // pred_check
        %p798 = pneg %p658
      $region118: #{st_gcn_forward.1} parent=11 // pred_check_branch
        %800 = sbr.rel (%p798) target = $region120
      $region119: #{st_gcn_forward.1} parent=11 // pred_region
        _
      $region120: #{st_gcn_forward.1} parent=11 // pred_fallthru
        _
      // Predicated region
      $region121: #{st_gcn_forward.1} parent=11 // pred_check
        %p801 = pneg %p679
      $region122: #{st_gcn_forward.1} parent=11 // pred_check_branch
        %803 = sbr.rel (%p801) target = $region124
      $region123: #{st_gcn_forward.1} parent=11 // pred_region
        _
      $region124: #{st_gcn_forward.1} parent=11 // pred_fallthru
        _
    $region12: #{st_gcn_forward.1} parent=5 // pred_fallthru
      _
    %p804 = scmp.lt.s32.totalorder %s65, 2
    // Predicated region
    $region125: #{st_gcn_forward.1} parent=5 // pred_check
      %p805 = pneg %p804
    $region126: #{st_gcn_forward.1} parent=5 // pred_check_branch
      %807 = sbr.rel (%p805) target = $region128
    $region127: #{st_gcn_forward.1} parent=5 // pred_region
      // Predicated region
      $region129: #{st_gcn_forward.1} parent=127 // pred_check
        %p808 = pneg %p127
      $region130: #{st_gcn_forward.1} parent=127 // pred_check_branch
        %810 = sbr.rel (%p808) target = $region132
      $region131: #{st_gcn_forward.1} parent=127 // pred_region
        %s811 = smul.u32 16, %s65
        %p812 = scmp.lt.s32.totalorder %s811, 31
        %s813 = scalar_select %p812, %s811, 31
        %s814 = smul.addr %s813, 8
        %s815 = scalar_lea.vmem %s5, %s814
        %s816 = smul.u32 16, %s65
      $region132: #{st_gcn_forward.1} parent=127 // pred_fallthru
        _
    $region128: #{st_gcn_forward.1} parent=5 // pred_fallthru
      _
    %p817 = scmp.le.s32.totalorder 1, %s65
    %p818 = scmp.lt.s32.totalorder %s65, 3
    %p819 = pnand %p817, %p818
    %p820 = pneg %p819
    // Predicated region
    $region133: #{st_gcn_forward.1} parent=5 // pred_check
      _
    $region134: #{st_gcn_forward.1} parent=5 // pred_check_branch
      %822 = sbr.rel (%p819) target = $region136
    $region135: #{st_gcn_forward.1} parent=5 // pred_region
      %s823 = ssub.s32 %s65, 1
      %p824 = pneg %p86
      %p825 = pneg %p83
      %p826 = pneg %p107
      %p827 = pneg %p104
      %s828 = smul.u32 16, %s70
      %p829 = scmp.lt.s32.totalorder %s828, 31
      %s830 = scalar_select %p829, %s828, 31
      %s831 = smul.addr %s830, 8
      %s832 = scalar_lea.vmem %s5, %s831
      %p833 = pneg %p133
      %p834 = pneg %p130
      %p835 = pneg %p154
      %p836 = pneg %p151
      %p837 = pneg %p175
      %p838 = pneg %p172
      %p839 = pneg %p196
      %p840 = pneg %p193
      %p841 = pneg %p217
      %p842 = pneg %p214
      %p843 = pneg %p238
      %p844 = pneg %p235
      %p845 = pneg %p259
      %p846 = pneg %p256
      %p847 = pneg %p280
      %p848 = pneg %p277
      %p849 = pneg %p301
      %p850 = pneg %p298
      %p851 = pneg %p322
      %p852 = pneg %p319
      %p853 = pneg %p343
      %p854 = pneg %p340
      %p855 = pneg %p364
      %p856 = pneg %p361
      %p857 = pneg %p385
      %p858 = pneg %p382
      %p859 = pneg %p406
      %p860 = pneg %p403
      %p861 = pneg %p427
      %p862 = pneg %p424
      %p863 = pneg %p448
      %p864 = pneg %p445
      %p865 = pneg %p469
      %p866 = pneg %p466
      %p867 = pneg %p490
      %p868 = pneg %p487
      %p869 = pneg %p511
      %p870 = pneg %p508
      %p871 = pneg %p532
      %p872 = pneg %p529
      %p873 = pneg %p553
      %p874 = pneg %p550
      %p875 = pneg %p574
      %p876 = pneg %p571
      %p877 = pneg %p595
      %p878 = pneg %p592
      %p879 = pneg %p616
      %p880 = pneg %p613
      %p881 = pneg %p637
      %p882 = pneg %p634
      %p883 = pneg %p658
      %p884 = pneg %p655
      %p885 = pneg %p679
      %p886 = pneg %p676
      %p887 = pneg %p705
      %p888 = pneg %p702
      %p889 = scmp.lt.s32.totalorder %s70, 1
      %s890 = scalar_select %p889, %s70, 1
      %s891 = smul.addr %s890, 8
      %s892 = scalar_lea.vmem %s59, %s891
      %s893 = smul.u32 16, %s70
      %p894 = scmp.lt.s32.totalorder %s893, 31
      %s895 = scalar_select %p894, %s893, 31
      %s896 = smul.addr %s895, 8
      %s897 = scalar_lea.vmem %s5, %s896
      %s898 = smul.u32 16, %s70
      %p899 = scmp.lt.s32.totalorder %s70, 1
      %s900 = scalar_select %p899, %s70, 1
      %s901 = smul.addr %s900, 8
      %s902 = scalar_lea.vmem %s59, %s901
      %v903 = vld [vmem:[%s1] sm:$0xff]
      %v904 = vld [vmem:[%s1 + $0x8] sm:$0xff]
      %v905 = vld [vmem:[%s1 + $0x10] sm:$0xff]
      %v906 = vld [vmem:[%s1 + $0x18] sm:$0xff]
      %v907 = vld [vmem:[%s1 + $0x20] sm:$0xff]
      %v908 = vld [vmem:[%s1 + $0x28] sm:$0xff]
      %v909 = vld [vmem:[%s1 + $0x30] sm:$0xff]
      %v910 = vld [vmem:[%s1 + $0x38] sm:$0xff]
      %v911 = vld [vmem:[%s1 + $0x40] sm:$0xff]
      %v912 = vld [vmem:[%s1 + $0x48] sm:$0xff]
      %v913 = vld [vmem:[%s1 + $0x50] sm:$0xff]
      %v914 = vld [vmem:[%s1 + $0x58] sm:$0xff]
      %v915 = vld [vmem:[%s1 + $0x60] sm:$0xff]
      %v916 = vld [vmem:[%s1 + $0x68] sm:$0xff]
      %v917 = vld [vmem:[%s1 + $0x70] sm:$0xff]
      %v918 = vld [vmem:[%s1 + $0x78] sm:$0xff]
      %v919 = vld [vmem:[%s897] sm:$0xff]
      %v920 = vld [vmem:[%s897 + $0x8] sm:$0xff]
      %v921 = vld [vmem:[%s897 + $0x10] sm:$0xff]
      %v922 = vld [vmem:[%s897 + $0x18] sm:$0xff]
      %v923 = vld [vmem:[%s897 + $0x20] sm:$0xff]
      %v924 = vld [vmem:[%s897 + $0x28] sm:$0xff]
      %v925 = vld [vmem:[%s897 + $0x30] sm:$0xff]
      %v926 = vld [vmem:[%s897 + $0x38] sm:$0xff]
      %v927 = vld [vmem:[%s897 + $0x40] sm:$0xff]
      %v928 = vld [vmem:[%s897 + $0x48] sm:$0xff]
      %v929 = vld [vmem:[%s897 + $0x50] sm:$0xff]
      %v930 = vld [vmem:[%s897 + $0x58] sm:$0xff]
      %v931 = vld [vmem:[%s897 + $0x60] sm:$0xff]
      %v932 = vld [vmem:[%s897 + $0x68] sm:$0xff]
      %v933 = vld [vmem:[%s897 + $0x70] sm:$0xff]
      %v934 = vld [vmem:[%s897 + $0x78] sm:$0xff]
      %935 = vmatpush.msra.mxu0 %v934
      %936 = vmatpush.msra.mxu0 %v933
      %937 = vmatpush.msra.mxu0 %v932
      %938 = vmatpush.msra.mxu0 %v931
      %939 = vmatpush.msra.mxu0 %v930
      %940 = vmatpush.msra.mxu0 %v929
      %941 = vmatpush.msra.mxu0 %v928
      %942 = vmatpush.msra.mxu0 %v927
      %943 = vmatpush.msra.mxu0 %v926
      %944 = vmatpush.msra.mxu0 %v925
      %945 = vmatpush.msra.mxu0 %v924
      %946 = vmatpush.msra.mxu0 %v923
      %947 = vmatpush.msra.mxu0 %v922
      %948 = vmatpush.msra.mxu0 %v921
      %949 = vmatpush.msra.mxu0 %v920
      %950 = vmatpush.msra.mxu0 %v919
      %951 = vmatmul.f32.gmra.mxu0 %v903
      %v952 = vpop.f32.mrf.mxu0
      %v953 = vadd.f32 0.0, %v952
      %954 = vmatmul.f32.gmra.mxu0 %v904
      %v955 = vpop.f32.mrf.mxu0
      %v956 = vadd.f32 0.0, %v955
      %957 = vmatmul.f32.gmra.mxu0 %v905
      %v958 = vpop.f32.mrf.mxu0
      %v959 = vadd.f32 0.0, %v958
      %960 = vmatmul.f32.gmra.mxu0 %v906
      %v961 = vpop.f32.mrf.mxu0
      %v962 = vadd.f32 0.0, %v961
      %963 = vmatmul.f32.gmra.mxu0 %v907
      %v964 = vpop.f32.mrf.mxu0
      %v965 = vadd.f32 0.0, %v964
      %966 = vmatmul.f32.gmra.mxu0 %v908
      %v967 = vpop.f32.mrf.mxu0
      %v968 = vadd.f32 0.0, %v967
      %969 = vmatmul.f32.gmra.mxu0 %v909
      %v970 = vpop.f32.mrf.mxu0
      %v971 = vadd.f32 0.0, %v970
      %972 = vmatmul.f32.gmra.mxu0 %v910
      %v973 = vpop.f32.mrf.mxu0
      %v974 = vadd.f32 0.0, %v973
      %975 = vmatmul.f32.gmra.mxu0 %v911
      %v976 = vpop.f32.mrf.mxu0
      %v977 = vadd.f32 0.0, %v976
      %978 = vmatmul.f32.gmra.mxu0 %v912
      %v979 = vpop.f32.mrf.mxu0
      %v980 = vadd.f32 0.0, %v979
      %981 = vmatmul.f32.gmra.mxu0 %v913
      %v982 = vpop.f32.mrf.mxu0
      %v983 = vadd.f32 0.0, %v982
      %984 = vmatmul.f32.gmra.mxu0 %v914
      %v985 = vpop.f32.mrf.mxu0
      %v986 = vadd.f32 0.0, %v985
      %987 = vmatmul.f32.gmra.mxu0 %v915
      %v988 = vpop.f32.mrf.mxu0
      %v989 = vadd.f32 0.0, %v988
      %990 = vmatmul.f32.gmra.mxu0 %v916
      %v991 = vpop.f32.mrf.mxu0
      %v992 = vadd.f32 0.0, %v991
      %993 = vmatmul.f32.gmra.mxu0 %v917
      %v994 = vpop.f32.mrf.mxu0
      %v995 = vadd.f32 0.0, %v994
      %996 = vmatmul.f32.gmra.mxu0 %v918
      %v997 = vpop.f32.mrf.mxu0
      %v998 = vadd.f32 0.0, %v997
      %999 = vdwg.mxu0
      %v1000 = vld [vmem:[%s7] sm:$0xff]
      %v1001 = vld [vmem:[%s7 + $0x8] sm:$0xff]
      %v1002 = vld [vmem:[%s7 + $0x10] sm:$0xff]
      %v1003 = vld [vmem:[%s7 + $0x18] sm:$0xff]
      %v1004 = vld [vmem:[%s7 + $0x20] sm:$0xff]
      %v1005 = vld [vmem:[%s7 + $0x28] sm:$0xff]
      %v1006 = vld [vmem:[%s7 + $0x30] sm:$0xff]
      %v1007 = vld [vmem:[%s7 + $0x38] sm:$0xff]
      %v1008 = vld [vmem:[%s7 + $0x40] sm:$0xff]
      %v1009 = vld [vmem:[%s7 + $0x48] sm:$0xff]
      %v1010 = vld [vmem:[%s7 + $0x50] sm:$0xff]
      %v1011 = vld [vmem:[%s7 + $0x58] sm:$0xff]
      %v1012 = vld [vmem:[%s7 + $0x60] sm:$0xff]
      %v1013 = vld [vmem:[%s7 + $0x68] sm:$0xff]
      %v1014 = vld [vmem:[%s7 + $0x70] sm:$0xff]
      %v1015 = vld [vmem:[%s7 + $0x78] sm:$0xff]
      %v1016 = vld [vmem:[%s31] sm:$0x1]
      %v1018 = vperm.slane %v1016, 0
      %1020 = vmatpush.msra.mxu0 %v1015
      %1021 = vmatpush.msra.mxu0 %v1014
      %1022 = vmatpush.msra.mxu0 %v1013
      %1023 = vmatpush.msra.mxu0 %v1012
      %1024 = vmatpush.msra.mxu0 %v1011
      %1025 = vmatpush.msra.mxu0 %v1010
      %1026 = vmatpush.msra.mxu0 %v1009
      %1027 = vmatpush.msra.mxu0 %v1008
      %1028 = vmatpush.msra.mxu0 %v1007
      %1029 = vmatpush.msra.mxu0 %v1006
      %1030 = vmatpush.msra.mxu0 %v1005
      %1031 = vmatpush.msra.mxu0 %v1004
      %1032 = vmatpush.msra.mxu0 %v1003
      %1033 = vmatpush.msra.mxu0 %v1002
      %1034 = vmatpush.msra.mxu0 %v1001
      %1035 = vmatpush.msra.mxu0 %v1000
      %1036 = vmatmul.f32.gmra.mxu0 %v953
      %v1037 = vpop.f32.mrf.mxu0
      %v1038 = vadd.f32 %v1018, %v1037
      %1039 = vmatmul.f32.gmra.mxu0 %v956
      %v1040 = vpop.f32.mrf.mxu0
      %v1041 = vadd.f32 %v1018, %v1040
      %1042 = vmatmul.f32.gmra.mxu0 %v959
      %v1043 = vpop.f32.mrf.mxu0
      %v1044 = vadd.f32 %v1018, %v1043
      %1045 = vmatmul.f32.gmra.mxu0 %v962
      %v1046 = vpop.f32.mrf.mxu0
      %v1047 = vadd.f32 %v1018, %v1046
      %1048 = vmatmul.f32.gmra.mxu0 %v965
      %v1049 = vpop.f32.mrf.mxu0
      %v1050 = vadd.f32 %v1018, %v1049
      %1051 = vmatmul.f32.gmra.mxu0 %v968
      %v1052 = vpop.f32.mrf.mxu0
      %v1053 = vadd.f32 %v1018, %v1052
      %1054 = vmatmul.f32.gmra.mxu0 %v971
      %v1055 = vpop.f32.mrf.mxu0
      %v1056 = vadd.f32 %v1018, %v1055
      %1057 = vmatmul.f32.gmra.mxu0 %v974
      %v1058 = vpop.f32.mrf.mxu0
      %v1059 = vadd.f32 %v1018, %v1058
      %1060 = vmatmul.f32.gmra.mxu0 %v977
      %v1061 = vpop.f32.mrf.mxu0
      %v1062 = vadd.f32 %v1018, %v1061
      %1063 = vmatmul.f32.gmra.mxu0 %v980
      %v1064 = vpop.f32.mrf.mxu0
      %v1065 = vadd.f32 %v1018, %v1064
      %1066 = vmatmul.f32.gmra.mxu0 %v983
      %v1067 = vpop.f32.mrf.mxu0
      %v1068 = vadd.f32 %v1018, %v1067
      %1069 = vmatmul.f32.gmra.mxu0 %v986
      %v1070 = vpop.f32.mrf.mxu0
      %v1071 = vadd.f32 %v1018, %v1070
      %1072 = vmatmul.f32.gmra.mxu0 %v989
      %v1073 = vpop.f32.mrf.mxu0
      %v1074 = vadd.f32 %v1018, %v1073
      %1075 = vmatmul.f32.gmra.mxu0 %v992
      %v1076 = vpop.f32.mrf.mxu0
      %v1077 = vadd.f32 %v1018, %v1076
      %1078 = vmatmul.f32.gmra.mxu0 %v995
      %v1079 = vpop.f32.mrf.mxu0
      %v1080 = vadd.f32 %v1018, %v1079
      %1081 = vmatmul.f32.gmra.mxu0 %v998
      %v1082 = vpop.f32.mrf.mxu0
      %v1083 = vadd.f32 %v1018, %v1082
      %1084 = vdwg.mxu0
      %v1085 = vmax.f32 %v1038, 0.0
      %v1086 = vmax.f32 %v1041, 0.0
      %v1087 = vmax.f32 %v1044, 0.0
      %v1088 = vmax.f32 %v1047, 0.0
      %v1089 = vmax.f32 %v1050, 0.0
      %v1090 = vmax.f32 %v1053, 0.0
      %v1091 = vmax.f32 %v1056, 0.0
      %v1092 = vmax.f32 %v1059, 0.0
      %v1093 = vmax.f32 %v1062, 0.0
      %v1094 = vmax.f32 %v1065, 0.0
      %v1095 = vmax.f32 %v1068, 0.0
      %v1096 = vmax.f32 %v1071, 0.0
      %v1097 = vmax.f32 %v1074, 0.0
      %v1098 = vmax.f32 %v1077, 0.0
      %v1099 = vmax.f32 %v1080, 0.0
      %v1100 = vmax.f32 %v1083, 0.0
      %1101 = vmatpush.msra.mxu0 %v1100
      %1102 = vmatpush.msra.mxu0 %v1099
      %1103 = vmatpush.msra.mxu0 %v1098
      %1104 = vmatpush.msra.mxu0 %v1097
      %1105 = vmatpush.msra.mxu0 %v1096
      %1106 = vmatpush.msra.mxu0 %v1095
      %1107 = vmatpush.msra.mxu0 %v1094
      %1108 = vmatpush.msra.mxu0 %v1093
      %1109 = vmatpush.msra.mxu0 %v1092
      %1110 = vmatpush.msra.mxu0 %v1091
      %1111 = vmatpush.msra.mxu0 %v1090
      %1112 = vmatpush.msra.mxu0 %v1089
      %1113 = vmatpush.msra.mxu0 %v1088
      %1114 = vmatpush.msra.mxu0 %v1087
      %1115 = vmatpush.msra.mxu0 %v1086
      %1116 = vmatpush.msra.mxu0 %v1085
      %1117 = vmatmul.f32.gmra.mxu0 %v903
      %v1118 = vpop.f32.mrf.mxu0
      %v1119 = vadd.f32 0.0, %v1118
      %1120 = vmatmul.f32.gmra.mxu0 %v904
      %v1121 = vpop.f32.mrf.mxu0
      %v1122 = vadd.f32 0.0, %v1121
      %1123 = vmatmul.f32.gmra.mxu0 %v905
      %v1124 = vpop.f32.mrf.mxu0
      %v1125 = vadd.f32 0.0, %v1124
      %1126 = vmatmul.f32.gmra.mxu0 %v906
      %v1127 = vpop.f32.mrf.mxu0
      %v1128 = vadd.f32 0.0, %v1127
      %1129 = vmatmul.f32.gmra.mxu0 %v907
      %v1130 = vpop.f32.mrf.mxu0
      %v1131 = vadd.f32 0.0, %v1130
      %1132 = vmatmul.f32.gmra.mxu0 %v908
      %v1133 = vpop.f32.mrf.mxu0
      %v1134 = vadd.f32 0.0, %v1133
      %1135 = vmatmul.f32.gmra.mxu0 %v909
      %v1136 = vpop.f32.mrf.mxu0
      %v1137 = vadd.f32 0.0, %v1136
      %1138 = vmatmul.f32.gmra.mxu0 %v910
      %v1139 = vpop.f32.mrf.mxu0
      %v1140 = vadd.f32 0.0, %v1139
      %1141 = vmatmul.f32.gmra.mxu0 %v911
      %v1142 = vpop.f32.mrf.mxu0
      %v1143 = vadd.f32 0.0, %v1142
      %1144 = vmatmul.f32.gmra.mxu0 %v912
      %v1145 = vpop.f32.mrf.mxu0
      %v1146 = vadd.f32 0.0, %v1145
      %1147 = vmatmul.f32.gmra.mxu0 %v913
      %v1148 = vpop.f32.mrf.mxu0
      %v1149 = vadd.f32 0.0, %v1148
      %1150 = vmatmul.f32.gmra.mxu0 %v914
      %v1151 = vpop.f32.mrf.mxu0
      %v1152 = vadd.f32 0.0, %v1151
      %1153 = vmatmul.f32.gmra.mxu0 %v915
      %v1154 = vpop.f32.mrf.mxu0
      %v1155 = vadd.f32 0.0, %v1154
      %1156 = vmatmul.f32.gmra.mxu0 %v916
      %v1157 = vpop.f32.mrf.mxu0
      %v1158 = vadd.f32 0.0, %v1157
      %1159 = vmatmul.f32.gmra.mxu0 %v917
      %v1160 = vpop.f32.mrf.mxu0
      %v1161 = vadd.f32 0.0, %v1160
      %1162 = vmatmul.f32.gmra.mxu0 %v918
      %v1163 = vpop.f32.mrf.mxu0
      %v1164 = vadd.f32 0.0, %v1163
      %1165 = vdwg.mxu0
      %v1166 = vld [vmem:[%s9] sm:$0xff]
      %v1167 = vld [vmem:[%s9 + $0x8] sm:$0xff]
      %v1168 = vld [vmem:[%s9 + $0x10] sm:$0xff]
      %v1169 = vld [vmem:[%s9 + $0x18] sm:$0xff]
      %v1170 = vld [vmem:[%s9 + $0x20] sm:$0xff]
      %v1171 = vld [vmem:[%s9 + $0x28] sm:$0xff]
      %v1172 = vld [vmem:[%s9 + $0x30] sm:$0xff]
      %v1173 = vld [vmem:[%s9 + $0x38] sm:$0xff]
      %v1174 = vld [vmem:[%s9 + $0x40] sm:$0xff]
      %v1175 = vld [vmem:[%s9 + $0x48] sm:$0xff]
      %v1176 = vld [vmem:[%s9 + $0x50] sm:$0xff]
      %v1177 = vld [vmem:[%s9 + $0x58] sm:$0xff]
      %v1178 = vld [vmem:[%s9 + $0x60] sm:$0xff]
      %v1179 = vld [vmem:[%s9 + $0x68] sm:$0xff]
      %v1180 = vld [vmem:[%s9 + $0x70] sm:$0xff]
      %v1181 = vld [vmem:[%s9 + $0x78] sm:$0xff]
      %v1182 = vld [vmem:[%s33] sm:$0x1]
      %v1184 = vperm.slane %v1182, 0
      %1186 = vmatpush.msra.mxu0 %v1181
      %1187 = vmatpush.msra.mxu0 %v1180
      %1188 = vmatpush.msra.mxu0 %v1179
      %1189 = vmatpush.msra.mxu0 %v1178
      %1190 = vmatpush.msra.mxu0 %v1177
      %1191 = vmatpush.msra.mxu0 %v1176
      %1192 = vmatpush.msra.mxu0 %v1175
      %1193 = vmatpush.msra.mxu0 %v1174
      %1194 = vmatpush.msra.mxu0 %v1173
      %1195 = vmatpush.msra.mxu0 %v1172
      %1196 = vmatpush.msra.mxu0 %v1171
      %1197 = vmatpush.msra.mxu0 %v1170
      %1198 = vmatpush.msra.mxu0 %v1169
      %1199 = vmatpush.msra.mxu0 %v1168
      %1200 = vmatpush.msra.mxu0 %v1167
      %1201 = vmatpush.msra.mxu0 %v1166
      %1202 = vmatmul.f32.gmra.mxu0 %v1119
      %v1203 = vpop.f32.mrf.mxu0
      %v1204 = vadd.f32 %v1184, %v1203
      %1205 = vmatmul.f32.gmra.mxu0 %v1122
      %v1206 = vpop.f32.mrf.mxu0
      %v1207 = vadd.f32 %v1184, %v1206
      %1208 = vmatmul.f32.gmra.mxu0 %v1125
      %v1209 = vpop.f32.mrf.mxu0
      %v1210 = vadd.f32 %v1184, %v1209
      %1211 = vmatmul.f32.gmra.mxu0 %v1128
      %v1212 = vpop.f32.mrf.mxu0
      %v1213 = vadd.f32 %v1184, %v1212
      %1214 = vmatmul.f32.gmra.mxu0 %v1131
      %v1215 = vpop.f32.mrf.mxu0
      %v1216 = vadd.f32 %v1184, %v1215
      %1217 = vmatmul.f32.gmra.mxu0 %v1134
      %v1218 = vpop.f32.mrf.mxu0
      %v1219 = vadd.f32 %v1184, %v1218
      %1220 = vmatmul.f32.gmra.mxu0 %v1137
      %v1221 = vpop.f32.mrf.mxu0
      %v1222 = vadd.f32 %v1184, %v1221
      %1223 = vmatmul.f32.gmra.mxu0 %v1140
      %v1224 = vpop.f32.mrf.mxu0
      %v1225 = vadd.f32 %v1184, %v1224
      %1226 = vmatmul.f32.gmra.mxu0 %v1143
      %v1227 = vpop.f32.mrf.mxu0
      %v1228 = vadd.f32 %v1184, %v1227
      %1229 = vmatmul.f32.gmra.mxu0 %v1146
      %v1230 = vpop.f32.mrf.mxu0
      %v1231 = vadd.f32 %v1184, %v1230
      %1232 = vmatmul.f32.gmra.mxu0 %v1149
      %v1233 = vpop.f32.mrf.mxu0
      %v1234 = vadd.f32 %v1184, %v1233
      %1235 = vmatmul.f32.gmra.mxu0 %v1152
      %v1236 = vpop.f32.mrf.mxu0
      %v1237 = vadd.f32 %v1184, %v1236
      %1238 = vmatmul.f32.gmra.mxu0 %v1155
      %v1239 = vpop.f32.mrf.mxu0
      %v1240 = vadd.f32 %v1184, %v1239
      %1241 = vmatmul.f32.gmra.mxu0 %v1158
      %v1242 = vpop.f32.mrf.mxu0
      %v1243 = vadd.f32 %v1184, %v1242
      %1244 = vmatmul.f32.gmra.mxu0 %v1161
      %v1245 = vpop.f32.mrf.mxu0
      %v1246 = vadd.f32 %v1184, %v1245
      %1247 = vmatmul.f32.gmra.mxu0 %v1164
      %v1248 = vpop.f32.mrf.mxu0
      %v1249 = vadd.f32 %v1184, %v1248
      %1250 = vdwg.mxu0
      %v1251 = vmax.f32 %v1204, 0.0
      %v1252 = vmax.f32 %v1207, 0.0
      %v1253 = vmax.f32 %v1210, 0.0
      %v1254 = vmax.f32 %v1213, 0.0
      %v1255 = vmax.f32 %v1216, 0.0
      %v1256 = vmax.f32 %v1219, 0.0
      %v1257 = vmax.f32 %v1222, 0.0
      %v1258 = vmax.f32 %v1225, 0.0
      %v1259 = vmax.f32 %v1228, 0.0
      %v1260 = vmax.f32 %v1231, 0.0
      %v1261 = vmax.f32 %v1234, 0.0
      %v1262 = vmax.f32 %v1237, 0.0
      %v1263 = vmax.f32 %v1240, 0.0
      %v1264 = vmax.f32 %v1243, 0.0
      %v1265 = vmax.f32 %v1246, 0.0
      %v1266 = vmax.f32 %v1249, 0.0
      %v1267 = vadd.f32 %v1251, %v1085
      %v1268 = vadd.f32 %v1252, %v1086
      %v1269 = vadd.f32 %v1253, %v1087
      %v1270 = vadd.f32 %v1254, %v1088
      %v1271 = vadd.f32 %v1255, %v1089
      %v1272 = vadd.f32 %v1256, %v1090
      %v1273 = vadd.f32 %v1257, %v1091
      %v1274 = vadd.f32 %v1258, %v1092
      %v1275 = vadd.f32 %v1259, %v1093
      %v1276 = vadd.f32 %v1260, %v1094
      %v1277 = vadd.f32 %v1261, %v1095
      %v1278 = vadd.f32 %v1262, %v1096
      %v1279 = vadd.f32 %v1263, %v1097
      %v1280 = vadd.f32 %v1264, %v1098
      %v1281 = vadd.f32 %v1265, %v1099
      %v1282 = vadd.f32 %v1266, %v1100
      %1283 = vmatpush.msra.mxu0 %v1282
      %1284 = vmatpush.msra.mxu0 %v1281
      %1285 = vmatpush.msra.mxu0 %v1280
      %1286 = vmatpush.msra.mxu0 %v1279
      %1287 = vmatpush.msra.mxu0 %v1278
      %1288 = vmatpush.msra.mxu0 %v1277
      %1289 = vmatpush.msra.mxu0 %v1276
      %1290 = vmatpush.msra.mxu0 %v1275
      %1291 = vmatpush.msra.mxu0 %v1274
      %1292 = vmatpush.msra.mxu0 %v1273
      %1293 = vmatpush.msra.mxu0 %v1272
      %1294 = vmatpush.msra.mxu0 %v1271
      %1295 = vmatpush.msra.mxu0 %v1270
      %1296 = vmatpush.msra.mxu0 %v1269
      %1297 = vmatpush.msra.mxu0 %v1268
      %1298 = vmatpush.msra.mxu0 %v1267
      %1299 = vmatmul.f32.gmra.mxu0 %v903
      %v1300 = vpop.f32.mrf.mxu0
      %v1301 = vadd.f32 0.0, %v1300
      %1302 = vmatmul.f32.gmra.mxu0 %v904
      %v1303 = vpop.f32.mrf.mxu0
      %v1304 = vadd.f32 0.0, %v1303
      %1305 = vmatmul.f32.gmra.mxu0 %v905
      %v1306 = vpop.f32.mrf.mxu0
      %v1307 = vadd.f32 0.0, %v1306
      %1308 = vmatmul.f32.gmra.mxu0 %v906
      %v1309 = vpop.f32.mrf.mxu0
      %v1310 = vadd.f32 0.0, %v1309
      %1311 = vmatmul.f32.gmra.mxu0 %v907
      %v1312 = vpop.f32.mrf.mxu0
      %v1313 = vadd.f32 0.0, %v1312
      %1314 = vmatmul.f32.gmra.mxu0 %v908
      %v1315 = vpop.f32.mrf.mxu0
      %v1316 = vadd.f32 0.0, %v1315
      %1317 = vmatmul.f32.gmra.mxu0 %v909
      %v1318 = vpop.f32.mrf.mxu0
      %v1319 = vadd.f32 0.0, %v1318
      %1320 = vmatmul.f32.gmra.mxu0 %v910
      %v1321 = vpop.f32.mrf.mxu0
      %v1322 = vadd.f32 0.0, %v1321
      %1323 = vmatmul.f32.gmra.mxu0 %v911
      %v1324 = vpop.f32.mrf.mxu0
      %v1325 = vadd.f32 0.0, %v1324
      %1326 = vmatmul.f32.gmra.mxu0 %v912
      %v1327 = vpop.f32.mrf.mxu0
      %v1328 = vadd.f32 0.0, %v1327
      %1329 = vmatmul.f32.gmra.mxu0 %v913
      %v1330 = vpop.f32.mrf.mxu0
      %v1331 = vadd.f32 0.0, %v1330
      %1332 = vmatmul.f32.gmra.mxu0 %v914
      %v1333 = vpop.f32.mrf.mxu0
      %v1334 = vadd.f32 0.0, %v1333
      %1335 = vmatmul.f32.gmra.mxu0 %v915
      %v1336 = vpop.f32.mrf.mxu0
      %v1337 = vadd.f32 0.0, %v1336
      %1338 = vmatmul.f32.gmra.mxu0 %v916
      %v1339 = vpop.f32.mrf.mxu0
      %v1340 = vadd.f32 0.0, %v1339
      %1341 = vmatmul.f32.gmra.mxu0 %v917
      %v1342 = vpop.f32.mrf.mxu0
      %v1343 = vadd.f32 0.0, %v1342
      %1344 = vmatmul.f32.gmra.mxu0 %v918
      %v1345 = vpop.f32.mrf.mxu0
      %v1346 = vadd.f32 0.0, %v1345
      %1347 = vdwg.mxu0
      %v1348 = vld [vmem:[%s11] sm:$0xff]
      %v1349 = vld [vmem:[%s11 + $0x8] sm:$0xff]
      %v1350 = vld [vmem:[%s11 + $0x10] sm:$0xff]
      %v1351 = vld [vmem:[%s11 + $0x18] sm:$0xff]
      %v1352 = vld [vmem:[%s11 + $0x20] sm:$0xff]
      %v1353 = vld [vmem:[%s11 + $0x28] sm:$0xff]
      %v1354 = vld [vmem:[%s11 + $0x30] sm:$0xff]
      %v1355 = vld [vmem:[%s11 + $0x38] sm:$0xff]
      %v1356 = vld [vmem:[%s11 + $0x40] sm:$0xff]
      %v1357 = vld [vmem:[%s11 + $0x48] sm:$0xff]
      %v1358 = vld [vmem:[%s11 + $0x50] sm:$0xff]
      %v1359 = vld [vmem:[%s11 + $0x58] sm:$0xff]
      %v1360 = vld [vmem:[%s11 + $0x60] sm:$0xff]
      %v1361 = vld [vmem:[%s11 + $0x68] sm:$0xff]
      %v1362 = vld [vmem:[%s11 + $0x70] sm:$0xff]
      %v1363 = vld [vmem:[%s11 + $0x78] sm:$0xff]
      %v1364 = vld [vmem:[%s35] sm:$0x1]
      %v1366 = vperm.slane %v1364, 0
      %1368 = vmatpush.msra.mxu0 %v1363
      %1369 = vmatpush.msra.mxu0 %v1362
      %1370 = vmatpush.msra.mxu0 %v1361
      %1371 = vmatpush.msra.mxu0 %v1360
      %1372 = vmatpush.msra.mxu0 %v1359
      %1373 = vmatpush.msra.mxu0 %v1358
      %1374 = vmatpush.msra.mxu0 %v1357
      %1375 = vmatpush.msra.mxu0 %v1356
      %1376 = vmatpush.msra.mxu0 %v1355
      %1377 = vmatpush.msra.mxu0 %v1354
      %1378 = vmatpush.msra.mxu0 %v1353
      %1379 = vmatpush.msra.mxu0 %v1352
      %1380 = vmatpush.msra.mxu0 %v1351
      %1381 = vmatpush.msra.mxu0 %v1350
      %1382 = vmatpush.msra.mxu0 %v1349
      %1383 = vmatpush.msra.mxu0 %v1348
      %1384 = vmatmul.f32.gmra.mxu0 %v1301
      %v1385 = vpop.f32.mrf.mxu0
      %v1386 = vadd.f32 %v1366, %v1385
      %1387 = vmatmul.f32.gmra.mxu0 %v1304
      %v1388 = vpop.f32.mrf.mxu0
      %v1389 = vadd.f32 %v1366, %v1388
      %1390 = vmatmul.f32.gmra.mxu0 %v1307
      %v1391 = vpop.f32.mrf.mxu0
      %v1392 = vadd.f32 %v1366, %v1391
      %1393 = vmatmul.f32.gmra.mxu0 %v1310
      %v1394 = vpop.f32.mrf.mxu0
      %v1395 = vadd.f32 %v1366, %v1394
      %1396 = vmatmul.f32.gmra.mxu0 %v1313
      %v1397 = vpop.f32.mrf.mxu0
      %v1398 = vadd.f32 %v1366, %v1397
      %1399 = vmatmul.f32.gmra.mxu0 %v1316
      %v1400 = vpop.f32.mrf.mxu0
      %v1401 = vadd.f32 %v1366, %v1400
      %1402 = vmatmul.f32.gmra.mxu0 %v1319
      %v1403 = vpop.f32.mrf.mxu0
      %v1404 = vadd.f32 %v1366, %v1403
      %1405 = vmatmul.f32.gmra.mxu0 %v1322
      %v1406 = vpop.f32.mrf.mxu0
      %v1407 = vadd.f32 %v1366, %v1406
      %1408 = vmatmul.f32.gmra.mxu0 %v1325
      %v1409 = vpop.f32.mrf.mxu0
      %v1410 = vadd.f32 %v1366, %v1409
      %1411 = vmatmul.f32.gmra.mxu0 %v1328
      %v1412 = vpop.f32.mrf.mxu0
      %v1413 = vadd.f32 %v1366, %v1412
      %1414 = vmatmul.f32.gmra.mxu0 %v1331
      %v1415 = vpop.f32.mrf.mxu0
      %v1416 = vadd.f32 %v1366, %v1415
      %1417 = vmatmul.f32.gmra.mxu0 %v1334
      %v1418 = vpop.f32.mrf.mxu0
      %v1419 = vadd.f32 %v1366, %v1418
      %1420 = vmatmul.f32.gmra.mxu0 %v1337
      %v1421 = vpop.f32.mrf.mxu0
      %v1422 = vadd.f32 %v1366, %v1421
      %1423 = vmatmul.f32.gmra.mxu0 %v1340
      %v1424 = vpop.f32.mrf.mxu0
      %v1425 = vadd.f32 %v1366, %v1424
      %1426 = vmatmul.f32.gmra.mxu0 %v1343
      %v1427 = vpop.f32.mrf.mxu0
      %v1428 = vadd.f32 %v1366, %v1427
      %1429 = vmatmul.f32.gmra.mxu0 %v1346
      %v1430 = vpop.f32.mrf.mxu0
      %v1431 = vadd.f32 %v1366, %v1430
      %1432 = vdwg.mxu0
      %v1433 = vmax.f32 %v1386, 0.0
      %v1434 = vmax.f32 %v1389, 0.0
      %v1435 = vmax.f32 %v1392, 0.0
      %v1436 = vmax.f32 %v1395, 0.0
      %v1437 = vmax.f32 %v1398, 0.0
      %v1438 = vmax.f32 %v1401, 0.0
      %v1439 = vmax.f32 %v1404, 0.0
      %v1440 = vmax.f32 %v1407, 0.0
      %v1441 = vmax.f32 %v1410, 0.0
      %v1442 = vmax.f32 %v1413, 0.0
      %v1443 = vmax.f32 %v1416, 0.0
      %v1444 = vmax.f32 %v1419, 0.0
      %v1445 = vmax.f32 %v1422, 0.0
      %v1446 = vmax.f32 %v1425, 0.0
      %v1447 = vmax.f32 %v1428, 0.0
      %v1448 = vmax.f32 %v1431, 0.0
      %v1449 = vadd.f32 %v1433, %v1267
      %v1450 = vadd.f32 %v1434, %v1268
      %v1451 = vadd.f32 %v1435, %v1269
      %v1452 = vadd.f32 %v1436, %v1270
      %v1453 = vadd.f32 %v1437, %v1271
      %v1454 = vadd.f32 %v1438, %v1272
      %v1455 = vadd.f32 %v1439, %v1273
      %v1456 = vadd.f32 %v1440, %v1274
      %v1457 = vadd.f32 %v1441, %v1275
      %v1458 = vadd.f32 %v1442, %v1276
      %v1459 = vadd.f32 %v1443, %v1277
      %v1460 = vadd.f32 %v1444, %v1278
      %v1461 = vadd.f32 %v1445, %v1279
      %v1462 = vadd.f32 %v1446, %v1280
      %v1463 = vadd.f32 %v1447, %v1281
      %v1464 = vadd.f32 %v1448, %v1282
      %1465 = vmatpush.msra.mxu0 %v1464
      %1466 = vmatpush.msra.mxu0 %v1463
      %1467 = vmatpush.msra.mxu0 %v1462
      %1468 = vmatpush.msra.mxu0 %v1461
      %1469 = vmatpush.msra.mxu0 %v1460
      %1470 = vmatpush.msra.mxu0 %v1459
      %1471 = vmatpush.msra.mxu0 %v1458
      %1472 = vmatpush.msra.mxu0 %v1457
      %1473 = vmatpush.msra.mxu0 %v1456
      %1474 = vmatpush.msra.mxu0 %v1455
      %1475 = vmatpush.msra.mxu0 %v1454
      %1476 = vmatpush.msra.mxu0 %v1453
      %1477 = vmatpush.msra.mxu0 %v1452
      %1478 = vmatpush.msra.mxu0 %v1451
      %1479 = vmatpush.msra.mxu0 %v1450
      %1480 = vmatpush.msra.mxu0 %v1449
      %1481 = vmatmul.f32.gmra.mxu0 %v903
      %v1482 = vpop.f32.mrf.mxu0
      %v1483 = vadd.f32 0.0, %v1482
      %1484 = vmatmul.f32.gmra.mxu0 %v904
      %v1485 = vpop.f32.mrf.mxu0
      %v1486 = vadd.f32 0.0, %v1485
      %1487 = vmatmul.f32.gmra.mxu0 %v905
      %v1488 = vpop.f32.mrf.mxu0
      %v1489 = vadd.f32 0.0, %v1488
      %1490 = vmatmul.f32.gmra.mxu0 %v906
      %v1491 = vpop.f32.mrf.mxu0
      %v1492 = vadd.f32 0.0, %v1491
      %1493 = vmatmul.f32.gmra.mxu0 %v907
      %v1494 = vpop.f32.mrf.mxu0
      %v1495 = vadd.f32 0.0, %v1494
      %1496 = vmatmul.f32.gmra.mxu0 %v908
      %v1497 = vpop.f32.mrf.mxu0
      %v1498 = vadd.f32 0.0, %v1497
      %1499 = vmatmul.f32.gmra.mxu0 %v909
      %v1500 = vpop.f32.mrf.mxu0
      %v1501 = vadd.f32 0.0, %v1500
      %1502 = vmatmul.f32.gmra.mxu0 %v910
      %v1503 = vpop.f32.mrf.mxu0
      %v1504 = vadd.f32 0.0, %v1503
      %1505 = vmatmul.f32.gmra.mxu0 %v911
      %v1506 = vpop.f32.mrf.mxu0
      %v1507 = vadd.f32 0.0, %v1506
      %1508 = vmatmul.f32.gmra.mxu0 %v912
      %v1509 = vpop.f32.mrf.mxu0
      %v1510 = vadd.f32 0.0, %v1509
      %1511 = vmatmul.f32.gmra.mxu0 %v913
      %v1512 = vpop.f32.mrf.mxu0
      %v1513 = vadd.f32 0.0, %v1512
      %1514 = vmatmul.f32.gmra.mxu0 %v914
      %v1515 = vpop.f32.mrf.mxu0
      %v1516 = vadd.f32 0.0, %v1515
      %1517 = vmatmul.f32.gmra.mxu0 %v915
      %v1518 = vpop.f32.mrf.mxu0
      %v1519 = vadd.f32 0.0, %v1518
      %1520 = vmatmul.f32.gmra.mxu0 %v916
      %v1521 = vpop.f32.mrf.mxu0
      %v1522 = vadd.f32 0.0, %v1521
      %1523 = vmatmul.f32.gmra.mxu0 %v917
      %v1524 = vpop.f32.mrf.mxu0
      %v1525 = vadd.f32 0.0, %v1524
      %1526 = vmatmul.f32.gmra.mxu0 %v918
      %v1527 = vpop.f32.mrf.mxu0
      %v1528 = vadd.f32 0.0, %v1527
      %1529 = vdwg.mxu0
      %v1530 = vld [vmem:[%s13] sm:$0xff]
      %v1531 = vld [vmem:[%s13 + $0x8] sm:$0xff]
      %v1532 = vld [vmem:[%s13 + $0x10] sm:$0xff]
      %v1533 = vld [vmem:[%s13 + $0x18] sm:$0xff]
      %v1534 = vld [vmem:[%s13 + $0x20] sm:$0xff]
      %v1535 = vld [vmem:[%s13 + $0x28] sm:$0xff]
      %v1536 = vld [vmem:[%s13 + $0x30] sm:$0xff]
      %v1537 = vld [vmem:[%s13 + $0x38] sm:$0xff]
      %v1538 = vld [vmem:[%s13 + $0x40] sm:$0xff]
      %v1539 = vld [vmem:[%s13 + $0x48] sm:$0xff]
      %v1540 = vld [vmem:[%s13 + $0x50] sm:$0xff]
      %v1541 = vld [vmem:[%s13 + $0x58] sm:$0xff]
      %v1542 = vld [vmem:[%s13 + $0x60] sm:$0xff]
      %v1543 = vld [vmem:[%s13 + $0x68] sm:$0xff]
      %v1544 = vld [vmem:[%s13 + $0x70] sm:$0xff]
      %v1545 = vld [vmem:[%s13 + $0x78] sm:$0xff]
      %v1546 = vld [vmem:[%s37] sm:$0x1]
      %v1548 = vperm.slane %v1546, 0
      %1550 = vmatpush.msra.mxu0 %v1545
      %1551 = vmatpush.msra.mxu0 %v1544
      %1552 = vmatpush.msra.mxu0 %v1543
      %1553 = vmatpush.msra.mxu0 %v1542
      %1554 = vmatpush.msra.mxu0 %v1541
      %1555 = vmatpush.msra.mxu0 %v1540
      %1556 = vmatpush.msra.mxu0 %v1539
      %1557 = vmatpush.msra.mxu0 %v1538
      %1558 = vmatpush.msra.mxu0 %v1537
      %1559 = vmatpush.msra.mxu0 %v1536
      %1560 = vmatpush.msra.mxu0 %v1535
      %1561 = vmatpush.msra.mxu0 %v1534
      %1562 = vmatpush.msra.mxu0 %v1533
      %1563 = vmatpush.msra.mxu0 %v1532
      %1564 = vmatpush.msra.mxu0 %v1531
      %1565 = vmatpush.msra.mxu0 %v1530
      %1566 = vmatmul.f32.gmra.mxu0 %v1483
      %v1567 = vpop.f32.mrf.mxu0
      %v1568 = vadd.f32 %v1548, %v1567
      %1569 = vmatmul.f32.gmra.mxu0 %v1486
      %v1570 = vpop.f32.mrf.mxu0
      %v1571 = vadd.f32 %v1548, %v1570
      %1572 = vmatmul.f32.gmra.mxu0 %v1489
      %v1573 = vpop.f32.mrf.mxu0
      %v1574 = vadd.f32 %v1548, %v1573
      %1575 = vmatmul.f32.gmra.mxu0 %v1492
      %v1576 = vpop.f32.mrf.mxu0
      %v1577 = vadd.f32 %v1548, %v1576
      %1578 = vmatmul.f32.gmra.mxu0 %v1495
      %v1579 = vpop.f32.mrf.mxu0
      %v1580 = vadd.f32 %v1548, %v1579
      %1581 = vmatmul.f32.gmra.mxu0 %v1498
      %v1582 = vpop.f32.mrf.mxu0
      %v1583 = vadd.f32 %v1548, %v1582
      %1584 = vmatmul.f32.gmra.mxu0 %v1501
      %v1585 = vpop.f32.mrf.mxu0
      %v1586 = vadd.f32 %v1548, %v1585
      %1587 = vmatmul.f32.gmra.mxu0 %v1504
      %v1588 = vpop.f32.mrf.mxu0
      %v1589 = vadd.f32 %v1548, %v1588
      %1590 = vmatmul.f32.gmra.mxu0 %v1507
      %v1591 = vpop.f32.mrf.mxu0
      %v1592 = vadd.f32 %v1548, %v1591
      %1593 = vmatmul.f32.gmra.mxu0 %v1510
      %v1594 = vpop.f32.mrf.mxu0
      %v1595 = vadd.f32 %v1548, %v1594
      %1596 = vmatmul.f32.gmra.mxu0 %v1513
      %v1597 = vpop.f32.mrf.mxu0
      %v1598 = vadd.f32 %v1548, %v1597
      %1599 = vmatmul.f32.gmra.mxu0 %v1516
      %v1600 = vpop.f32.mrf.mxu0
      %v1601 = vadd.f32 %v1548, %v1600
      %1602 = vmatmul.f32.gmra.mxu0 %v1519
      %v1603 = vpop.f32.mrf.mxu0
      %v1604 = vadd.f32 %v1548, %v1603
      %1605 = vmatmul.f32.gmra.mxu0 %v1522
      %v1606 = vpop.f32.mrf.mxu0
      %v1607 = vadd.f32 %v1548, %v1606
      %1608 = vmatmul.f32.gmra.mxu0 %v1525
      %v1609 = vpop.f32.mrf.mxu0
      %v1610 = vadd.f32 %v1548, %v1609
      %1611 = vmatmul.f32.gmra.mxu0 %v1528
      %v1612 = vpop.f32.mrf.mxu0
      %v1613 = vadd.f32 %v1548, %v1612
      %1614 = vdwg.mxu0
      %v1615 = vmax.f32 %v1568, 0.0
      %v1616 = vmax.f32 %v1571, 0.0
      %v1617 = vmax.f32 %v1574, 0.0
      %v1618 = vmax.f32 %v1577, 0.0
      %v1619 = vmax.f32 %v1580, 0.0
      %v1620 = vmax.f32 %v1583, 0.0
      %v1621 = vmax.f32 %v1586, 0.0
      %v1622 = vmax.f32 %v1589, 0.0
      %v1623 = vmax.f32 %v1592, 0.0
      %v1624 = vmax.f32 %v1595, 0.0
      %v1625 = vmax.f32 %v1598, 0.0
      %v1626 = vmax.f32 %v1601, 0.0
      %v1627 = vmax.f32 %v1604, 0.0
      %v1628 = vmax.f32 %v1607, 0.0
      %v1629 = vmax.f32 %v1610, 0.0
      %v1630 = vmax.f32 %v1613, 0.0
      %v1631 = vadd.f32 %v1615, %v1449
      %v1632 = vadd.f32 %v1616, %v1450
      %v1633 = vadd.f32 %v1617, %v1451
      %v1634 = vadd.f32 %v1618, %v1452
      %v1635 = vadd.f32 %v1619, %v1453
      %v1636 = vadd.f32 %v1620, %v1454
      %v1637 = vadd.f32 %v1621, %v1455
      %v1638 = vadd.f32 %v1622, %v1456
      %v1639 = vadd.f32 %v1623, %v1457
      %v1640 = vadd.f32 %v1624, %v1458
      %v1641 = vadd.f32 %v1625, %v1459
      %v1642 = vadd.f32 %v1626, %v1460
      %v1643 = vadd.f32 %v1627, %v1461
      %v1644 = vadd.f32 %v1628, %v1462
      %v1645 = vadd.f32 %v1629, %v1463
      %v1646 = vadd.f32 %v1630, %v1464
      %1647 = vmatpush.msra.mxu0 %v1646
      %1648 = vmatpush.msra.mxu0 %v1645
      %1649 = vmatpush.msra.mxu0 %v1644
      %1650 = vmatpush.msra.mxu0 %v1643
      %1651 = vmatpush.msra.mxu0 %v1642
      %1652 = vmatpush.msra.mxu0 %v1641
      %1653 = vmatpush.msra.mxu0 %v1640
      %1654 = vmatpush.msra.mxu0 %v1639
      %1655 = vmatpush.msra.mxu0 %v1638
      %1656 = vmatpush.msra.mxu0 %v1637
      %1657 = vmatpush.msra.mxu0 %v1636
      %1658 = vmatpush.msra.mxu0 %v1635
      %1659 = vmatpush.msra.mxu0 %v1634
      %1660 = vmatpush.msra.mxu0 %v1633
      %1661 = vmatpush.msra.mxu0 %v1632
      %1662 = vmatpush.msra.mxu0 %v1631
      %1663 = vmatmul.f32.gmra.mxu0 %v903
      %v1664 = vpop.f32.mrf.mxu0
      %v1665 = vadd.f32 0.0, %v1664
      %1666 = vmatmul.f32.gmra.mxu0 %v904
      %v1667 = vpop.f32.mrf.mxu0
      %v1668 = vadd.f32 0.0, %v1667
      %1669 = vmatmul.f32.gmra.mxu0 %v905
      %v1670 = vpop.f32.mrf.mxu0
      %v1671 = vadd.f32 0.0, %v1670
      %1672 = vmatmul.f32.gmra.mxu0 %v906
      %v1673 = vpop.f32.mrf.mxu0
      %v1674 = vadd.f32 0.0, %v1673
      %1675 = vmatmul.f32.gmra.mxu0 %v907
      %v1676 = vpop.f32.mrf.mxu0
      %v1677 = vadd.f32 0.0, %v1676
      %1678 = vmatmul.f32.gmra.mxu0 %v908
      %v1679 = vpop.f32.mrf.mxu0
      %v1680 = vadd.f32 0.0, %v1679
      %1681 = vmatmul.f32.gmra.mxu0 %v909
      %v1682 = vpop.f32.mrf.mxu0
      %v1683 = vadd.f32 0.0, %v1682
      %1684 = vmatmul.f32.gmra.mxu0 %v910
      %v1685 = vpop.f32.mrf.mxu0
      %v1686 = vadd.f32 0.0, %v1685
      %1687 = vmatmul.f32.gmra.mxu0 %v911
      %v1688 = vpop.f32.mrf.mxu0
      %v1689 = vadd.f32 0.0, %v1688
      %1690 = vmatmul.f32.gmra.mxu0 %v912
      %v1691 = vpop.f32.mrf.mxu0
      %v1692 = vadd.f32 0.0, %v1691
      %1693 = vmatmul.f32.gmra.mxu0 %v913
      %v1694 = vpop.f32.mrf.mxu0
      %v1695 = vadd.f32 0.0, %v1694
      %1696 = vmatmul.f32.gmra.mxu0 %v914
      %v1697 = vpop.f32.mrf.mxu0
      %v1698 = vadd.f32 0.0, %v1697
      %1699 = vmatmul.f32.gmra.mxu0 %v915
      %v1700 = vpop.f32.mrf.mxu0
      %v1701 = vadd.f32 0.0, %v1700
      %1702 = vmatmul.f32.gmra.mxu0 %v916
      %v1703 = vpop.f32.mrf.mxu0
      %v1704 = vadd.f32 0.0, %v1703
      %1705 = vmatmul.f32.gmra.mxu0 %v917
      %v1706 = vpop.f32.mrf.mxu0
      %v1707 = vadd.f32 0.0, %v1706
      %1708 = vmatmul.f32.gmra.mxu0 %v918
      %v1709 = vpop.f32.mrf.mxu0
      %v1710 = vadd.f32 0.0, %v1709
      %1711 = vdwg.mxu0
      %v1712 = vld [vmem:[%s15] sm:$0xff]
      %v1713 = vld [vmem:[%s15 + $0x8] sm:$0xff]
      %v1714 = vld [vmem:[%s15 + $0x10] sm:$0xff]
      %v1715 = vld [vmem:[%s15 + $0x18] sm:$0xff]
      %v1716 = vld [vmem:[%s15 + $0x20] sm:$0xff]
      %v1717 = vld [vmem:[%s15 + $0x28] sm:$0xff]
      %v1718 = vld [vmem:[%s15 + $0x30] sm:$0xff]
      %v1719 = vld [vmem:[%s15 + $0x38] sm:$0xff]
      %v1720 = vld [vmem:[%s15 + $0x40] sm:$0xff]
      %v1721 = vld [vmem:[%s15 + $0x48] sm:$0xff]
      %v1722 = vld [vmem:[%s15 + $0x50] sm:$0xff]
      %v1723 = vld [vmem:[%s15 + $0x58] sm:$0xff]
      %v1724 = vld [vmem:[%s15 + $0x60] sm:$0xff]
      %v1725 = vld [vmem:[%s15 + $0x68] sm:$0xff]
      %v1726 = vld [vmem:[%s15 + $0x70] sm:$0xff]
      %v1727 = vld [vmem:[%s15 + $0x78] sm:$0xff]
      %v1728 = vld [vmem:[%s15 + $0x80] sm:$0xff]
      %v1729 = vld [vmem:[%s15 + $0x88] sm:$0xff]
      %v1730 = vld [vmem:[%s15 + $0x90] sm:$0xff]
      %v1731 = vld [vmem:[%s15 + $0x98] sm:$0xff]
      %v1732 = vld [vmem:[%s15 + $0xa0] sm:$0xff]
      %v1733 = vld [vmem:[%s15 + $0xa8] sm:$0xff]
      %v1734 = vld [vmem:[%s15 + $0xb0] sm:$0xff]
      %v1735 = vld [vmem:[%s15 + $0xb8] sm:$0xff]
      %v1736 = vld [vmem:[%s15 + $0xc0] sm:$0xff]
      %v1737 = vld [vmem:[%s15 + $0xc8] sm:$0xff]
      %v1738 = vld [vmem:[%s15 + $0xd0] sm:$0xff]
      %v1739 = vld [vmem:[%s15 + $0xd8] sm:$0xff]
      %v1740 = vld [vmem:[%s15 + $0xe0] sm:$0xff]
      %v1741 = vld [vmem:[%s15 + $0xe8] sm:$0xff]
      %v1742 = vld [vmem:[%s15 + $0xf0] sm:$0xff]
      %v1743 = vld [vmem:[%s15 + $0xf8] sm:$0xff]
      %v1744 = vld [vmem:[%s39] sm:$0x3]
      %v1746 = vperm.slane %v1744, 0
      %v1747 = vperm.slane %v1744, 1
      %1750 = vmatpush.msra.mxu0 %v1742
      %1751 = vmatpush.msra.mxu0 %v1740
      %1752 = vmatpush.msra.mxu0 %v1738
      %1753 = vmatpush.msra.mxu0 %v1736
      %1754 = vmatpush.msra.mxu0 %v1734
      %1755 = vmatpush.msra.mxu0 %v1732
      %1756 = vmatpush.msra.mxu0 %v1730
      %1757 = vmatpush.msra.mxu0 %v1728
      %1758 = vmatpush.msra.mxu0 %v1726
      %1759 = vmatpush.msra.mxu0 %v1724
      %1760 = vmatpush.msra.mxu0 %v1722
      %1761 = vmatpush.msra.mxu0 %v1720
      %1762 = vmatpush.msra.mxu0 %v1718
      %1763 = vmatpush.msra.mxu0 %v1716
      %1764 = vmatpush.msra.mxu0 %v1714
      %1765 = vmatpush.msra.mxu0 %v1712
      %1766 = vmatmul.f32.gmra.mxu0 %v1665
      %v1767 = vpop.f32.mrf.mxu0
      %v1768 = vadd.f32 %v1746, %v1767
      %1769 = vmatmul.f32.gmra.mxu0 %v1668
      %v1770 = vpop.f32.mrf.mxu0
      %v1771 = vadd.f32 %v1746, %v1770
      %1772 = vmatmul.f32.gmra.mxu0 %v1671
      %v1773 = vpop.f32.mrf.mxu0
      %v1774 = vadd.f32 %v1746, %v1773
      %1775 = vmatmul.f32.gmra.mxu0 %v1674
      %v1776 = vpop.f32.mrf.mxu0
      %v1777 = vadd.f32 %v1746, %v1776
      %1778 = vmatmul.f32.gmra.mxu0 %v1677
      %v1779 = vpop.f32.mrf.mxu0
      %v1780 = vadd.f32 %v1746, %v1779
      %1781 = vmatmul.f32.gmra.mxu0 %v1680
      %v1782 = vpop.f32.mrf.mxu0
      %v1783 = vadd.f32 %v1746, %v1782
      %1784 = vmatmul.f32.gmra.mxu0 %v1683
      %v1785 = vpop.f32.mrf.mxu0
      %v1786 = vadd.f32 %v1746, %v1785
      %1787 = vmatmul.f32.gmra.mxu0 %v1686
      %v1788 = vpop.f32.mrf.mxu0
      %v1789 = vadd.f32 %v1746, %v1788
      %1790 = vmatmul.f32.gmra.mxu0 %v1689
      %v1791 = vpop.f32.mrf.mxu0
      %v1792 = vadd.f32 %v1746, %v1791
      %1793 = vmatmul.f32.gmra.mxu0 %v1692
      %v1794 = vpop.f32.mrf.mxu0
      %v1795 = vadd.f32 %v1746, %v1794
      %1796 = vmatmul.f32.gmra.mxu0 %v1695
      %v1797 = vpop.f32.mrf.mxu0
      %v1798 = vadd.f32 %v1746, %v1797
      %1799 = vmatmul.f32.gmra.mxu0 %v1698
      %v1800 = vpop.f32.mrf.mxu0
      %v1801 = vadd.f32 %v1746, %v1800
      %1802 = vmatmul.f32.gmra.mxu0 %v1701
      %v1803 = vpop.f32.mrf.mxu0
      %v1804 = vadd.f32 %v1746, %v1803
      %1805 = vmatmul.f32.gmra.mxu0 %v1704
      %v1806 = vpop.f32.mrf.mxu0
      %v1807 = vadd.f32 %v1746, %v1806
      %1808 = vmatmul.f32.gmra.mxu0 %v1707
      %v1809 = vpop.f32.mrf.mxu0
      %v1810 = vadd.f32 %v1746, %v1809
      %1811 = vmatmul.f32.gmra.mxu0 %v1710
      %v1812 = vpop.f32.mrf.mxu0
      %v1813 = vadd.f32 %v1746, %v1812
      %1814 = vdwg.mxu0
      %1815 = vmatpush.msra.mxu0 %v1743
      %1816 = vmatpush.msra.mxu0 %v1741
      %1817 = vmatpush.msra.mxu0 %v1739
      %1818 = vmatpush.msra.mxu0 %v1737
      %1819 = vmatpush.msra.mxu0 %v1735
      %1820 = vmatpush.msra.mxu0 %v1733
      %1821 = vmatpush.msra.mxu0 %v1731
      %1822 = vmatpush.msra.mxu0 %v1729
      %1823 = vmatpush.msra.mxu0 %v1727
      %1824 = vmatpush.msra.mxu0 %v1725
      %1825 = vmatpush.msra.mxu0 %v1723
      %1826 = vmatpush.msra.mxu0 %v1721
      %1827 = vmatpush.msra.mxu0 %v1719
      %1828 = vmatpush.msra.mxu0 %v1717
      %1829 = vmatpush.msra.mxu0 %v1715
      %1830 = vmatpush.msra.mxu0 %v1713
      %1831 = vmatmul.f32.gmra.mxu0 %v1665
      %v1832 = vpop.f32.mrf.mxu0
      %v1833 = vadd.f32 %v1747, %v1832
      %1834 = vmatmul.f32.gmra.mxu0 %v1668
      %v1835 = vpop.f32.mrf.mxu0
      %v1836 = vadd.f32 %v1747, %v1835
      %1837 = vmatmul.f32.gmra.mxu0 %v1671
      %v1838 = vpop.f32.mrf.mxu0
      %v1839 = vadd.f32 %v1747, %v1838
      %1840 = vmatmul.f32.gmra.mxu0 %v1674
      %v1841 = vpop.f32.mrf.mxu0
      %v1842 = vadd.f32 %v1747, %v1841
      %1843 = vmatmul.f32.gmra.mxu0 %v1677
      %v1844 = vpop.f32.mrf.mxu0
      %v1845 = vadd.f32 %v1747, %v1844
      %1846 = vmatmul.f32.gmra.mxu0 %v1680
      %v1847 = vpop.f32.mrf.mxu0
      %v1848 = vadd.f32 %v1747, %v1847
      %1849 = vmatmul.f32.gmra.mxu0 %v1683
      %v1850 = vpop.f32.mrf.mxu0
      %v1851 = vadd.f32 %v1747, %v1850
      %1852 = vmatmul.f32.gmra.mxu0 %v1686
      %v1853 = vpop.f32.mrf.mxu0
      %v1854 = vadd.f32 %v1747, %v1853
      %1855 = vmatmul.f32.gmra.mxu0 %v1689
      %v1856 = vpop.f32.mrf.mxu0
      %v1857 = vadd.f32 %v1747, %v1856
      %1858 = vmatmul.f32.gmra.mxu0 %v1692
      %v1859 = vpop.f32.mrf.mxu0
      %v1860 = vadd.f32 %v1747, %v1859
      %1861 = vmatmul.f32.gmra.mxu0 %v1695
      %v1862 = vpop.f32.mrf.mxu0
      %v1863 = vadd.f32 %v1747, %v1862
      %1864 = vmatmul.f32.gmra.mxu0 %v1698
      %v1865 = vpop.f32.mrf.mxu0
      %v1866 = vadd.f32 %v1747, %v1865
      %1867 = vmatmul.f32.gmra.mxu0 %v1701
      %v1868 = vpop.f32.mrf.mxu0
      %v1869 = vadd.f32 %v1747, %v1868
      %1870 = vmatmul.f32.gmra.mxu0 %v1704
      %v1871 = vpop.f32.mrf.mxu0
      %v1872 = vadd.f32 %v1747, %v1871
      %1873 = vmatmul.f32.gmra.mxu0 %v1707
      %v1874 = vpop.f32.mrf.mxu0
      %v1875 = vadd.f32 %v1747, %v1874
      %1876 = vmatmul.f32.gmra.mxu0 %v1710
      %v1877 = vpop.f32.mrf.mxu0
      %v1878 = vadd.f32 %v1747, %v1877
      %1879 = vdwg.mxu0
      %v1880 = vmax.f32 %v1768, 0.0
      %v1881 = vmax.f32 %v1833, 0.0
      %v1882 = vmax.f32 %v1771, 0.0
      %v1883 = vmax.f32 %v1836, 0.0
      %v1884 = vmax.f32 %v1774, 0.0
      %v1885 = vmax.f32 %v1839, 0.0
      %v1886 = vmax.f32 %v1777, 0.0
      %v1887 = vmax.f32 %v1842, 0.0
      %v1888 = vmax.f32 %v1780, 0.0
      %v1889 = vmax.f32 %v1845, 0.0
      %v1890 = vmax.f32 %v1783, 0.0
      %v1891 = vmax.f32 %v1848, 0.0
      %v1892 = vmax.f32 %v1786, 0.0
      %v1893 = vmax.f32 %v1851, 0.0
      %v1894 = vmax.f32 %v1789, 0.0
      %v1895 = vmax.f32 %v1854, 0.0
      %v1896 = vmax.f32 %v1792, 0.0
      %v1897 = vmax.f32 %v1857, 0.0
      %v1898 = vmax.f32 %v1795, 0.0
      %v1899 = vmax.f32 %v1860, 0.0
      %v1900 = vmax.f32 %v1798, 0.0
      %v1901 = vmax.f32 %v1863, 0.0
      %v1902 = vmax.f32 %v1801, 0.0
      %v1903 = vmax.f32 %v1866, 0.0
      %v1904 = vmax.f32 %v1804, 0.0
      %v1905 = vmax.f32 %v1869, 0.0
      %v1906 = vmax.f32 %v1807, 0.0
      %v1907 = vmax.f32 %v1872, 0.0
      %v1908 = vmax.f32 %v1810, 0.0
      %v1909 = vmax.f32 %v1875, 0.0
      %v1910 = vmax.f32 %v1813, 0.0
      %v1911 = vmax.f32 %v1878, 0.0
      %1912 = vmatpush.msra.mxu0 %v1910
      %1913 = vmatpush.msra.mxu0 %v1908
      %1914 = vmatpush.msra.mxu0 %v1906
      %1915 = vmatpush.msra.mxu0 %v1904
      %1916 = vmatpush.msra.mxu0 %v1902
      %1917 = vmatpush.msra.mxu0 %v1900
      %1918 = vmatpush.msra.mxu0 %v1898
      %1919 = vmatpush.msra.mxu0 %v1896
      %1920 = vmatpush.msra.mxu0 %v1894
      %1921 = vmatpush.msra.mxu0 %v1892
      %1922 = vmatpush.msra.mxu0 %v1890
      %1923 = vmatpush.msra.mxu0 %v1888
      %1924 = vmatpush.msra.mxu0 %v1886
      %1925 = vmatpush.msra.mxu0 %v1884
      %1926 = vmatpush.msra.mxu0 %v1882
      %1927 = vmatpush.msra.mxu0 %v1880
      %1928 = vmatmul.f32.gmra.mxu0 %v903
      %v1929 = vpop.f32.mrf.mxu0
      %v1930 = vadd.f32 0.0, %v1929
      %1931 = vmatmul.f32.gmra.mxu0 %v904
      %v1932 = vpop.f32.mrf.mxu0
      %v1933 = vadd.f32 0.0, %v1932
      %1934 = vmatmul.f32.gmra.mxu0 %v905
      %v1935 = vpop.f32.mrf.mxu0
      %v1936 = vadd.f32 0.0, %v1935
      %1937 = vmatmul.f32.gmra.mxu0 %v906
      %v1938 = vpop.f32.mrf.mxu0
      %v1939 = vadd.f32 0.0, %v1938
      %1940 = vmatmul.f32.gmra.mxu0 %v907
      %v1941 = vpop.f32.mrf.mxu0
      %v1942 = vadd.f32 0.0, %v1941
      %1943 = vmatmul.f32.gmra.mxu0 %v908
      %v1944 = vpop.f32.mrf.mxu0
      %v1945 = vadd.f32 0.0, %v1944
      %1946 = vmatmul.f32.gmra.mxu0 %v909
      %v1947 = vpop.f32.mrf.mxu0
      %v1948 = vadd.f32 0.0, %v1947
      %1949 = vmatmul.f32.gmra.mxu0 %v910
      %v1950 = vpop.f32.mrf.mxu0
      %v1951 = vadd.f32 0.0, %v1950
      %1952 = vmatmul.f32.gmra.mxu0 %v911
      %v1953 = vpop.f32.mrf.mxu0
      %v1954 = vadd.f32 0.0, %v1953
      %1955 = vmatmul.f32.gmra.mxu0 %v912
      %v1956 = vpop.f32.mrf.mxu0
      %v1957 = vadd.f32 0.0, %v1956
      %1958 = vmatmul.f32.gmra.mxu0 %v913
      %v1959 = vpop.f32.mrf.mxu0
      %v1960 = vadd.f32 0.0, %v1959
      %1961 = vmatmul.f32.gmra.mxu0 %v914
      %v1962 = vpop.f32.mrf.mxu0
      %v1963 = vadd.f32 0.0, %v1962
      %1964 = vmatmul.f32.gmra.mxu0 %v915
      %v1965 = vpop.f32.mrf.mxu0
      %v1966 = vadd.f32 0.0, %v1965
      %1967 = vmatmul.f32.gmra.mxu0 %v916
      %v1968 = vpop.f32.mrf.mxu0
      %v1969 = vadd.f32 0.0, %v1968
      %1970 = vmatmul.f32.gmra.mxu0 %v917
      %v1971 = vpop.f32.mrf.mxu0
      %v1972 = vadd.f32 0.0, %v1971
      %1973 = vmatmul.f32.gmra.mxu0 %v918
      %v1974 = vpop.f32.mrf.mxu0
      %v1975 = vadd.f32 0.0, %v1974
      %1976 = vdwg.mxu0
      %1977 = vmatpush.msra.mxu0 %v1911
      %1978 = vmatpush.msra.mxu0 %v1909
      %1979 = vmatpush.msra.mxu0 %v1907
      %1980 = vmatpush.msra.mxu0 %v1905
      %1981 = vmatpush.msra.mxu0 %v1903
      %1982 = vmatpush.msra.mxu0 %v1901
      %1983 = vmatpush.msra.mxu0 %v1899
      %1984 = vmatpush.msra.mxu0 %v1897
      %1985 = vmatpush.msra.mxu0 %v1895
      %1986 = vmatpush.msra.mxu0 %v1893
      %1987 = vmatpush.msra.mxu0 %v1891
      %1988 = vmatpush.msra.mxu0 %v1889
      %1989 = vmatpush.msra.mxu0 %v1887
      %1990 = vmatpush.msra.mxu0 %v1885
      %1991 = vmatpush.msra.mxu0 %v1883
      %1992 = vmatpush.msra.mxu0 %v1881
      %1993 = vmatmul.f32.gmra.mxu0 %v903
      %v1994 = vpop.f32.mrf.mxu0
      %v1995 = vadd.f32 0.0, %v1994
      %1996 = vmatmul.f32.gmra.mxu0 %v904
      %v1997 = vpop.f32.mrf.mxu0
      %v1998 = vadd.f32 0.0, %v1997
      %1999 = vmatmul.f32.gmra.mxu0 %v905
      %v2000 = vpop.f32.mrf.mxu0
      %v2001 = vadd.f32 0.0, %v2000
      %2002 = vmatmul.f32.gmra.mxu0 %v906
      %v2003 = vpop.f32.mrf.mxu0
      %v2004 = vadd.f32 0.0, %v2003
      %2005 = vmatmul.f32.gmra.mxu0 %v907
      %v2006 = vpop.f32.mrf.mxu0
      %v2007 = vadd.f32 0.0, %v2006
      %2008 = vmatmul.f32.gmra.mxu0 %v908
      %v2009 = vpop.f32.mrf.mxu0
      %v2010 = vadd.f32 0.0, %v2009
      %2011 = vmatmul.f32.gmra.mxu0 %v909
      %v2012 = vpop.f32.mrf.mxu0
      %v2013 = vadd.f32 0.0, %v2012
      %2014 = vmatmul.f32.gmra.mxu0 %v910
      %v2015 = vpop.f32.mrf.mxu0
      %v2016 = vadd.f32 0.0, %v2015
      %2017 = vmatmul.f32.gmra.mxu0 %v911
      %v2018 = vpop.f32.mrf.mxu0
      %v2019 = vadd.f32 0.0, %v2018
      %2020 = vmatmul.f32.gmra.mxu0 %v912
      %v2021 = vpop.f32.mrf.mxu0
      %v2022 = vadd.f32 0.0, %v2021
      %2023 = vmatmul.f32.gmra.mxu0 %v913
      %v2024 = vpop.f32.mrf.mxu0
      %v2025 = vadd.f32 0.0, %v2024
      %2026 = vmatmul.f32.gmra.mxu0 %v914
      %v2027 = vpop.f32.mrf.mxu0
      %v2028 = vadd.f32 0.0, %v2027
      %2029 = vmatmul.f32.gmra.mxu0 %v915
      %v2030 = vpop.f32.mrf.mxu0
      %v2031 = vadd.f32 0.0, %v2030
      %2032 = vmatmul.f32.gmra.mxu0 %v916
      %v2033 = vpop.f32.mrf.mxu0
      %v2034 = vadd.f32 0.0, %v2033
      %2035 = vmatmul.f32.gmra.mxu0 %v917
      %v2036 = vpop.f32.mrf.mxu0
      %v2037 = vadd.f32 0.0, %v2036
      %2038 = vmatmul.f32.gmra.mxu0 %v918
      %v2039 = vpop.f32.mrf.mxu0
      %v2040 = vadd.f32 0.0, %v2039
      %2041 = vdwg.mxu0
      %v2042 = vld [vmem:[%s17] sm:$0xff]
      %v2043 = vld [vmem:[%s17 + $0x8] sm:$0xff]
      %v2044 = vld [vmem:[%s17 + $0x10] sm:$0xff]
      %v2045 = vld [vmem:[%s17 + $0x18] sm:$0xff]
      %v2046 = vld [vmem:[%s17 + $0x20] sm:$0xff]
      %v2047 = vld [vmem:[%s17 + $0x28] sm:$0xff]
      %v2048 = vld [vmem:[%s17 + $0x30] sm:$0xff]
      %v2049 = vld [vmem:[%s17 + $0x38] sm:$0xff]
      %v2050 = vld [vmem:[%s17 + $0x40] sm:$0xff]
      %v2051 = vld [vmem:[%s17 + $0x48] sm:$0xff]
      %v2052 = vld [vmem:[%s17 + $0x50] sm:$0xff]
      %v2053 = vld [vmem:[%s17 + $0x58] sm:$0xff]
      %v2054 = vld [vmem:[%s17 + $0x60] sm:$0xff]
      %v2055 = vld [vmem:[%s17 + $0x68] sm:$0xff]
      %v2056 = vld [vmem:[%s17 + $0x70] sm:$0xff]
      %v2057 = vld [vmem:[%s17 + $0x78] sm:$0xff]
      %v2058 = vld [vmem:[%s17 + $0x80] sm:$0xff]
      %v2059 = vld [vmem:[%s17 + $0x88] sm:$0xff]
      %v2060 = vld [vmem:[%s17 + $0x90] sm:$0xff]
      %v2061 = vld [vmem:[%s17 + $0x98] sm:$0xff]
      %v2062 = vld [vmem:[%s17 + $0xa0] sm:$0xff]
      %v2063 = vld [vmem:[%s17 + $0xa8] sm:$0xff]
      %v2064 = vld [vmem:[%s17 + $0xb0] sm:$0xff]
      %v2065 = vld [vmem:[%s17 + $0xb8] sm:$0xff]
      %v2066 = vld [vmem:[%s17 + $0xc0] sm:$0xff]
      %v2067 = vld [vmem:[%s17 + $0xc8] sm:$0xff]
      %v2068 = vld [vmem:[%s17 + $0xd0] sm:$0xff]
      %v2069 = vld [vmem:[%s17 + $0xd8] sm:$0xff]
      %v2070 = vld [vmem:[%s17 + $0xe0] sm:$0xff]
      %v2071 = vld [vmem:[%s17 + $0xe8] sm:$0xff]
      %v2072 = vld [vmem:[%s17 + $0xf0] sm:$0xff]
      %v2073 = vld [vmem:[%s17 + $0xf8] sm:$0xff]
      %v2074 = vld [vmem:[%s17 + $0x100] sm:$0xff]
      %v2075 = vld [vmem:[%s17 + $0x108] sm:$0xff]
      %v2076 = vld [vmem:[%s17 + $0x110] sm:$0xff]
      %v2077 = vld [vmem:[%s17 + $0x118] sm:$0xff]
      %v2078 = vld [vmem:[%s17 + $0x120] sm:$0xff]
      %v2079 = vld [vmem:[%s17 + $0x128] sm:$0xff]
      %v2080 = vld [vmem:[%s17 + $0x130] sm:$0xff]
      %v2081 = vld [vmem:[%s17 + $0x138] sm:$0xff]
      %v2082 = vld [vmem:[%s17 + $0x140] sm:$0xff]
      %v2083 = vld [vmem:[%s17 + $0x148] sm:$0xff]
      %v2084 = vld [vmem:[%s17 + $0x150] sm:$0xff]
      %v2085 = vld [vmem:[%s17 + $0x158] sm:$0xff]
      %v2086 = vld [vmem:[%s17 + $0x160] sm:$0xff]
      %v2087 = vld [vmem:[%s17 + $0x168] sm:$0xff]
      %v2088 = vld [vmem:[%s17 + $0x170] sm:$0xff]
      %v2089 = vld [vmem:[%s17 + $0x178] sm:$0xff]
      %v2090 = vld [vmem:[%s17 + $0x180] sm:$0xff]
      %v2091 = vld [vmem:[%s17 + $0x188] sm:$0xff]
      %v2092 = vld [vmem:[%s17 + $0x190] sm:$0xff]
      %v2093 = vld [vmem:[%s17 + $0x198] sm:$0xff]
      %v2094 = vld [vmem:[%s17 + $0x1a0] sm:$0xff]
      %v2095 = vld [vmem:[%s17 + $0x1a8] sm:$0xff]
      %v2096 = vld [vmem:[%s17 + $0x1b0] sm:$0xff]
      %v2097 = vld [vmem:[%s17 + $0x1b8] sm:$0xff]
      %v2098 = vld [vmem:[%s17 + $0x1c0] sm:$0xff]
      %v2099 = vld [vmem:[%s17 + $0x1c8] sm:$0xff]
      %v2100 = vld [vmem:[%s17 + $0x1d0] sm:$0xff]
      %v2101 = vld [vmem:[%s17 + $0x1d8] sm:$0xff]
      %v2102 = vld [vmem:[%s17 + $0x1e0] sm:$0xff]
      %v2103 = vld [vmem:[%s17 + $0x1e8] sm:$0xff]
      %v2104 = vld [vmem:[%s17 + $0x1f0] sm:$0xff]
      %v2105 = vld [vmem:[%s17 + $0x1f8] sm:$0xff]
      %v2106 = vld [vmem:[%s41] sm:$0x3]
      %v2108 = vperm.slane %v2106, 0
      %v2109 = vperm.slane %v2106, 1
      %2112 = vmatpush.msra.mxu0 %v2072
      %2113 = vmatpush.msra.mxu0 %v2070
      %2114 = vmatpush.msra.mxu0 %v2068
      %2115 = vmatpush.msra.mxu0 %v2066
      %2116 = vmatpush.msra.mxu0 %v2064
      %2117 = vmatpush.msra.mxu0 %v2062
      %2118 = vmatpush.msra.mxu0 %v2060
      %2119 = vmatpush.msra.mxu0 %v2058
      %2120 = vmatpush.msra.mxu0 %v2056
      %2121 = vmatpush.msra.mxu0 %v2054
      %2122 = vmatpush.msra.mxu0 %v2052
      %2123 = vmatpush.msra.mxu0 %v2050
      %2124 = vmatpush.msra.mxu0 %v2048
      %2125 = vmatpush.msra.mxu0 %v2046
      %2126 = vmatpush.msra.mxu0 %v2044
      %2127 = vmatpush.msra.mxu0 %v2042
      %2128 = vmatmul.f32.gmra.mxu0 %v1930
      %v2129 = vpop.f32.mrf.mxu0
      %v2130 = vadd.f32 %v2108, %v2129
      %2131 = vmatmul.f32.gmra.mxu0 %v1933
      %v2132 = vpop.f32.mrf.mxu0
      %v2133 = vadd.f32 %v2108, %v2132
      %2134 = vmatmul.f32.gmra.mxu0 %v1936
      %v2135 = vpop.f32.mrf.mxu0
      %v2136 = vadd.f32 %v2108, %v2135
      %2137 = vmatmul.f32.gmra.mxu0 %v1939
      %v2138 = vpop.f32.mrf.mxu0
      %v2139 = vadd.f32 %v2108, %v2138
      %2140 = vmatmul.f32.gmra.mxu0 %v1942
      %v2141 = vpop.f32.mrf.mxu0
      %v2142 = vadd.f32 %v2108, %v2141
      %2143 = vmatmul.f32.gmra.mxu0 %v1945
      %v2144 = vpop.f32.mrf.mxu0
      %v2145 = vadd.f32 %v2108, %v2144
      %2146 = vmatmul.f32.gmra.mxu0 %v1948
      %v2147 = vpop.f32.mrf.mxu0
      %v2148 = vadd.f32 %v2108, %v2147
      %2149 = vmatmul.f32.gmra.mxu0 %v1951
      %v2150 = vpop.f32.mrf.mxu0
      %v2151 = vadd.f32 %v2108, %v2150
      %2152 = vmatmul.f32.gmra.mxu0 %v1954
      %v2153 = vpop.f32.mrf.mxu0
      %v2154 = vadd.f32 %v2108, %v2153
      %2155 = vmatmul.f32.gmra.mxu0 %v1957
      %v2156 = vpop.f32.mrf.mxu0
      %v2157 = vadd.f32 %v2108, %v2156
      %2158 = vmatmul.f32.gmra.mxu0 %v1960
      %v2159 = vpop.f32.mrf.mxu0
      %v2160 = vadd.f32 %v2108, %v2159
      %2161 = vmatmul.f32.gmra.mxu0 %v1963
      %v2162 = vpop.f32.mrf.mxu0
      %v2163 = vadd.f32 %v2108, %v2162
      %2164 = vmatmul.f32.gmra.mxu0 %v1966
      %v2165 = vpop.f32.mrf.mxu0
      %v2166 = vadd.f32 %v2108, %v2165
      %2167 = vmatmul.f32.gmra.mxu0 %v1969
      %v2168 = vpop.f32.mrf.mxu0
      %v2169 = vadd.f32 %v2108, %v2168
      %2170 = vmatmul.f32.gmra.mxu0 %v1972
      %v2171 = vpop.f32.mrf.mxu0
      %v2172 = vadd.f32 %v2108, %v2171
      %2173 = vmatmul.f32.gmra.mxu0 %v1975
      %v2174 = vpop.f32.mrf.mxu0
      %v2175 = vadd.f32 %v2108, %v2174
      %2176 = vdwg.mxu0
      %2177 = vmatpush.msra.mxu0 %v2104
      %2178 = vmatpush.msra.mxu0 %v2102
      %2179 = vmatpush.msra.mxu0 %v2100
      %2180 = vmatpush.msra.mxu0 %v2098
      %2181 = vmatpush.msra.mxu0 %v2096
      %2182 = vmatpush.msra.mxu0 %v2094
      %2183 = vmatpush.msra.mxu0 %v2092
      %2184 = vmatpush.msra.mxu0 %v2090
      %2185 = vmatpush.msra.mxu0 %v2088
      %2186 = vmatpush.msra.mxu0 %v2086
      %2187 = vmatpush.msra.mxu0 %v2084
      %2188 = vmatpush.msra.mxu0 %v2082
      %2189 = vmatpush.msra.mxu0 %v2080
      %2190 = vmatpush.msra.mxu0 %v2078
      %2191 = vmatpush.msra.mxu0 %v2076
      %2192 = vmatpush.msra.mxu0 %v2074
      %2193 = vmatmul.f32.gmra.mxu0 %v1995
      %v2194 = vpop.f32.mrf.mxu0
      %v2195 = vadd.f32 %v2130, %v2194
      %2196 = vmatmul.f32.gmra.mxu0 %v1998
      %v2197 = vpop.f32.mrf.mxu0
      %v2198 = vadd.f32 %v2133, %v2197
      %2199 = vmatmul.f32.gmra.mxu0 %v2001
      %v2200 = vpop.f32.mrf.mxu0
      %v2201 = vadd.f32 %v2136, %v2200
      %2202 = vmatmul.f32.gmra.mxu0 %v2004
      %v2203 = vpop.f32.mrf.mxu0
      %v2204 = vadd.f32 %v2139, %v2203
      %2205 = vmatmul.f32.gmra.mxu0 %v2007
      %v2206 = vpop.f32.mrf.mxu0
      %v2207 = vadd.f32 %v2142, %v2206
      %2208 = vmatmul.f32.gmra.mxu0 %v2010
      %v2209 = vpop.f32.mrf.mxu0
      %v2210 = vadd.f32 %v2145, %v2209
      %2211 = vmatmul.f32.gmra.mxu0 %v2013
      %v2212 = vpop.f32.mrf.mxu0
      %v2213 = vadd.f32 %v2148, %v2212
      %2214 = vmatmul.f32.gmra.mxu0 %v2016
      %v2215 = vpop.f32.mrf.mxu0
      %v2216 = vadd.f32 %v2151, %v2215
      %2217 = vmatmul.f32.gmra.mxu0 %v2019
      %v2218 = vpop.f32.mrf.mxu0
      %v2219 = vadd.f32 %v2154, %v2218
      %2220 = vmatmul.f32.gmra.mxu0 %v2022
      %v2221 = vpop.f32.mrf.mxu0
      %v2222 = vadd.f32 %v2157, %v2221
      %2223 = vmatmul.f32.gmra.mxu0 %v2025
      %v2224 = vpop.f32.mrf.mxu0
      %v2225 = vadd.f32 %v2160, %v2224
      %2226 = vmatmul.f32.gmra.mxu0 %v2028
      %v2227 = vpop.f32.mrf.mxu0
      %v2228 = vadd.f32 %v2163, %v2227
      %2229 = vmatmul.f32.gmra.mxu0 %v2031
      %v2230 = vpop.f32.mrf.mxu0
      %v2231 = vadd.f32 %v2166, %v2230
      %2232 = vmatmul.f32.gmra.mxu0 %v2034
      %v2233 = vpop.f32.mrf.mxu0
      %v2234 = vadd.f32 %v2169, %v2233
      %2235 = vmatmul.f32.gmra.mxu0 %v2037
      %v2236 = vpop.f32.mrf.mxu0
      %v2237 = vadd.f32 %v2172, %v2236
      %2238 = vmatmul.f32.gmra.mxu0 %v2040
      %v2239 = vpop.f32.mrf.mxu0
      %v2240 = vadd.f32 %v2175, %v2239
      %2241 = vdwg.mxu0
      %2242 = vmatpush.msra.mxu0 %v2073
      %2243 = vmatpush.msra.mxu0 %v2071
      %2244 = vmatpush.msra.mxu0 %v2069
      %2245 = vmatpush.msra.mxu0 %v2067
      %2246 = vmatpush.msra.mxu0 %v2065
      %2247 = vmatpush.msra.mxu0 %v2063
      %2248 = vmatpush.msra.mxu0 %v2061
      %2249 = vmatpush.msra.mxu0 %v2059
      %2250 = vmatpush.msra.mxu0 %v2057
      %2251 = vmatpush.msra.mxu0 %v2055
      %2252 = vmatpush.msra.mxu0 %v2053
      %2253 = vmatpush.msra.mxu0 %v2051
      %2254 = vmatpush.msra.mxu0 %v2049
      %2255 = vmatpush.msra.mxu0 %v2047
      %2256 = vmatpush.msra.mxu0 %v2045
      %2257 = vmatpush.msra.mxu0 %v2043
      %2258 = vmatmul.f32.gmra.mxu0 %v1930
      %v2259 = vpop.f32.mrf.mxu0
      %v2260 = vadd.f32 %v2109, %v2259
      %2261 = vmatmul.f32.gmra.mxu0 %v1933
      %v2262 = vpop.f32.mrf.mxu0
      %v2263 = vadd.f32 %v2109, %v2262
      %2264 = vmatmul.f32.gmra.mxu0 %v1936
      %v2265 = vpop.f32.mrf.mxu0
      %v2266 = vadd.f32 %v2109, %v2265
      %2267 = vmatmul.f32.gmra.mxu0 %v1939
      %v2268 = vpop.f32.mrf.mxu0
      %v2269 = vadd.f32 %v2109, %v2268
      %2270 = vmatmul.f32.gmra.mxu0 %v1942
      %v2271 = vpop.f32.mrf.mxu0
      %v2272 = vadd.f32 %v2109, %v2271
      %2273 = vmatmul.f32.gmra.mxu0 %v1945
      %v2274 = vpop.f32.mrf.mxu0
      %v2275 = vadd.f32 %v2109, %v2274
      %2276 = vmatmul.f32.gmra.mxu0 %v1948
      %v2277 = vpop.f32.mrf.mxu0
      %v2278 = vadd.f32 %v2109, %v2277
      %2279 = vmatmul.f32.gmra.mxu0 %v1951
      %v2280 = vpop.f32.mrf.mxu0
      %v2281 = vadd.f32 %v2109, %v2280
      %2282 = vmatmul.f32.gmra.mxu0 %v1954
      %v2283 = vpop.f32.mrf.mxu0
      %v2284 = vadd.f32 %v2109, %v2283
      %2285 = vmatmul.f32.gmra.mxu0 %v1957
      %v2286 = vpop.f32.mrf.mxu0
      %v2287 = vadd.f32 %v2109, %v2286
      %2288 = vmatmul.f32.gmra.mxu0 %v1960
      %v2289 = vpop.f32.mrf.mxu0
      %v2290 = vadd.f32 %v2109, %v2289
      %2291 = vmatmul.f32.gmra.mxu0 %v1963
      %v2292 = vpop.f32.mrf.mxu0
      %v2293 = vadd.f32 %v2109, %v2292
      %2294 = vmatmul.f32.gmra.mxu0 %v1966
      %v2295 = vpop.f32.mrf.mxu0
      %v2296 = vadd.f32 %v2109, %v2295
      %2297 = vmatmul.f32.gmra.mxu0 %v1969
      %v2298 = vpop.f32.mrf.mxu0
      %v2299 = vadd.f32 %v2109, %v2298
      %2300 = vmatmul.f32.gmra.mxu0 %v1972
      %v2301 = vpop.f32.mrf.mxu0
      %v2302 = vadd.f32 %v2109, %v2301
      %2303 = vmatmul.f32.gmra.mxu0 %v1975
      %v2304 = vpop.f32.mrf.mxu0
      %v2305 = vadd.f32 %v2109, %v2304
      %2306 = vdwg.mxu0
      %2307 = vmatpush.msra.mxu0 %v2105
      %2308 = vmatpush.msra.mxu0 %v2103
      %2309 = vmatpush.msra.mxu0 %v2101
      %2310 = vmatpush.msra.mxu0 %v2099
      %2311 = vmatpush.msra.mxu0 %v2097
      %2312 = vmatpush.msra.mxu0 %v2095
      %2313 = vmatpush.msra.mxu0 %v2093
      %2314 = vmatpush.msra.mxu0 %v2091
      %2315 = vmatpush.msra.mxu0 %v2089
      %2316 = vmatpush.msra.mxu0 %v2087
      %2317 = vmatpush.msra.mxu0 %v2085
      %2318 = vmatpush.msra.mxu0 %v2083
      %2319 = vmatpush.msra.mxu0 %v2081
      %2320 = vmatpush.msra.mxu0 %v2079
      %2321 = vmatpush.msra.mxu0 %v2077
      %2322 = vmatpush.msra.mxu0 %v2075
      %2323 = vmatmul.f32.gmra.mxu0 %v1995
      %v2324 = vpop.f32.mrf.mxu0
      %v2325 = vadd.f32 %v2260, %v2324
      %2326 = vmatmul.f32.gmra.mxu0 %v1998
      %v2327 = vpop.f32.mrf.mxu0
      %v2328 = vadd.f32 %v2263, %v2327
      %2329 = vmatmul.f32.gmra.mxu0 %v2001
      %v2330 = vpop.f32.mrf.mxu0
      %v2331 = vadd.f32 %v2266, %v2330
      %2332 = vmatmul.f32.gmra.mxu0 %v2004
      %v2333 = vpop.f32.mrf.mxu0
      %v2334 = vadd.f32 %v2269, %v2333
      %2335 = vmatmul.f32.gmra.mxu0 %v2007
      %v2336 = vpop.f32.mrf.mxu0
      %v2337 = vadd.f32 %v2272, %v2336
      %2338 = vmatmul.f32.gmra.mxu0 %v2010
      %v2339 = vpop.f32.mrf.mxu0
      %v2340 = vadd.f32 %v2275, %v2339
      %2341 = vmatmul.f32.gmra.mxu0 %v2013
      %v2342 = vpop.f32.mrf.mxu0
      %v2343 = vadd.f32 %v2278, %v2342
      %2344 = vmatmul.f32.gmra.mxu0 %v2016
      %v2345 = vpop.f32.mrf.mxu0
      %v2346 = vadd.f32 %v2281, %v2345
      %2347 = vmatmul.f32.gmra.mxu0 %v2019
      %v2348 = vpop.f32.mrf.mxu0
      %v2349 = vadd.f32 %v2284, %v2348
      %2350 = vmatmul.f32.gmra.mxu0 %v2022
      %v2351 = vpop.f32.mrf.mxu0
      %v2352 = vadd.f32 %v2287, %v2351
      %2353 = vmatmul.f32.gmra.mxu0 %v2025
      %v2354 = vpop.f32.mrf.mxu0
      %v2355 = vadd.f32 %v2290, %v2354
      %2356 = vmatmul.f32.gmra.mxu0 %v2028
      %v2357 = vpop.f32.mrf.mxu0
      %v2358 = vadd.f32 %v2293, %v2357
      %2359 = vmatmul.f32.gmra.mxu0 %v2031
      %v2360 = vpop.f32.mrf.mxu0
      %v2361 = vadd.f32 %v2296, %v2360
      %2362 = vmatmul.f32.gmra.mxu0 %v2034
      %v2363 = vpop.f32.mrf.mxu0
      %v2364 = vadd.f32 %v2299, %v2363
      %2365 = vmatmul.f32.gmra.mxu0 %v2037
      %v2366 = vpop.f32.mrf.mxu0
      %v2367 = vadd.f32 %v2302, %v2366
      %2368 = vmatmul.f32.gmra.mxu0 %v2040
      %v2369 = vpop.f32.mrf.mxu0
      %v2370 = vadd.f32 %v2305, %v2369
      %2371 = vdwg.mxu0
      %v2372 = vmax.f32 %v2195, 0.0
      %v2373 = vmax.f32 %v2325, 0.0
      %v2374 = vmax.f32 %v2198, 0.0
      %v2375 = vmax.f32 %v2328, 0.0
      %v2376 = vmax.f32 %v2201, 0.0
      %v2377 = vmax.f32 %v2331, 0.0
      %v2378 = vmax.f32 %v2204, 0.0
      %v2379 = vmax.f32 %v2334, 0.0
      %v2380 = vmax.f32 %v2207, 0.0
      %v2381 = vmax.f32 %v2337, 0.0
      %v2382 = vmax.f32 %v2210, 0.0
      %v2383 = vmax.f32 %v2340, 0.0
      %v2384 = vmax.f32 %v2213, 0.0
      %v2385 = vmax.f32 %v2343, 0.0
      %v2386 = vmax.f32 %v2216, 0.0
      %v2387 = vmax.f32 %v2346, 0.0
      %v2388 = vmax.f32 %v2219, 0.0
      %v2389 = vmax.f32 %v2349, 0.0
      %v2390 = vmax.f32 %v2222, 0.0
      %v2391 = vmax.f32 %v2352, 0.0
      %v2392 = vmax.f32 %v2225, 0.0
      %v2393 = vmax.f32 %v2355, 0.0
      %v2394 = vmax.f32 %v2228, 0.0
      %v2395 = vmax.f32 %v2358, 0.0
      %v2396 = vmax.f32 %v2231, 0.0
      %v2397 = vmax.f32 %v2361, 0.0
      %v2398 = vmax.f32 %v2234, 0.0
      %v2399 = vmax.f32 %v2364, 0.0
      %v2400 = vmax.f32 %v2237, 0.0
      %v2401 = vmax.f32 %v2367, 0.0
      %v2402 = vmax.f32 %v2240, 0.0
      %v2403 = vmax.f32 %v2370, 0.0
      %v2404 = vadd.f32 %v2372, %v1880
      %v2405 = vadd.f32 %v2373, %v1881
      %v2406 = vadd.f32 %v2374, %v1882
      %v2407 = vadd.f32 %v2375, %v1883
      %v2408 = vadd.f32 %v2376, %v1884
      %v2409 = vadd.f32 %v2377, %v1885
      %v2410 = vadd.f32 %v2378, %v1886
      %v2411 = vadd.f32 %v2379, %v1887
      %v2412 = vadd.f32 %v2380, %v1888
      %v2413 = vadd.f32 %v2381, %v1889
      %v2414 = vadd.f32 %v2382, %v1890
      %v2415 = vadd.f32 %v2383, %v1891
      %v2416 = vadd.f32 %v2384, %v1892
      %v2417 = vadd.f32 %v2385, %v1893
      %v2418 = vadd.f32 %v2386, %v1894
      %v2419 = vadd.f32 %v2387, %v1895
      %v2420 = vadd.f32 %v2388, %v1896
      %v2421 = vadd.f32 %v2389, %v1897
      %v2422 = vadd.f32 %v2390, %v1898
      %v2423 = vadd.f32 %v2391, %v1899
      %v2424 = vadd.f32 %v2392, %v1900
      %v2425 = vadd.f32 %v2393, %v1901
      %v2426 = vadd.f32 %v2394, %v1902
      %v2427 = vadd.f32 %v2395, %v1903
      %v2428 = vadd.f32 %v2396, %v1904
      %v2429 = vadd.f32 %v2397, %v1905
      %v2430 = vadd.f32 %v2398, %v1906
      %v2431 = vadd.f32 %v2399, %v1907
      %v2432 = vadd.f32 %v2400, %v1908
      %v2433 = vadd.f32 %v2401, %v1909
      %v2434 = vadd.f32 %v2402, %v1910
      %v2435 = vadd.f32 %v2403, %v1911
      %2436 = vmatpush.msra.mxu0 %v2434
      %2437 = vmatpush.msra.mxu0 %v2432
      %2438 = vmatpush.msra.mxu0 %v2430
      %2439 = vmatpush.msra.mxu0 %v2428
      %2440 = vmatpush.msra.mxu0 %v2426
      %2441 = vmatpush.msra.mxu0 %v2424
      %2442 = vmatpush.msra.mxu0 %v2422
      %2443 = vmatpush.msra.mxu0 %v2420
      %2444 = vmatpush.msra.mxu0 %v2418
      %2445 = vmatpush.msra.mxu0 %v2416
      %2446 = vmatpush.msra.mxu0 %v2414
      %2447 = vmatpush.msra.mxu0 %v2412
      %2448 = vmatpush.msra.mxu0 %v2410
      %2449 = vmatpush.msra.mxu0 %v2408
      %2450 = vmatpush.msra.mxu0 %v2406
      %2451 = vmatpush.msra.mxu0 %v2404
      %2452 = vmatmul.f32.gmra.mxu0 %v903
      %v2453 = vpop.f32.mrf.mxu0
      %v2454 = vadd.f32 0.0, %v2453
      %2455 = vmatmul.f32.gmra.mxu0 %v904
      %v2456 = vpop.f32.mrf.mxu0
      %v2457 = vadd.f32 0.0, %v2456
      %2458 = vmatmul.f32.gmra.mxu0 %v905
      %v2459 = vpop.f32.mrf.mxu0
      %v2460 = vadd.f32 0.0, %v2459
      %2461 = vmatmul.f32.gmra.mxu0 %v906
      %v2462 = vpop.f32.mrf.mxu0
      %v2463 = vadd.f32 0.0, %v2462
      %2464 = vmatmul.f32.gmra.mxu0 %v907
      %v2465 = vpop.f32.mrf.mxu0
      %v2466 = vadd.f32 0.0, %v2465
      %2467 = vmatmul.f32.gmra.mxu0 %v908
      %v2468 = vpop.f32.mrf.mxu0
      %v2469 = vadd.f32 0.0, %v2468
      %2470 = vmatmul.f32.gmra.mxu0 %v909
      %v2471 = vpop.f32.mrf.mxu0
      %v2472 = vadd.f32 0.0, %v2471
      %2473 = vmatmul.f32.gmra.mxu0 %v910
      %v2474 = vpop.f32.mrf.mxu0
      %v2475 = vadd.f32 0.0, %v2474
      %2476 = vmatmul.f32.gmra.mxu0 %v911
      %v2477 = vpop.f32.mrf.mxu0
      %v2478 = vadd.f32 0.0, %v2477
      %2479 = vmatmul.f32.gmra.mxu0 %v912
      %v2480 = vpop.f32.mrf.mxu0
      %v2481 = vadd.f32 0.0, %v2480
      %2482 = vmatmul.f32.gmra.mxu0 %v913
      %v2483 = vpop.f32.mrf.mxu0
      %v2484 = vadd.f32 0.0, %v2483
      %2485 = vmatmul.f32.gmra.mxu0 %v914
      %v2486 = vpop.f32.mrf.mxu0
      %v2487 = vadd.f32 0.0, %v2486
      %2488 = vmatmul.f32.gmra.mxu0 %v915
      %v2489 = vpop.f32.mrf.mxu0
      %v2490 = vadd.f32 0.0, %v2489
      %2491 = vmatmul.f32.gmra.mxu0 %v916
      %v2492 = vpop.f32.mrf.mxu0
      %v2493 = vadd.f32 0.0, %v2492
      %2494 = vmatmul.f32.gmra.mxu0 %v917
      %v2495 = vpop.f32.mrf.mxu0
      %v2496 = vadd.f32 0.0, %v2495
      %2497 = vmatmul.f32.gmra.mxu0 %v918
      %v2498 = vpop.f32.mrf.mxu0
      %v2499 = vadd.f32 0.0, %v2498
      %2500 = vdwg.mxu0
      %2501 = vmatpush.msra.mxu0 %v2435
      %2502 = vmatpush.msra.mxu0 %v2433
      %2503 = vmatpush.msra.mxu0 %v2431
      %2504 = vmatpush.msra.mxu0 %v2429
      %2505 = vmatpush.msra.mxu0 %v2427
      %2506 = vmatpush.msra.mxu0 %v2425
      %2507 = vmatpush.msra.mxu0 %v2423
      %2508 = vmatpush.msra.mxu0 %v2421
      %2509 = vmatpush.msra.mxu0 %v2419
      %2510 = vmatpush.msra.mxu0 %v2417
      %2511 = vmatpush.msra.mxu0 %v2415
      %2512 = vmatpush.msra.mxu0 %v2413
      %2513 = vmatpush.msra.mxu0 %v2411
      %2514 = vmatpush.msra.mxu0 %v2409
      %2515 = vmatpush.msra.mxu0 %v2407
      %2516 = vmatpush.msra.mxu0 %v2405
      %2517 = vmatmul.f32.gmra.mxu0 %v903
      %v2518 = vpop.f32.mrf.mxu0
      %v2519 = vadd.f32 0.0, %v2518
      %2520 = vmatmul.f32.gmra.mxu0 %v904
      %v2521 = vpop.f32.mrf.mxu0
      %v2522 = vadd.f32 0.0, %v2521
      %2523 = vmatmul.f32.gmra.mxu0 %v905
      %v2524 = vpop.f32.mrf.mxu0
      %v2525 = vadd.f32 0.0, %v2524
      %2526 = vmatmul.f32.gmra.mxu0 %v906
      %v2527 = vpop.f32.mrf.mxu0
      %v2528 = vadd.f32 0.0, %v2527
      %2529 = vmatmul.f32.gmra.mxu0 %v907
      %v2530 = vpop.f32.mrf.mxu0
      %v2531 = vadd.f32 0.0, %v2530
      %2532 = vmatmul.f32.gmra.mxu0 %v908
      %v2533 = vpop.f32.mrf.mxu0
      %v2534 = vadd.f32 0.0, %v2533
      %2535 = vmatmul.f32.gmra.mxu0 %v909
      %v2536 = vpop.f32.mrf.mxu0
      %v2537 = vadd.f32 0.0, %v2536
      %2538 = vmatmul.f32.gmra.mxu0 %v910
      %v2539 = vpop.f32.mrf.mxu0
      %v2540 = vadd.f32 0.0, %v2539
      %2541 = vmatmul.f32.gmra.mxu0 %v911
      %v2542 = vpop.f32.mrf.mxu0
      %v2543 = vadd.f32 0.0, %v2542
      %2544 = vmatmul.f32.gmra.mxu0 %v912
      %v2545 = vpop.f32.mrf.mxu0
      %v2546 = vadd.f32 0.0, %v2545
      %2547 = vmatmul.f32.gmra.mxu0 %v913
      %v2548 = vpop.f32.mrf.mxu0
      %v2549 = vadd.f32 0.0, %v2548
      %2550 = vmatmul.f32.gmra.mxu0 %v914
      %v2551 = vpop.f32.mrf.mxu0
      %v2552 = vadd.f32 0.0, %v2551
      %2553 = vmatmul.f32.gmra.mxu0 %v915
      %v2554 = vpop.f32.mrf.mxu0
      %v2555 = vadd.f32 0.0, %v2554
      %2556 = vmatmul.f32.gmra.mxu0 %v916
      %v2557 = vpop.f32.mrf.mxu0
      %v2558 = vadd.f32 0.0, %v2557
      %2559 = vmatmul.f32.gmra.mxu0 %v917
      %v2560 = vpop.f32.mrf.mxu0
      %v2561 = vadd.f32 0.0, %v2560
      %2562 = vmatmul.f32.gmra.mxu0 %v918
      %v2563 = vpop.f32.mrf.mxu0
      %v2564 = vadd.f32 0.0, %v2563
      %2565 = vdwg.mxu0
      %v2566 = vld [vmem:[%s19] sm:$0xff]
      %v2567 = vld [vmem:[%s19 + $0x8] sm:$0xff]
      %v2568 = vld [vmem:[%s19 + $0x10] sm:$0xff]
      %v2569 = vld [vmem:[%s19 + $0x18] sm:$0xff]
      %v2570 = vld [vmem:[%s19 + $0x20] sm:$0xff]
      %v2571 = vld [vmem:[%s19 + $0x28] sm:$0xff]
      %v2572 = vld [vmem:[%s19 + $0x30] sm:$0xff]
      %v2573 = vld [vmem:[%s19 + $0x38] sm:$0xff]
      %v2574 = vld [vmem:[%s19 + $0x40] sm:$0xff]
      %v2575 = vld [vmem:[%s19 + $0x48] sm:$0xff]
      %v2576 = vld [vmem:[%s19 + $0x50] sm:$0xff]
      %v2577 = vld [vmem:[%s19 + $0x58] sm:$0xff]
      %v2578 = vld [vmem:[%s19 + $0x60] sm:$0xff]
      %v2579 = vld [vmem:[%s19 + $0x68] sm:$0xff]
      %v2580 = vld [vmem:[%s19 + $0x70] sm:$0xff]
      %v2581 = vld [vmem:[%s19 + $0x78] sm:$0xff]
      %v2582 = vld [vmem:[%s19 + $0x80] sm:$0xff]
      %v2583 = vld [vmem:[%s19 + $0x88] sm:$0xff]
      %v2584 = vld [vmem:[%s19 + $0x90] sm:$0xff]
      %v2585 = vld [vmem:[%s19 + $0x98] sm:$0xff]
      %v2586 = vld [vmem:[%s19 + $0xa0] sm:$0xff]
      %v2587 = vld [vmem:[%s19 + $0xa8] sm:$0xff]
      %v2588 = vld [vmem:[%s19 + $0xb0] sm:$0xff]
      %v2589 = vld [vmem:[%s19 + $0xb8] sm:$0xff]
      %v2590 = vld [vmem:[%s19 + $0xc0] sm:$0xff]
      %v2591 = vld [vmem:[%s19 + $0xc8] sm:$0xff]
      %v2592 = vld [vmem:[%s19 + $0xd0] sm:$0xff]
      %v2593 = vld [vmem:[%s19 + $0xd8] sm:$0xff]
      %v2594 = vld [vmem:[%s19 + $0xe0] sm:$0xff]
      %v2595 = vld [vmem:[%s19 + $0xe8] sm:$0xff]
      %v2596 = vld [vmem:[%s19 + $0xf0] sm:$0xff]
      %v2597 = vld [vmem:[%s19 + $0xf8] sm:$0xff]
      %v2598 = vld [vmem:[%s19 + $0x100] sm:$0xff]
      %v2599 = vld [vmem:[%s19 + $0x108] sm:$0xff]
      %v2600 = vld [vmem:[%s19 + $0x110] sm:$0xff]
      %v2601 = vld [vmem:[%s19 + $0x118] sm:$0xff]
      %v2602 = vld [vmem:[%s19 + $0x120] sm:$0xff]
      %v2603 = vld [vmem:[%s19 + $0x128] sm:$0xff]
      %v2604 = vld [vmem:[%s19 + $0x130] sm:$0xff]
      %v2605 = vld [vmem:[%s19 + $0x138] sm:$0xff]
      %v2606 = vld [vmem:[%s19 + $0x140] sm:$0xff]
      %v2607 = vld [vmem:[%s19 + $0x148] sm:$0xff]
      %v2608 = vld [vmem:[%s19 + $0x150] sm:$0xff]
      %v2609 = vld [vmem:[%s19 + $0x158] sm:$0xff]
      %v2610 = vld [vmem:[%s19 + $0x160] sm:$0xff]
      %v2611 = vld [vmem:[%s19 + $0x168] sm:$0xff]
      %v2612 = vld [vmem:[%s19 + $0x170] sm:$0xff]
      %v2613 = vld [vmem:[%s19 + $0x178] sm:$0xff]
      %v2614 = vld [vmem:[%s19 + $0x180] sm:$0xff]
      %v2615 = vld [vmem:[%s19 + $0x188] sm:$0xff]
      %v2616 = vld [vmem:[%s19 + $0x190] sm:$0xff]
      %v2617 = vld [vmem:[%s19 + $0x198] sm:$0xff]
      %v2618 = vld [vmem:[%s19 + $0x1a0] sm:$0xff]
      %v2619 = vld [vmem:[%s19 + $0x1a8] sm:$0xff]
      %v2620 = vld [vmem:[%s19 + $0x1b0] sm:$0xff]
      %v2621 = vld [vmem:[%s19 + $0x1b8] sm:$0xff]
      %v2622 = vld [vmem:[%s19 + $0x1c0] sm:$0xff]
      %v2623 = vld [vmem:[%s19 + $0x1c8] sm:$0xff]
      %v2624 = vld [vmem:[%s19 + $0x1d0] sm:$0xff]
      %v2625 = vld [vmem:[%s19 + $0x1d8] sm:$0xff]
      %v2626 = vld [vmem:[%s19 + $0x1e0] sm:$0xff]
      %v2627 = vld [vmem:[%s19 + $0x1e8] sm:$0xff]
      %v2628 = vld [vmem:[%s19 + $0x1f0] sm:$0xff]
      %v2629 = vld [vmem:[%s19 + $0x1f8] sm:$0xff]
      %v2630 = vld [vmem:[%s43] sm:$0x3]
      %v2632 = vperm.slane %v2630, 0
      %v2633 = vperm.slane %v2630, 1
      %2636 = vmatpush.msra.mxu0 %v2596
      %2637 = vmatpush.msra.mxu0 %v2594
      %2638 = vmatpush.msra.mxu0 %v2592
      %2639 = vmatpush.msra.mxu0 %v2590
      %2640 = vmatpush.msra.mxu0 %v2588
      %2641 = vmatpush.msra.mxu0 %v2586
      %2642 = vmatpush.msra.mxu0 %v2584
      %2643 = vmatpush.msra.mxu0 %v2582
      %2644 = vmatpush.msra.mxu0 %v2580
      %2645 = vmatpush.msra.mxu0 %v2578
      %2646 = vmatpush.msra.mxu0 %v2576
      %2647 = vmatpush.msra.mxu0 %v2574
      %2648 = vmatpush.msra.mxu0 %v2572
      %2649 = vmatpush.msra.mxu0 %v2570
      %2650 = vmatpush.msra.mxu0 %v2568
      %2651 = vmatpush.msra.mxu0 %v2566
      %2652 = vmatmul.f32.gmra.mxu0 %v2454
      %v2653 = vpop.f32.mrf.mxu0
      %v2654 = vadd.f32 %v2632, %v2653
      %2655 = vmatmul.f32.gmra.mxu0 %v2457
      %v2656 = vpop.f32.mrf.mxu0
      %v2657 = vadd.f32 %v2632, %v2656
      %2658 = vmatmul.f32.gmra.mxu0 %v2460
      %v2659 = vpop.f32.mrf.mxu0
      %v2660 = vadd.f32 %v2632, %v2659
      %2661 = vmatmul.f32.gmra.mxu0 %v2463
      %v2662 = vpop.f32.mrf.mxu0
      %v2663 = vadd.f32 %v2632, %v2662
      %2664 = vmatmul.f32.gmra.mxu0 %v2466
      %v2665 = vpop.f32.mrf.mxu0
      %v2666 = vadd.f32 %v2632, %v2665
      %2667 = vmatmul.f32.gmra.mxu0 %v2469
      %v2668 = vpop.f32.mrf.mxu0
      %v2669 = vadd.f32 %v2632, %v2668
      %2670 = vmatmul.f32.gmra.mxu0 %v2472
      %v2671 = vpop.f32.mrf.mxu0
      %v2672 = vadd.f32 %v2632, %v2671
      %2673 = vmatmul.f32.gmra.mxu0 %v2475
      %v2674 = vpop.f32.mrf.mxu0
      %v2675 = vadd.f32 %v2632, %v2674
      %2676 = vmatmul.f32.gmra.mxu0 %v2478
      %v2677 = vpop.f32.mrf.mxu0
      %v2678 = vadd.f32 %v2632, %v2677
      %2679 = vmatmul.f32.gmra.mxu0 %v2481
      %v2680 = vpop.f32.mrf.mxu0
      %v2681 = vadd.f32 %v2632, %v2680
      %2682 = vmatmul.f32.gmra.mxu0 %v2484
      %v2683 = vpop.f32.mrf.mxu0
      %v2684 = vadd.f32 %v2632, %v2683
      %2685 = vmatmul.f32.gmra.mxu0 %v2487
      %v2686 = vpop.f32.mrf.mxu0
      %v2687 = vadd.f32 %v2632, %v2686
      %2688 = vmatmul.f32.gmra.mxu0 %v2490
      %v2689 = vpop.f32.mrf.mxu0
      %v2690 = vadd.f32 %v2632, %v2689
      %2691 = vmatmul.f32.gmra.mxu0 %v2493
      %v2692 = vpop.f32.mrf.mxu0
      %v2693 = vadd.f32 %v2632, %v2692
      %2694 = vmatmul.f32.gmra.mxu0 %v2496
      %v2695 = vpop.f32.mrf.mxu0
      %v2696 = vadd.f32 %v2632, %v2695
      %2697 = vmatmul.f32.gmra.mxu0 %v2499
      %v2698 = vpop.f32.mrf.mxu0
      %v2699 = vadd.f32 %v2632, %v2698
      %2700 = vdwg.mxu0
      %2701 = vmatpush.msra.mxu0 %v2628
      %2702 = vmatpush.msra.mxu0 %v2626
      %2703 = vmatpush.msra.mxu0 %v2624
      %2704 = vmatpush.msra.mxu0 %v2622
      %2705 = vmatpush.msra.mxu0 %v2620
      %2706 = vmatpush.msra.mxu0 %v2618
      %2707 = vmatpush.msra.mxu0 %v2616
      %2708 = vmatpush.msra.mxu0 %v2614
      %2709 = vmatpush.msra.mxu0 %v2612
      %2710 = vmatpush.msra.mxu0 %v2610
      %2711 = vmatpush.msra.mxu0 %v2608
      %2712 = vmatpush.msra.mxu0 %v2606
      %2713 = vmatpush.msra.mxu0 %v2604
      %2714 = vmatpush.msra.mxu0 %v2602
      %2715 = vmatpush.msra.mxu0 %v2600
      %2716 = vmatpush.msra.mxu0 %v2598
      %2717 = vmatmul.f32.gmra.mxu0 %v2519
      %v2718 = vpop.f32.mrf.mxu0
      %v2719 = vadd.f32 %v2654, %v2718
      %2720 = vmatmul.f32.gmra.mxu0 %v2522
      %v2721 = vpop.f32.mrf.mxu0
      %v2722 = vadd.f32 %v2657, %v2721
      %2723 = vmatmul.f32.gmra.mxu0 %v2525
      %v2724 = vpop.f32.mrf.mxu0
      %v2725 = vadd.f32 %v2660, %v2724
      %2726 = vmatmul.f32.gmra.mxu0 %v2528
      %v2727 = vpop.f32.mrf.mxu0
      %v2728 = vadd.f32 %v2663, %v2727
      %2729 = vmatmul.f32.gmra.mxu0 %v2531
      %v2730 = vpop.f32.mrf.mxu0
      %v2731 = vadd.f32 %v2666, %v2730
      %2732 = vmatmul.f32.gmra.mxu0 %v2534
      %v2733 = vpop.f32.mrf.mxu0
      %v2734 = vadd.f32 %v2669, %v2733
      %2735 = vmatmul.f32.gmra.mxu0 %v2537
      %v2736 = vpop.f32.mrf.mxu0
      %v2737 = vadd.f32 %v2672, %v2736
      %2738 = vmatmul.f32.gmra.mxu0 %v2540
      %v2739 = vpop.f32.mrf.mxu0
      %v2740 = vadd.f32 %v2675, %v2739
      %2741 = vmatmul.f32.gmra.mxu0 %v2543
      %v2742 = vpop.f32.mrf.mxu0
      %v2743 = vadd.f32 %v2678, %v2742
      %2744 = vmatmul.f32.gmra.mxu0 %v2546
      %v2745 = vpop.f32.mrf.mxu0
      %v2746 = vadd.f32 %v2681, %v2745
      %2747 = vmatmul.f32.gmra.mxu0 %v2549
      %v2748 = vpop.f32.mrf.mxu0
      %v2749 = vadd.f32 %v2684, %v2748
      %2750 = vmatmul.f32.gmra.mxu0 %v2552
      %v2751 = vpop.f32.mrf.mxu0
      %v2752 = vadd.f32 %v2687, %v2751
      %2753 = vmatmul.f32.gmra.mxu0 %v2555
      %v2754 = vpop.f32.mrf.mxu0
      %v2755 = vadd.f32 %v2690, %v2754
      %2756 = vmatmul.f32.gmra.mxu0 %v2558
      %v2757 = vpop.f32.mrf.mxu0
      %v2758 = vadd.f32 %v2693, %v2757
      %2759 = vmatmul.f32.gmra.mxu0 %v2561
      %v2760 = vpop.f32.mrf.mxu0
      %v2761 = vadd.f32 %v2696, %v2760
      %2762 = vmatmul.f32.gmra.mxu0 %v2564
      %v2763 = vpop.f32.mrf.mxu0
      %v2764 = vadd.f32 %v2699, %v2763
      %2765 = vdwg.mxu0
      %2766 = vmatpush.msra.mxu0 %v2597
      %2767 = vmatpush.msra.mxu0 %v2595
      %2768 = vmatpush.msra.mxu0 %v2593
      %2769 = vmatpush.msra.mxu0 %v2591
      %2770 = vmatpush.msra.mxu0 %v2589
      %2771 = vmatpush.msra.mxu0 %v2587
      %2772 = vmatpush.msra.mxu0 %v2585
      %2773 = vmatpush.msra.mxu0 %v2583
      %2774 = vmatpush.msra.mxu0 %v2581
      %2775 = vmatpush.msra.mxu0 %v2579
      %2776 = vmatpush.msra.mxu0 %v2577
      %2777 = vmatpush.msra.mxu0 %v2575
      %2778 = vmatpush.msra.mxu0 %v2573
      %2779 = vmatpush.msra.mxu0 %v2571
      %2780 = vmatpush.msra.mxu0 %v2569
      %2781 = vmatpush.msra.mxu0 %v2567
      %2782 = vmatmul.f32.gmra.mxu0 %v2454
      %v2783 = vpop.f32.mrf.mxu0
      %v2784 = vadd.f32 %v2633, %v2783
      %2785 = vmatmul.f32.gmra.mxu0 %v2457
      %v2786 = vpop.f32.mrf.mxu0
      %v2787 = vadd.f32 %v2633, %v2786
      %2788 = vmatmul.f32.gmra.mxu0 %v2460
      %v2789 = vpop.f32.mrf.mxu0
      %v2790 = vadd.f32 %v2633, %v2789
      %2791 = vmatmul.f32.gmra.mxu0 %v2463
      %v2792 = vpop.f32.mrf.mxu0
      %v2793 = vadd.f32 %v2633, %v2792
      %2794 = vmatmul.f32.gmra.mxu0 %v2466
      %v2795 = vpop.f32.mrf.mxu0
      %v2796 = vadd.f32 %v2633, %v2795
      %2797 = vmatmul.f32.gmra.mxu0 %v2469
      %v2798 = vpop.f32.mrf.mxu0
      %v2799 = vadd.f32 %v2633, %v2798
      %2800 = vmatmul.f32.gmra.mxu0 %v2472
      %v2801 = vpop.f32.mrf.mxu0
      %v2802 = vadd.f32 %v2633, %v2801
      %2803 = vmatmul.f32.gmra.mxu0 %v2475
      %v2804 = vpop.f32.mrf.mxu0
      %v2805 = vadd.f32 %v2633, %v2804
      %2806 = vmatmul.f32.gmra.mxu0 %v2478
      %v2807 = vpop.f32.mrf.mxu0
      %v2808 = vadd.f32 %v2633, %v2807
      %2809 = vmatmul.f32.gmra.mxu0 %v2481
      %v2810 = vpop.f32.mrf.mxu0
      %v2811 = vadd.f32 %v2633, %v2810
      %2812 = vmatmul.f32.gmra.mxu0 %v2484
      %v2813 = vpop.f32.mrf.mxu0
      %v2814 = vadd.f32 %v2633, %v2813
      %2815 = vmatmul.f32.gmra.mxu0 %v2487
      %v2816 = vpop.f32.mrf.mxu0
      %v2817 = vadd.f32 %v2633, %v2816
      %2818 = vmatmul.f32.gmra.mxu0 %v2490
      %v2819 = vpop.f32.mrf.mxu0
      %v2820 = vadd.f32 %v2633, %v2819
      %2821 = vmatmul.f32.gmra.mxu0 %v2493
      %v2822 = vpop.f32.mrf.mxu0
      %v2823 = vadd.f32 %v2633, %v2822
      %2824 = vmatmul.f32.gmra.mxu0 %v2496
      %v2825 = vpop.f32.mrf.mxu0
      %v2826 = vadd.f32 %v2633, %v2825
      %2827 = vmatmul.f32.gmra.mxu0 %v2499
      %v2828 = vpop.f32.mrf.mxu0
      %v2829 = vadd.f32 %v2633, %v2828
      %2830 = vdwg.mxu0
      %2831 = vmatpush.msra.mxu0 %v2629
      %2832 = vmatpush.msra.mxu0 %v2627
      %2833 = vmatpush.msra.mxu0 %v2625
      %2834 = vmatpush.msra.mxu0 %v2623
      %2835 = vmatpush.msra.mxu0 %v2621
      %2836 = vmatpush.msra.mxu0 %v2619
      %2837 = vmatpush.msra.mxu0 %v2617
      %2838 = vmatpush.msra.mxu0 %v2615
      %2839 = vmatpush.msra.mxu0 %v2613
      %2840 = vmatpush.msra.mxu0 %v2611
      %2841 = vmatpush.msra.mxu0 %v2609
      %2842 = vmatpush.msra.mxu0 %v2607
      %2843 = vmatpush.msra.mxu0 %v2605
      %2844 = vmatpush.msra.mxu0 %v2603
      %2845 = vmatpush.msra.mxu0 %v2601
      %2846 = vmatpush.msra.mxu0 %v2599
      %2847 = vmatmul.f32.gmra.mxu0 %v2519
      %v2848 = vpop.f32.mrf.mxu0
      %v2849 = vadd.f32 %v2784, %v2848
      %2850 = vmatmul.f32.gmra.mxu0 %v2522
      %v2851 = vpop.f32.mrf.mxu0
      %v2852 = vadd.f32 %v2787, %v2851
      %2853 = vmatmul.f32.gmra.mxu0 %v2525
      %v2854 = vpop.f32.mrf.mxu0
      %v2855 = vadd.f32 %v2790, %v2854
      %2856 = vmatmul.f32.gmra.mxu0 %v2528
      %v2857 = vpop.f32.mrf.mxu0
      %v2858 = vadd.f32 %v2793, %v2857
      %2859 = vmatmul.f32.gmra.mxu0 %v2531
      %v2860 = vpop.f32.mrf.mxu0
      %v2861 = vadd.f32 %v2796, %v2860
      %2862 = vmatmul.f32.gmra.mxu0 %v2534
      %v2863 = vpop.f32.mrf.mxu0
      %v2864 = vadd.f32 %v2799, %v2863
      %2865 = vmatmul.f32.gmra.mxu0 %v2537
      %v2866 = vpop.f32.mrf.mxu0
      %v2867 = vadd.f32 %v2802, %v2866
      %2868 = vmatmul.f32.gmra.mxu0 %v2540
      %v2869 = vpop.f32.mrf.mxu0
      %v2870 = vadd.f32 %v2805, %v2869
      %2871 = vmatmul.f32.gmra.mxu0 %v2543
      %v2872 = vpop.f32.mrf.mxu0
      %v2873 = vadd.f32 %v2808, %v2872
      %2874 = vmatmul.f32.gmra.mxu0 %v2546
      %v2875 = vpop.f32.mrf.mxu0
      %v2876 = vadd.f32 %v2811, %v2875
      %2877 = vmatmul.f32.gmra.mxu0 %v2549
      %v2878 = vpop.f32.mrf.mxu0
      %v2879 = vadd.f32 %v2814, %v2878
      %2880 = vmatmul.f32.gmra.mxu0 %v2552
      %v2881 = vpop.f32.mrf.mxu0
      %v2882 = vadd.f32 %v2817, %v2881
      %2883 = vmatmul.f32.gmra.mxu0 %v2555
      %v2884 = vpop.f32.mrf.mxu0
      %v2885 = vadd.f32 %v2820, %v2884
      %2886 = vmatmul.f32.gmra.mxu0 %v2558
      %v2887 = vpop.f32.mrf.mxu0
      %v2888 = vadd.f32 %v2823, %v2887
      %2889 = vmatmul.f32.gmra.mxu0 %v2561
      %v2890 = vpop.f32.mrf.mxu0
      %v2891 = vadd.f32 %v2826, %v2890
      %2892 = vmatmul.f32.gmra.mxu0 %v2564
      %v2893 = vpop.f32.mrf.mxu0
      %v2894 = vadd.f32 %v2829, %v2893
      %2895 = vdwg.mxu0
      %v2896 = vmax.f32 %v2719, 0.0
      %v2897 = vmax.f32 %v2849, 0.0
      %v2898 = vmax.f32 %v2722, 0.0
      %v2899 = vmax.f32 %v2852, 0.0
      %v2900 = vmax.f32 %v2725, 0.0
      %v2901 = vmax.f32 %v2855, 0.0
      %v2902 = vmax.f32 %v2728, 0.0
      %v2903 = vmax.f32 %v2858, 0.0
      %v2904 = vmax.f32 %v2731, 0.0
      %v2905 = vmax.f32 %v2861, 0.0
      %v2906 = vmax.f32 %v2734, 0.0
      %v2907 = vmax.f32 %v2864, 0.0
      %v2908 = vmax.f32 %v2737, 0.0
      %v2909 = vmax.f32 %v2867, 0.0
      %v2910 = vmax.f32 %v2740, 0.0
      %v2911 = vmax.f32 %v2870, 0.0
      %v2912 = vmax.f32 %v2743, 0.0
      %v2913 = vmax.f32 %v2873, 0.0
      %v2914 = vmax.f32 %v2746, 0.0
      %v2915 = vmax.f32 %v2876, 0.0
      %v2916 = vmax.f32 %v2749, 0.0
      %v2917 = vmax.f32 %v2879, 0.0
      %v2918 = vmax.f32 %v2752, 0.0
      %v2919 = vmax.f32 %v2882, 0.0
      %v2920 = vmax.f32 %v2755, 0.0
      %v2921 = vmax.f32 %v2885, 0.0
      %v2922 = vmax.f32 %v2758, 0.0
      %v2923 = vmax.f32 %v2888, 0.0
      %v2924 = vmax.f32 %v2761, 0.0
      %v2925 = vmax.f32 %v2891, 0.0
      %v2926 = vmax.f32 %v2764, 0.0
      %v2927 = vmax.f32 %v2894, 0.0
      %v2928 = vadd.f32 %v2896, %v2404
      %v2929 = vadd.f32 %v2897, %v2405
      %v2930 = vadd.f32 %v2898, %v2406
      %v2931 = vadd.f32 %v2899, %v2407
      %v2932 = vadd.f32 %v2900, %v2408
      %v2933 = vadd.f32 %v2901, %v2409
      %v2934 = vadd.f32 %v2902, %v2410
      %v2935 = vadd.f32 %v2903, %v2411
      %v2936 = vadd.f32 %v2904, %v2412
      %v2937 = vadd.f32 %v2905, %v2413
      %v2938 = vadd.f32 %v2906, %v2414
      %v2939 = vadd.f32 %v2907, %v2415
      %v2940 = vadd.f32 %v2908, %v2416
      %v2941 = vadd.f32 %v2909, %v2417
      %v2942 = vadd.f32 %v2910, %v2418
      %v2943 = vadd.f32 %v2911, %v2419
      %v2944 = vadd.f32 %v2912, %v2420
      %v2945 = vadd.f32 %v2913, %v2421
      %v2946 = vadd.f32 %v2914, %v2422
      %v2947 = vadd.f32 %v2915, %v2423
      %v2948 = vadd.f32 %v2916, %v2424
      %v2949 = vadd.f32 %v2917, %v2425
      %v2950 = vadd.f32 %v2918, %v2426
      %v2951 = vadd.f32 %v2919, %v2427
      %v2952 = vadd.f32 %v2920, %v2428
      %v2953 = vadd.f32 %v2921, %v2429
      %v2954 = vadd.f32 %v2922, %v2430
      %v2955 = vadd.f32 %v2923, %v2431
      %v2956 = vadd.f32 %v2924, %v2432
      %v2957 = vadd.f32 %v2925, %v2433
      %v2958 = vadd.f32 %v2926, %v2434
      %v2959 = vadd.f32 %v2927, %v2435
      %2960 = vmatpush.msra.mxu0 %v2958
      %2961 = vmatpush.msra.mxu0 %v2956
      %2962 = vmatpush.msra.mxu0 %v2954
      %2963 = vmatpush.msra.mxu0 %v2952
      %2964 = vmatpush.msra.mxu0 %v2950
      %2965 = vmatpush.msra.mxu0 %v2948
      %2966 = vmatpush.msra.mxu0 %v2946
      %2967 = vmatpush.msra.mxu0 %v2944
      %2968 = vmatpush.msra.mxu0 %v2942
      %2969 = vmatpush.msra.mxu0 %v2940
      %2970 = vmatpush.msra.mxu0 %v2938
      %2971 = vmatpush.msra.mxu0 %v2936
      %2972 = vmatpush.msra.mxu0 %v2934
      %2973 = vmatpush.msra.mxu0 %v2932
      %2974 = vmatpush.msra.mxu0 %v2930
      %2975 = vmatpush.msra.mxu0 %v2928
      %2976 = vmatmul.f32.gmra.mxu0 %v903
      %v2977 = vpop.f32.mrf.mxu0
      %v2978 = vadd.f32 0.0, %v2977
      %2979 = vmatmul.f32.gmra.mxu0 %v904
      %v2980 = vpop.f32.mrf.mxu0
      %v2981 = vadd.f32 0.0, %v2980
      %2982 = vmatmul.f32.gmra.mxu0 %v905
      %v2983 = vpop.f32.mrf.mxu0
      %v2984 = vadd.f32 0.0, %v2983
      %2985 = vmatmul.f32.gmra.mxu0 %v906
      %v2986 = vpop.f32.mrf.mxu0
      %v2987 = vadd.f32 0.0, %v2986
      %2988 = vmatmul.f32.gmra.mxu0 %v907
      %v2989 = vpop.f32.mrf.mxu0
      %v2990 = vadd.f32 0.0, %v2989
      %2991 = vmatmul.f32.gmra.mxu0 %v908
      %v2992 = vpop.f32.mrf.mxu0
      %v2993 = vadd.f32 0.0, %v2992
      %2994 = vmatmul.f32.gmra.mxu0 %v909
      %v2995 = vpop.f32.mrf.mxu0
      %v2996 = vadd.f32 0.0, %v2995
      %2997 = vmatmul.f32.gmra.mxu0 %v910
      %v2998 = vpop.f32.mrf.mxu0
      %v2999 = vadd.f32 0.0, %v2998
      %3000 = vmatmul.f32.gmra.mxu0 %v911
      %v3001 = vpop.f32.mrf.mxu0
      %v3002 = vadd.f32 0.0, %v3001
      %3003 = vmatmul.f32.gmra.mxu0 %v912
      %v3004 = vpop.f32.mrf.mxu0
      %v3005 = vadd.f32 0.0, %v3004
      %3006 = vmatmul.f32.gmra.mxu0 %v913
      %v3007 = vpop.f32.mrf.mxu0
      %v3008 = vadd.f32 0.0, %v3007
      %3009 = vmatmul.f32.gmra.mxu0 %v914
      %v3010 = vpop.f32.mrf.mxu0
      %v3011 = vadd.f32 0.0, %v3010
      %3012 = vmatmul.f32.gmra.mxu0 %v915
      %v3013 = vpop.f32.mrf.mxu0
      %v3014 = vadd.f32 0.0, %v3013
      %3015 = vmatmul.f32.gmra.mxu0 %v916
      %v3016 = vpop.f32.mrf.mxu0
      %v3017 = vadd.f32 0.0, %v3016
      %3018 = vmatmul.f32.gmra.mxu0 %v917
      %v3019 = vpop.f32.mrf.mxu0
      %v3020 = vadd.f32 0.0, %v3019
      %3021 = vmatmul.f32.gmra.mxu0 %v918
      %v3022 = vpop.f32.mrf.mxu0
      %v3023 = vadd.f32 0.0, %v3022
      %3024 = vdwg.mxu0
      %3025 = vmatpush.msra.mxu0 %v2959
      %3026 = vmatpush.msra.mxu0 %v2957
      %3027 = vmatpush.msra.mxu0 %v2955
      %3028 = vmatpush.msra.mxu0 %v2953
      %3029 = vmatpush.msra.mxu0 %v2951
      %3030 = vmatpush.msra.mxu0 %v2949
      %3031 = vmatpush.msra.mxu0 %v2947
      %3032 = vmatpush.msra.mxu0 %v2945
      %3033 = vmatpush.msra.mxu0 %v2943
      %3034 = vmatpush.msra.mxu0 %v2941
      %3035 = vmatpush.msra.mxu0 %v2939
      %3036 = vmatpush.msra.mxu0 %v2937
      %3037 = vmatpush.msra.mxu0 %v2935
      %3038 = vmatpush.msra.mxu0 %v2933
      %3039 = vmatpush.msra.mxu0 %v2931
      %3040 = vmatpush.msra.mxu0 %v2929
      %3041 = vmatmul.f32.gmra.mxu0 %v903
      %v3042 = vpop.f32.mrf.mxu0
      %v3043 = vadd.f32 0.0, %v3042
      %3044 = vmatmul.f32.gmra.mxu0 %v904
      %v3045 = vpop.f32.mrf.mxu0
      %v3046 = vadd.f32 0.0, %v3045
      %3047 = vmatmul.f32.gmra.mxu0 %v905
      %v3048 = vpop.f32.mrf.mxu0
      %v3049 = vadd.f32 0.0, %v3048
      %3050 = vmatmul.f32.gmra.mxu0 %v906
      %v3051 = vpop.f32.mrf.mxu0
      %v3052 = vadd.f32 0.0, %v3051
      %3053 = vmatmul.f32.gmra.mxu0 %v907
      %v3054 = vpop.f32.mrf.mxu0
      %v3055 = vadd.f32 0.0, %v3054
      %3056 = vmatmul.f32.gmra.mxu0 %v908
      %v3057 = vpop.f32.mrf.mxu0
      %v3058 = vadd.f32 0.0, %v3057
      %3059 = vmatmul.f32.gmra.mxu0 %v909
      %v3060 = vpop.f32.mrf.mxu0
      %v3061 = vadd.f32 0.0, %v3060
      %3062 = vmatmul.f32.gmra.mxu0 %v910
      %v3063 = vpop.f32.mrf.mxu0
      %v3064 = vadd.f32 0.0, %v3063
      %3065 = vmatmul.f32.gmra.mxu0 %v911
      %v3066 = vpop.f32.mrf.mxu0
      %v3067 = vadd.f32 0.0, %v3066
      %3068 = vmatmul.f32.gmra.mxu0 %v912
      %v3069 = vpop.f32.mrf.mxu0
      %v3070 = vadd.f32 0.0, %v3069
      %3071 = vmatmul.f32.gmra.mxu0 %v913
      %v3072 = vpop.f32.mrf.mxu0
      %v3073 = vadd.f32 0.0, %v3072
      %3074 = vmatmul.f32.gmra.mxu0 %v914
      %v3075 = vpop.f32.mrf.mxu0
      %v3076 = vadd.f32 0.0, %v3075
      %3077 = vmatmul.f32.gmra.mxu0 %v915
      %v3078 = vpop.f32.mrf.mxu0
      %v3079 = vadd.f32 0.0, %v3078
      %3080 = vmatmul.f32.gmra.mxu0 %v916
      %v3081 = vpop.f32.mrf.mxu0
      %v3082 = vadd.f32 0.0, %v3081
      %3083 = vmatmul.f32.gmra.mxu0 %v917
      %v3084 = vpop.f32.mrf.mxu0
      %v3085 = vadd.f32 0.0, %v3084
      %3086 = vmatmul.f32.gmra.mxu0 %v918
      %v3087 = vpop.f32.mrf.mxu0
      %v3088 = vadd.f32 0.0, %v3087
      %3089 = vdwg.mxu0
      %v3090 = vld [vmem:[%s21] sm:$0xff]
      %v3091 = vld [vmem:[%s21 + $0x8] sm:$0xff]
      %v3092 = vld [vmem:[%s21 + $0x10] sm:$0xff]
      %v3093 = vld [vmem:[%s21 + $0x18] sm:$0xff]
      %v3094 = vld [vmem:[%s21 + $0x20] sm:$0xff]
      %v3095 = vld [vmem:[%s21 + $0x28] sm:$0xff]
      %v3096 = vld [vmem:[%s21 + $0x30] sm:$0xff]
      %v3097 = vld [vmem:[%s21 + $0x38] sm:$0xff]
      %v3098 = vld [vmem:[%s21 + $0x40] sm:$0xff]
      %v3099 = vld [vmem:[%s21 + $0x48] sm:$0xff]
      %v3100 = vld [vmem:[%s21 + $0x50] sm:$0xff]
      %v3101 = vld [vmem:[%s21 + $0x58] sm:$0xff]
      %v3102 = vld [vmem:[%s21 + $0x60] sm:$0xff]
      %v3103 = vld [vmem:[%s21 + $0x68] sm:$0xff]
      %v3104 = vld [vmem:[%s21 + $0x70] sm:$0xff]
      %v3105 = vld [vmem:[%s21 + $0x78] sm:$0xff]
      %v3106 = vld [vmem:[%s21 + $0x80] sm:$0xff]
      %v3107 = vld [vmem:[%s21 + $0x88] sm:$0xff]
      %v3108 = vld [vmem:[%s21 + $0x90] sm:$0xff]
      %v3109 = vld [vmem:[%s21 + $0x98] sm:$0xff]
      %v3110 = vld [vmem:[%s21 + $0xa0] sm:$0xff]
      %v3111 = vld [vmem:[%s21 + $0xa8] sm:$0xff]
      %v3112 = vld [vmem:[%s21 + $0xb0] sm:$0xff]
      %v3113 = vld [vmem:[%s21 + $0xb8] sm:$0xff]
      %v3114 = vld [vmem:[%s21 + $0xc0] sm:$0xff]
      %v3115 = vld [vmem:[%s21 + $0xc8] sm:$0xff]
      %v3116 = vld [vmem:[%s21 + $0xd0] sm:$0xff]
      %v3117 = vld [vmem:[%s21 + $0xd8] sm:$0xff]
      %v3118 = vld [vmem:[%s21 + $0xe0] sm:$0xff]
      %v3119 = vld [vmem:[%s21 + $0xe8] sm:$0xff]
      %v3120 = vld [vmem:[%s21 + $0xf0] sm:$0xff]
      %v3121 = vld [vmem:[%s21 + $0xf8] sm:$0xff]
      %v3122 = vld [vmem:[%s21 + $0x100] sm:$0xff]
      %v3123 = vld [vmem:[%s21 + $0x108] sm:$0xff]
      %v3124 = vld [vmem:[%s21 + $0x110] sm:$0xff]
      %v3125 = vld [vmem:[%s21 + $0x118] sm:$0xff]
      %v3126 = vld [vmem:[%s21 + $0x120] sm:$0xff]
      %v3127 = vld [vmem:[%s21 + $0x128] sm:$0xff]
      %v3128 = vld [vmem:[%s21 + $0x130] sm:$0xff]
      %v3129 = vld [vmem:[%s21 + $0x138] sm:$0xff]
      %v3130 = vld [vmem:[%s21 + $0x140] sm:$0xff]
      %v3131 = vld [vmem:[%s21 + $0x148] sm:$0xff]
      %v3132 = vld [vmem:[%s21 + $0x150] sm:$0xff]
      %v3133 = vld [vmem:[%s21 + $0x158] sm:$0xff]
      %v3134 = vld [vmem:[%s21 + $0x160] sm:$0xff]
      %v3135 = vld [vmem:[%s21 + $0x168] sm:$0xff]
      %v3136 = vld [vmem:[%s21 + $0x170] sm:$0xff]
      %v3137 = vld [vmem:[%s21 + $0x178] sm:$0xff]
      %v3138 = vld [vmem:[%s21 + $0x180] sm:$0xff]
      %v3139 = vld [vmem:[%s21 + $0x188] sm:$0xff]
      %v3140 = vld [vmem:[%s21 + $0x190] sm:$0xff]
      %v3141 = vld [vmem:[%s21 + $0x198] sm:$0xff]
      %v3142 = vld [vmem:[%s21 + $0x1a0] sm:$0xff]
      %v3143 = vld [vmem:[%s21 + $0x1a8] sm:$0xff]
      %v3144 = vld [vmem:[%s21 + $0x1b0] sm:$0xff]
      %v3145 = vld [vmem:[%s21 + $0x1b8] sm:$0xff]
      %v3146 = vld [vmem:[%s21 + $0x1c0] sm:$0xff]
      %v3147 = vld [vmem:[%s21 + $0x1c8] sm:$0xff]
      %v3148 = vld [vmem:[%s21 + $0x1d0] sm:$0xff]
      %v3149 = vld [vmem:[%s21 + $0x1d8] sm:$0xff]
      %v3150 = vld [vmem:[%s21 + $0x1e0] sm:$0xff]
      %v3151 = vld [vmem:[%s21 + $0x1e8] sm:$0xff]
      %v3152 = vld [vmem:[%s21 + $0x1f0] sm:$0xff]
      %v3153 = vld [vmem:[%s21 + $0x1f8] sm:$0xff]
      %v3154 = vld [vmem:[%s45] sm:$0x3]
      %v3156 = vperm.slane %v3154, 0
      %v3157 = vperm.slane %v3154, 1
      %3160 = vmatpush.msra.mxu0 %v3120
      %3161 = vmatpush.msra.mxu0 %v3118
      %3162 = vmatpush.msra.mxu0 %v3116
      %3163 = vmatpush.msra.mxu0 %v3114
      %3164 = vmatpush.msra.mxu0 %v3112
      %3165 = vmatpush.msra.mxu0 %v3110
      %3166 = vmatpush.msra.mxu0 %v3108
      %3167 = vmatpush.msra.mxu0 %v3106
      %3168 = vmatpush.msra.mxu0 %v3104
      %3169 = vmatpush.msra.mxu0 %v3102
      %3170 = vmatpush.msra.mxu0 %v3100
      %3171 = vmatpush.msra.mxu0 %v3098
      %3172 = vmatpush.msra.mxu0 %v3096
      %3173 = vmatpush.msra.mxu0 %v3094
      %3174 = vmatpush.msra.mxu0 %v3092
      %3175 = vmatpush.msra.mxu0 %v3090
      %3176 = vmatmul.f32.gmra.mxu0 %v2978
      %v3177 = vpop.f32.mrf.mxu0
      %v3178 = vadd.f32 %v3156, %v3177
      %3179 = vmatmul.f32.gmra.mxu0 %v2981
      %v3180 = vpop.f32.mrf.mxu0
      %v3181 = vadd.f32 %v3156, %v3180
      %3182 = vmatmul.f32.gmra.mxu0 %v2984
      %v3183 = vpop.f32.mrf.mxu0
      %v3184 = vadd.f32 %v3156, %v3183
      %3185 = vmatmul.f32.gmra.mxu0 %v2987
      %v3186 = vpop.f32.mrf.mxu0
      %v3187 = vadd.f32 %v3156, %v3186
      %3188 = vmatmul.f32.gmra.mxu0 %v2990
      %v3189 = vpop.f32.mrf.mxu0
      %v3190 = vadd.f32 %v3156, %v3189
      %3191 = vmatmul.f32.gmra.mxu0 %v2993
      %v3192 = vpop.f32.mrf.mxu0
      %v3193 = vadd.f32 %v3156, %v3192
      %3194 = vmatmul.f32.gmra.mxu0 %v2996
      %v3195 = vpop.f32.mrf.mxu0
      %v3196 = vadd.f32 %v3156, %v3195
      %3197 = vmatmul.f32.gmra.mxu0 %v2999
      %v3198 = vpop.f32.mrf.mxu0
      %v3199 = vadd.f32 %v3156, %v3198
      %3200 = vmatmul.f32.gmra.mxu0 %v3002
      %v3201 = vpop.f32.mrf.mxu0
      %v3202 = vadd.f32 %v3156, %v3201
      %3203 = vmatmul.f32.gmra.mxu0 %v3005
      %v3204 = vpop.f32.mrf.mxu0
      %v3205 = vadd.f32 %v3156, %v3204
      %3206 = vmatmul.f32.gmra.mxu0 %v3008
      %v3207 = vpop.f32.mrf.mxu0
      %v3208 = vadd.f32 %v3156, %v3207
      %3209 = vmatmul.f32.gmra.mxu0 %v3011
      %v3210 = vpop.f32.mrf.mxu0
      %v3211 = vadd.f32 %v3156, %v3210
      %3212 = vmatmul.f32.gmra.mxu0 %v3014
      %v3213 = vpop.f32.mrf.mxu0
      %v3214 = vadd.f32 %v3156, %v3213
      %3215 = vmatmul.f32.gmra.mxu0 %v3017
      %v3216 = vpop.f32.mrf.mxu0
      %v3217 = vadd.f32 %v3156, %v3216
      %3218 = vmatmul.f32.gmra.mxu0 %v3020
      %v3219 = vpop.f32.mrf.mxu0
      %v3220 = vadd.f32 %v3156, %v3219
      %3221 = vmatmul.f32.gmra.mxu0 %v3023
      %v3222 = vpop.f32.mrf.mxu0
      %v3223 = vadd.f32 %v3156, %v3222
      %3224 = vdwg.mxu0
      %3225 = vmatpush.msra.mxu0 %v3152
      %3226 = vmatpush.msra.mxu0 %v3150
      %3227 = vmatpush.msra.mxu0 %v3148
      %3228 = vmatpush.msra.mxu0 %v3146
      %3229 = vmatpush.msra.mxu0 %v3144
      %3230 = vmatpush.msra.mxu0 %v3142
      %3231 = vmatpush.msra.mxu0 %v3140
      %3232 = vmatpush.msra.mxu0 %v3138
      %3233 = vmatpush.msra.mxu0 %v3136
      %3234 = vmatpush.msra.mxu0 %v3134
      %3235 = vmatpush.msra.mxu0 %v3132
      %3236 = vmatpush.msra.mxu0 %v3130
      %3237 = vmatpush.msra.mxu0 %v3128
      %3238 = vmatpush.msra.mxu0 %v3126
      %3239 = vmatpush.msra.mxu0 %v3124
      %3240 = vmatpush.msra.mxu0 %v3122
      %3241 = vmatmul.f32.gmra.mxu0 %v3043
      %v3242 = vpop.f32.mrf.mxu0
      %v3243 = vadd.f32 %v3178, %v3242
      %3244 = vmatmul.f32.gmra.mxu0 %v3046
      %v3245 = vpop.f32.mrf.mxu0
      %v3246 = vadd.f32 %v3181, %v3245
      %3247 = vmatmul.f32.gmra.mxu0 %v3049
      %v3248 = vpop.f32.mrf.mxu0
      %v3249 = vadd.f32 %v3184, %v3248
      %3250 = vmatmul.f32.gmra.mxu0 %v3052
      %v3251 = vpop.f32.mrf.mxu0
      %v3252 = vadd.f32 %v3187, %v3251
      %3253 = vmatmul.f32.gmra.mxu0 %v3055
      %v3254 = vpop.f32.mrf.mxu0
      %v3255 = vadd.f32 %v3190, %v3254
      %3256 = vmatmul.f32.gmra.mxu0 %v3058
      %v3257 = vpop.f32.mrf.mxu0
      %v3258 = vadd.f32 %v3193, %v3257
      %3259 = vmatmul.f32.gmra.mxu0 %v3061
      %v3260 = vpop.f32.mrf.mxu0
      %v3261 = vadd.f32 %v3196, %v3260
      %3262 = vmatmul.f32.gmra.mxu0 %v3064
      %v3263 = vpop.f32.mrf.mxu0
      %v3264 = vadd.f32 %v3199, %v3263
      %3265 = vmatmul.f32.gmra.mxu0 %v3067
      %v3266 = vpop.f32.mrf.mxu0
      %v3267 = vadd.f32 %v3202, %v3266
      %3268 = vmatmul.f32.gmra.mxu0 %v3070
      %v3269 = vpop.f32.mrf.mxu0
      %v3270 = vadd.f32 %v3205, %v3269
      %3271 = vmatmul.f32.gmra.mxu0 %v3073
      %v3272 = vpop.f32.mrf.mxu0
      %v3273 = vadd.f32 %v3208, %v3272
      %3274 = vmatmul.f32.gmra.mxu0 %v3076
      %v3275 = vpop.f32.mrf.mxu0
      %v3276 = vadd.f32 %v3211, %v3275
      %3277 = vmatmul.f32.gmra.mxu0 %v3079
      %v3278 = vpop.f32.mrf.mxu0
      %v3279 = vadd.f32 %v3214, %v3278
      %3280 = vmatmul.f32.gmra.mxu0 %v3082
      %v3281 = vpop.f32.mrf.mxu0
      %v3282 = vadd.f32 %v3217, %v3281
      %3283 = vmatmul.f32.gmra.mxu0 %v3085
      %v3284 = vpop.f32.mrf.mxu0
      %v3285 = vadd.f32 %v3220, %v3284
      %3286 = vmatmul.f32.gmra.mxu0 %v3088
      %v3287 = vpop.f32.mrf.mxu0
      %v3288 = vadd.f32 %v3223, %v3287
      %3289 = vdwg.mxu0
      %3290 = vmatpush.msra.mxu0 %v3121
      %3291 = vmatpush.msra.mxu0 %v3119
      %3292 = vmatpush.msra.mxu0 %v3117
      %3293 = vmatpush.msra.mxu0 %v3115
      %3294 = vmatpush.msra.mxu0 %v3113
      %3295 = vmatpush.msra.mxu0 %v3111
      %3296 = vmatpush.msra.mxu0 %v3109
      %3297 = vmatpush.msra.mxu0 %v3107
      %3298 = vmatpush.msra.mxu0 %v3105
      %3299 = vmatpush.msra.mxu0 %v3103
      %3300 = vmatpush.msra.mxu0 %v3101
      %3301 = vmatpush.msra.mxu0 %v3099
      %3302 = vmatpush.msra.mxu0 %v3097
      %3303 = vmatpush.msra.mxu0 %v3095
      %3304 = vmatpush.msra.mxu0 %v3093
      %3305 = vmatpush.msra.mxu0 %v3091
      %3306 = vmatmul.f32.gmra.mxu0 %v2978
      %v3307 = vpop.f32.mrf.mxu0
      %v3308 = vadd.f32 %v3157, %v3307
      %3309 = vmatmul.f32.gmra.mxu0 %v2981
      %v3310 = vpop.f32.mrf.mxu0
      %v3311 = vadd.f32 %v3157, %v3310
      %3312 = vmatmul.f32.gmra.mxu0 %v2984
      %v3313 = vpop.f32.mrf.mxu0
      %v3314 = vadd.f32 %v3157, %v3313
      %3315 = vmatmul.f32.gmra.mxu0 %v2987
      %v3316 = vpop.f32.mrf.mxu0
      %v3317 = vadd.f32 %v3157, %v3316
      %3318 = vmatmul.f32.gmra.mxu0 %v2990
      %v3319 = vpop.f32.mrf.mxu0
      %v3320 = vadd.f32 %v3157, %v3319
      %3321 = vmatmul.f32.gmra.mxu0 %v2993
      %v3322 = vpop.f32.mrf.mxu0
      %v3323 = vadd.f32 %v3157, %v3322
      %3324 = vmatmul.f32.gmra.mxu0 %v2996
      %v3325 = vpop.f32.mrf.mxu0
      %v3326 = vadd.f32 %v3157, %v3325
      %3327 = vmatmul.f32.gmra.mxu0 %v2999
      %v3328 = vpop.f32.mrf.mxu0
      %v3329 = vadd.f32 %v3157, %v3328
      %3330 = vmatmul.f32.gmra.mxu0 %v3002
      %v3331 = vpop.f32.mrf.mxu0
      %v3332 = vadd.f32 %v3157, %v3331
      %3333 = vmatmul.f32.gmra.mxu0 %v3005
      %v3334 = vpop.f32.mrf.mxu0
      %v3335 = vadd.f32 %v3157, %v3334
      %3336 = vmatmul.f32.gmra.mxu0 %v3008
      %v3337 = vpop.f32.mrf.mxu0
      %v3338 = vadd.f32 %v3157, %v3337
      %3339 = vmatmul.f32.gmra.mxu0 %v3011
      %v3340 = vpop.f32.mrf.mxu0
      %v3341 = vadd.f32 %v3157, %v3340
      %3342 = vmatmul.f32.gmra.mxu0 %v3014
      %v3343 = vpop.f32.mrf.mxu0
      %v3344 = vadd.f32 %v3157, %v3343
      %3345 = vmatmul.f32.gmra.mxu0 %v3017
      %v3346 = vpop.f32.mrf.mxu0
      %v3347 = vadd.f32 %v3157, %v3346
      %3348 = vmatmul.f32.gmra.mxu0 %v3020
      %v3349 = vpop.f32.mrf.mxu0
      %v3350 = vadd.f32 %v3157, %v3349
      %3351 = vmatmul.f32.gmra.mxu0 %v3023
      %v3352 = vpop.f32.mrf.mxu0
      %v3353 = vadd.f32 %v3157, %v3352
      %3354 = vdwg.mxu0
      %3355 = vmatpush.msra.mxu0 %v3153
      %3356 = vmatpush.msra.mxu0 %v3151
      %3357 = vmatpush.msra.mxu0 %v3149
      %3358 = vmatpush.msra.mxu0 %v3147
      %3359 = vmatpush.msra.mxu0 %v3145
      %3360 = vmatpush.msra.mxu0 %v3143
      %3361 = vmatpush.msra.mxu0 %v3141
      %3362 = vmatpush.msra.mxu0 %v3139
      %3363 = vmatpush.msra.mxu0 %v3137
      %3364 = vmatpush.msra.mxu0 %v3135
      %3365 = vmatpush.msra.mxu0 %v3133
      %3366 = vmatpush.msra.mxu0 %v3131
      %3367 = vmatpush.msra.mxu0 %v3129
      %3368 = vmatpush.msra.mxu0 %v3127
      %3369 = vmatpush.msra.mxu0 %v3125
      %3370 = vmatpush.msra.mxu0 %v3123
      %3371 = vmatmul.f32.gmra.mxu0 %v3043
      %v3372 = vpop.f32.mrf.mxu0
      %v3373 = vadd.f32 %v3308, %v3372
      %3374 = vmatmul.f32.gmra.mxu0 %v3046
      %v3375 = vpop.f32.mrf.mxu0
      %v3376 = vadd.f32 %v3311, %v3375
      %3377 = vmatmul.f32.gmra.mxu0 %v3049
      %v3378 = vpop.f32.mrf.mxu0
      %v3379 = vadd.f32 %v3314, %v3378
      %3380 = vmatmul.f32.gmra.mxu0 %v3052
      %v3381 = vpop.f32.mrf.mxu0
      %v3382 = vadd.f32 %v3317, %v3381
      %3383 = vmatmul.f32.gmra.mxu0 %v3055
      %v3384 = vpop.f32.mrf.mxu0
      %v3385 = vadd.f32 %v3320, %v3384
      %3386 = vmatmul.f32.gmra.mxu0 %v3058
      %v3387 = vpop.f32.mrf.mxu0
      %v3388 = vadd.f32 %v3323, %v3387
      %3389 = vmatmul.f32.gmra.mxu0 %v3061
      %v3390 = vpop.f32.mrf.mxu0
      %v3391 = vadd.f32 %v3326, %v3390
      %3392 = vmatmul.f32.gmra.mxu0 %v3064
      %v3393 = vpop.f32.mrf.mxu0
      %v3394 = vadd.f32 %v3329, %v3393
      %3395 = vmatmul.f32.gmra.mxu0 %v3067
      %v3396 = vpop.f32.mrf.mxu0
      %v3397 = vadd.f32 %v3332, %v3396
      %3398 = vmatmul.f32.gmra.mxu0 %v3070
      %v3399 = vpop.f32.mrf.mxu0
      %v3400 = vadd.f32 %v3335, %v3399
      %3401 = vmatmul.f32.gmra.mxu0 %v3073
      %v3402 = vpop.f32.mrf.mxu0
      %v3403 = vadd.f32 %v3338, %v3402
      %3404 = vmatmul.f32.gmra.mxu0 %v3076
      %v3405 = vpop.f32.mrf.mxu0
      %v3406 = vadd.f32 %v3341, %v3405
      %3407 = vmatmul.f32.gmra.mxu0 %v3079
      %v3408 = vpop.f32.mrf.mxu0
      %v3409 = vadd.f32 %v3344, %v3408
      %3410 = vmatmul.f32.gmra.mxu0 %v3082
      %v3411 = vpop.f32.mrf.mxu0
      %v3412 = vadd.f32 %v3347, %v3411
      %3413 = vmatmul.f32.gmra.mxu0 %v3085
      %v3414 = vpop.f32.mrf.mxu0
      %v3415 = vadd.f32 %v3350, %v3414
      %3416 = vmatmul.f32.gmra.mxu0 %v3088
      %v3417 = vpop.f32.mrf.mxu0
      %v3418 = vadd.f32 %v3353, %v3417
      %3419 = vdwg.mxu0
      %v3420 = vmax.f32 %v3243, 0.0
      %v3421 = vmax.f32 %v3373, 0.0
      %v3422 = vmax.f32 %v3246, 0.0
      %v3423 = vmax.f32 %v3376, 0.0
      %v3424 = vmax.f32 %v3249, 0.0
      %v3425 = vmax.f32 %v3379, 0.0
      %v3426 = vmax.f32 %v3252, 0.0
      %v3427 = vmax.f32 %v3382, 0.0
      %v3428 = vmax.f32 %v3255, 0.0
      %v3429 = vmax.f32 %v3385, 0.0
      %v3430 = vmax.f32 %v3258, 0.0
      %v3431 = vmax.f32 %v3388, 0.0
      %v3432 = vmax.f32 %v3261, 0.0
      %v3433 = vmax.f32 %v3391, 0.0
      %v3434 = vmax.f32 %v3264, 0.0
      %v3435 = vmax.f32 %v3394, 0.0
      %v3436 = vmax.f32 %v3267, 0.0
      %v3437 = vmax.f32 %v3397, 0.0
      %v3438 = vmax.f32 %v3270, 0.0
      %v3439 = vmax.f32 %v3400, 0.0
      %v3440 = vmax.f32 %v3273, 0.0
      %v3441 = vmax.f32 %v3403, 0.0
      %v3442 = vmax.f32 %v3276, 0.0
      %v3443 = vmax.f32 %v3406, 0.0
      %v3444 = vmax.f32 %v3279, 0.0
      %v3445 = vmax.f32 %v3409, 0.0
      %v3446 = vmax.f32 %v3282, 0.0
      %v3447 = vmax.f32 %v3412, 0.0
      %v3448 = vmax.f32 %v3285, 0.0
      %v3449 = vmax.f32 %v3415, 0.0
      %v3450 = vmax.f32 %v3288, 0.0
      %v3451 = vmax.f32 %v3418, 0.0
      %v3452 = vadd.f32 %v3420, %v2928
      %v3453 = vadd.f32 %v3421, %v2929
      %v3454 = vadd.f32 %v3422, %v2930
      %v3455 = vadd.f32 %v3423, %v2931
      %v3456 = vadd.f32 %v3424, %v2932
      %v3457 = vadd.f32 %v3425, %v2933
      %v3458 = vadd.f32 %v3426, %v2934
      %v3459 = vadd.f32 %v3427, %v2935
      %v3460 = vadd.f32 %v3428, %v2936
      %v3461 = vadd.f32 %v3429, %v2937
      %v3462 = vadd.f32 %v3430, %v2938
      %v3463 = vadd.f32 %v3431, %v2939
      %v3464 = vadd.f32 %v3432, %v2940
      %v3465 = vadd.f32 %v3433, %v2941
      %v3466 = vadd.f32 %v3434, %v2942
      %v3467 = vadd.f32 %v3435, %v2943
      %v3468 = vadd.f32 %v3436, %v2944
      %v3469 = vadd.f32 %v3437, %v2945
      %v3470 = vadd.f32 %v3438, %v2946
      %v3471 = vadd.f32 %v3439, %v2947
      %v3472 = vadd.f32 %v3440, %v2948
      %v3473 = vadd.f32 %v3441, %v2949
      %v3474 = vadd.f32 %v3442, %v2950
      %v3475 = vadd.f32 %v3443, %v2951
      %v3476 = vadd.f32 %v3444, %v2952
      %v3477 = vadd.f32 %v3445, %v2953
      %v3478 = vadd.f32 %v3446, %v2954
      %v3479 = vadd.f32 %v3447, %v2955
      %v3480 = vadd.f32 %v3448, %v2956
      %v3481 = vadd.f32 %v3449, %v2957
      %v3482 = vadd.f32 %v3450, %v2958
      %v3483 = vadd.f32 %v3451, %v2959
      %3484 = vmatpush.msra.mxu0 %v3482
      %3485 = vmatpush.msra.mxu0 %v3480
      %3486 = vmatpush.msra.mxu0 %v3478
      %3487 = vmatpush.msra.mxu0 %v3476
      %3488 = vmatpush.msra.mxu0 %v3474
      %3489 = vmatpush.msra.mxu0 %v3472
      %3490 = vmatpush.msra.mxu0 %v3470
      %3491 = vmatpush.msra.mxu0 %v3468
      %3492 = vmatpush.msra.mxu0 %v3466
      %3493 = vmatpush.msra.mxu0 %v3464
      %3494 = vmatpush.msra.mxu0 %v3462
      %3495 = vmatpush.msra.mxu0 %v3460
      %3496 = vmatpush.msra.mxu0 %v3458
      %3497 = vmatpush.msra.mxu0 %v3456
      %3498 = vmatpush.msra.mxu0 %v3454
      %3499 = vmatpush.msra.mxu0 %v3452
      %3500 = vmatmul.f32.gmra.mxu0 %v903
      %v3501 = vpop.f32.mrf.mxu0
      %v3502 = vadd.f32 0.0, %v3501
      %3503 = vmatmul.f32.gmra.mxu0 %v904
      %v3504 = vpop.f32.mrf.mxu0
      %v3505 = vadd.f32 0.0, %v3504
      %3506 = vmatmul.f32.gmra.mxu0 %v905
      %v3507 = vpop.f32.mrf.mxu0
      %v3508 = vadd.f32 0.0, %v3507
      %3509 = vmatmul.f32.gmra.mxu0 %v906
      %v3510 = vpop.f32.mrf.mxu0
      %v3511 = vadd.f32 0.0, %v3510
      %3512 = vmatmul.f32.gmra.mxu0 %v907
      %v3513 = vpop.f32.mrf.mxu0
      %v3514 = vadd.f32 0.0, %v3513
      %3515 = vmatmul.f32.gmra.mxu0 %v908
      %v3516 = vpop.f32.mrf.mxu0
      %v3517 = vadd.f32 0.0, %v3516
      %3518 = vmatmul.f32.gmra.mxu0 %v909
      %v3519 = vpop.f32.mrf.mxu0
      %v3520 = vadd.f32 0.0, %v3519
      %3521 = vmatmul.f32.gmra.mxu0 %v910
      %v3522 = vpop.f32.mrf.mxu0
      %v3523 = vadd.f32 0.0, %v3522
      %3524 = vmatmul.f32.gmra.mxu0 %v911
      %v3525 = vpop.f32.mrf.mxu0
      %v3526 = vadd.f32 0.0, %v3525
      %3527 = vmatmul.f32.gmra.mxu0 %v912
      %v3528 = vpop.f32.mrf.mxu0
      %v3529 = vadd.f32 0.0, %v3528
      %3530 = vmatmul.f32.gmra.mxu0 %v913
      %v3531 = vpop.f32.mrf.mxu0
      %v3532 = vadd.f32 0.0, %v3531
      %3533 = vmatmul.f32.gmra.mxu0 %v914
      %v3534 = vpop.f32.mrf.mxu0
      %v3535 = vadd.f32 0.0, %v3534
      %3536 = vmatmul.f32.gmra.mxu0 %v915
      %v3537 = vpop.f32.mrf.mxu0
      %v3538 = vadd.f32 0.0, %v3537
      %3539 = vmatmul.f32.gmra.mxu0 %v916
      %v3540 = vpop.f32.mrf.mxu0
      %v3541 = vadd.f32 0.0, %v3540
      %3542 = vmatmul.f32.gmra.mxu0 %v917
      %v3543 = vpop.f32.mrf.mxu0
      %v3544 = vadd.f32 0.0, %v3543
      %3545 = vmatmul.f32.gmra.mxu0 %v918
      %v3546 = vpop.f32.mrf.mxu0
      %v3547 = vadd.f32 0.0, %v3546
      %3548 = vdwg.mxu0
      %3549 = vmatpush.msra.mxu0 %v3483
      %3550 = vmatpush.msra.mxu0 %v3481
      %3551 = vmatpush.msra.mxu0 %v3479
      %3552 = vmatpush.msra.mxu0 %v3477
      %3553 = vmatpush.msra.mxu0 %v3475
      %3554 = vmatpush.msra.mxu0 %v3473
      %3555 = vmatpush.msra.mxu0 %v3471
      %3556 = vmatpush.msra.mxu0 %v3469
      %3557 = vmatpush.msra.mxu0 %v3467
      %3558 = vmatpush.msra.mxu0 %v3465
      %3559 = vmatpush.msra.mxu0 %v3463
      %3560 = vmatpush.msra.mxu0 %v3461
      %3561 = vmatpush.msra.mxu0 %v3459
      %3562 = vmatpush.msra.mxu0 %v3457
      %3563 = vmatpush.msra.mxu0 %v3455
      %3564 = vmatpush.msra.mxu0 %v3453
      %3565 = vmatmul.f32.gmra.mxu0 %v903
      %v3566 = vpop.f32.mrf.mxu0
      %v3567 = vadd.f32 0.0, %v3566
      %3568 = vmatmul.f32.gmra.mxu0 %v904
      %v3569 = vpop.f32.mrf.mxu0
      %v3570 = vadd.f32 0.0, %v3569
      %3571 = vmatmul.f32.gmra.mxu0 %v905
      %v3572 = vpop.f32.mrf.mxu0
      %v3573 = vadd.f32 0.0, %v3572
      %3574 = vmatmul.f32.gmra.mxu0 %v906
      %v3575 = vpop.f32.mrf.mxu0
      %v3576 = vadd.f32 0.0, %v3575
      %3577 = vmatmul.f32.gmra.mxu0 %v907
      %v3578 = vpop.f32.mrf.mxu0
      %v3579 = vadd.f32 0.0, %v3578
      %3580 = vmatmul.f32.gmra.mxu0 %v908
      %v3581 = vpop.f32.mrf.mxu0
      %v3582 = vadd.f32 0.0, %v3581
      %3583 = vmatmul.f32.gmra.mxu0 %v909
      %v3584 = vpop.f32.mrf.mxu0
      %v3585 = vadd.f32 0.0, %v3584
      %3586 = vmatmul.f32.gmra.mxu0 %v910
      %v3587 = vpop.f32.mrf.mxu0
      %v3588 = vadd.f32 0.0, %v3587
      %3589 = vmatmul.f32.gmra.mxu0 %v911
      %v3590 = vpop.f32.mrf.mxu0
      %v3591 = vadd.f32 0.0, %v3590
      %3592 = vmatmul.f32.gmra.mxu0 %v912
      %v3593 = vpop.f32.mrf.mxu0
      %v3594 = vadd.f32 0.0, %v3593
      %3595 = vmatmul.f32.gmra.mxu0 %v913
      %v3596 = vpop.f32.mrf.mxu0
      %v3597 = vadd.f32 0.0, %v3596
      %3598 = vmatmul.f32.gmra.mxu0 %v914
      %v3599 = vpop.f32.mrf.mxu0
      %v3600 = vadd.f32 0.0, %v3599
      %3601 = vmatmul.f32.gmra.mxu0 %v915
      %v3602 = vpop.f32.mrf.mxu0
      %v3603 = vadd.f32 0.0, %v3602
      %3604 = vmatmul.f32.gmra.mxu0 %v916
      %v3605 = vpop.f32.mrf.mxu0
      %v3606 = vadd.f32 0.0, %v3605
      %3607 = vmatmul.f32.gmra.mxu0 %v917
      %v3608 = vpop.f32.mrf.mxu0
      %v3609 = vadd.f32 0.0, %v3608
      %3610 = vmatmul.f32.gmra.mxu0 %v918
      %v3611 = vpop.f32.mrf.mxu0
      %v3612 = vadd.f32 0.0, %v3611
      %3613 = vdwg.mxu0
      %v3614 = vld [vmem:[%s23] sm:$0xff]
      %v3615 = vld [vmem:[%s23 + $0x8] sm:$0xff]
      %v3616 = vld [vmem:[%s23 + $0x10] sm:$0xff]
      %v3617 = vld [vmem:[%s23 + $0x18] sm:$0xff]
      %v3618 = vld [vmem:[%s23 + $0x20] sm:$0xff]
      %v3619 = vld [vmem:[%s23 + $0x28] sm:$0xff]
      %v3620 = vld [vmem:[%s23 + $0x30] sm:$0xff]
      %v3621 = vld [vmem:[%s23 + $0x38] sm:$0xff]
      %v3622 = vld [vmem:[%s23 + $0x40] sm:$0xff]
      %v3623 = vld [vmem:[%s23 + $0x48] sm:$0xff]
      %v3624 = vld [vmem:[%s23 + $0x50] sm:$0xff]
      %v3625 = vld [vmem:[%s23 + $0x58] sm:$0xff]
      %v3626 = vld [vmem:[%s23 + $0x60] sm:$0xff]
      %v3627 = vld [vmem:[%s23 + $0x68] sm:$0xff]
      %v3628 = vld [vmem:[%s23 + $0x70] sm:$0xff]
      %v3629 = vld [vmem:[%s23 + $0x78] sm:$0xff]
      %v3630 = vld [vmem:[%s23 + $0x80] sm:$0xff]
      %v3631 = vld [vmem:[%s23 + $0x88] sm:$0xff]
      %v3632 = vld [vmem:[%s23 + $0x90] sm:$0xff]
      %v3633 = vld [vmem:[%s23 + $0x98] sm:$0xff]
      %v3634 = vld [vmem:[%s23 + $0xa0] sm:$0xff]
      %v3635 = vld [vmem:[%s23 + $0xa8] sm:$0xff]
      %v3636 = vld [vmem:[%s23 + $0xb0] sm:$0xff]
      %v3637 = vld [vmem:[%s23 + $0xb8] sm:$0xff]
      %v3638 = vld [vmem:[%s23 + $0xc0] sm:$0xff]
      %v3639 = vld [vmem:[%s23 + $0xc8] sm:$0xff]
      %v3640 = vld [vmem:[%s23 + $0xd0] sm:$0xff]
      %v3641 = vld [vmem:[%s23 + $0xd8] sm:$0xff]
      %v3642 = vld [vmem:[%s23 + $0xe0] sm:$0xff]
      %v3643 = vld [vmem:[%s23 + $0xe8] sm:$0xff]
      %v3644 = vld [vmem:[%s23 + $0xf0] sm:$0xff]
      %v3645 = vld [vmem:[%s23 + $0xf8] sm:$0xff]
      %v3646 = vld [vmem:[%s23 + $0x100] sm:$0xff]
      %v3647 = vld [vmem:[%s23 + $0x108] sm:$0xff]
      %v3648 = vld [vmem:[%s23 + $0x110] sm:$0xff]
      %v3649 = vld [vmem:[%s23 + $0x118] sm:$0xff]
      %v3650 = vld [vmem:[%s23 + $0x120] sm:$0xff]
      %v3651 = vld [vmem:[%s23 + $0x128] sm:$0xff]
      %v3652 = vld [vmem:[%s23 + $0x130] sm:$0xff]
      %v3653 = vld [vmem:[%s23 + $0x138] sm:$0xff]
      %v3654 = vld [vmem:[%s23 + $0x140] sm:$0xff]
      %v3655 = vld [vmem:[%s23 + $0x148] sm:$0xff]
      %v3656 = vld [vmem:[%s23 + $0x150] sm:$0xff]
      %v3657 = vld [vmem:[%s23 + $0x158] sm:$0xff]
      %v3658 = vld [vmem:[%s23 + $0x160] sm:$0xff]
      %v3659 = vld [vmem:[%s23 + $0x168] sm:$0xff]
      %v3660 = vld [vmem:[%s23 + $0x170] sm:$0xff]
      %v3661 = vld [vmem:[%s23 + $0x178] sm:$0xff]
      %v3662 = vld [vmem:[%s23 + $0x180] sm:$0xff]
      %v3663 = vld [vmem:[%s23 + $0x188] sm:$0xff]
      %v3664 = vld [vmem:[%s23 + $0x190] sm:$0xff]
      %v3665 = vld [vmem:[%s23 + $0x198] sm:$0xff]
      %v3666 = vld [vmem:[%s23 + $0x1a0] sm:$0xff]
      %v3667 = vld [vmem:[%s23 + $0x1a8] sm:$0xff]
      %v3668 = vld [vmem:[%s23 + $0x1b0] sm:$0xff]
      %v3669 = vld [vmem:[%s23 + $0x1b8] sm:$0xff]
      %v3670 = vld [vmem:[%s23 + $0x1c0] sm:$0xff]
      %v3671 = vld [vmem:[%s23 + $0x1c8] sm:$0xff]
      %v3672 = vld [vmem:[%s23 + $0x1d0] sm:$0xff]
      %v3673 = vld [vmem:[%s23 + $0x1d8] sm:$0xff]
      %v3674 = vld [vmem:[%s23 + $0x1e0] sm:$0xff]
      %v3675 = vld [vmem:[%s23 + $0x1e8] sm:$0xff]
      %v3676 = vld [vmem:[%s23 + $0x1f0] sm:$0xff]
      %v3677 = vld [vmem:[%s23 + $0x1f8] sm:$0xff]
      %v3678 = vld [vmem:[%s47] sm:$0x3]
      %v3680 = vperm.slane %v3678, 0
      %v3681 = vperm.slane %v3678, 1
      %3684 = vmatpush.msra.mxu0 %v3644
      %3685 = vmatpush.msra.mxu0 %v3642
      %3686 = vmatpush.msra.mxu0 %v3640
      %3687 = vmatpush.msra.mxu0 %v3638
      %3688 = vmatpush.msra.mxu0 %v3636
      %3689 = vmatpush.msra.mxu0 %v3634
      %3690 = vmatpush.msra.mxu0 %v3632
      %3691 = vmatpush.msra.mxu0 %v3630
      %3692 = vmatpush.msra.mxu0 %v3628
      %3693 = vmatpush.msra.mxu0 %v3626
      %3694 = vmatpush.msra.mxu0 %v3624
      %3695 = vmatpush.msra.mxu0 %v3622
      %3696 = vmatpush.msra.mxu0 %v3620
      %3697 = vmatpush.msra.mxu0 %v3618
      %3698 = vmatpush.msra.mxu0 %v3616
      %3699 = vmatpush.msra.mxu0 %v3614
      %3700 = vmatmul.f32.gmra.mxu0 %v3502
      %v3701 = vpop.f32.mrf.mxu0
      %v3702 = vadd.f32 %v3680, %v3701
      %3703 = vmatmul.f32.gmra.mxu0 %v3505
      %v3704 = vpop.f32.mrf.mxu0
      %v3705 = vadd.f32 %v3680, %v3704
      %3706 = vmatmul.f32.gmra.mxu0 %v3508
      %v3707 = vpop.f32.mrf.mxu0
      %v3708 = vadd.f32 %v3680, %v3707
      %3709 = vmatmul.f32.gmra.mxu0 %v3511
      %v3710 = vpop.f32.mrf.mxu0
      %v3711 = vadd.f32 %v3680, %v3710
      %3712 = vmatmul.f32.gmra.mxu0 %v3514
      %v3713 = vpop.f32.mrf.mxu0
      %v3714 = vadd.f32 %v3680, %v3713
      %3715 = vmatmul.f32.gmra.mxu0 %v3517
      %v3716 = vpop.f32.mrf.mxu0
      %v3717 = vadd.f32 %v3680, %v3716
      %3718 = vmatmul.f32.gmra.mxu0 %v3520
      %v3719 = vpop.f32.mrf.mxu0
      %v3720 = vadd.f32 %v3680, %v3719
      %3721 = vmatmul.f32.gmra.mxu0 %v3523
      %v3722 = vpop.f32.mrf.mxu0
      %v3723 = vadd.f32 %v3680, %v3722
      %3724 = vmatmul.f32.gmra.mxu0 %v3526
      %v3725 = vpop.f32.mrf.mxu0
      %v3726 = vadd.f32 %v3680, %v3725
      %3727 = vmatmul.f32.gmra.mxu0 %v3529
      %v3728 = vpop.f32.mrf.mxu0
      %v3729 = vadd.f32 %v3680, %v3728
      %3730 = vmatmul.f32.gmra.mxu0 %v3532
      %v3731 = vpop.f32.mrf.mxu0
      %v3732 = vadd.f32 %v3680, %v3731
      %3733 = vmatmul.f32.gmra.mxu0 %v3535
      %v3734 = vpop.f32.mrf.mxu0
      %v3735 = vadd.f32 %v3680, %v3734
      %3736 = vmatmul.f32.gmra.mxu0 %v3538
      %v3737 = vpop.f32.mrf.mxu0
      %v3738 = vadd.f32 %v3680, %v3737
      %3739 = vmatmul.f32.gmra.mxu0 %v3541
      %v3740 = vpop.f32.mrf.mxu0
      %v3741 = vadd.f32 %v3680, %v3740
      %3742 = vmatmul.f32.gmra.mxu0 %v3544
      %v3743 = vpop.f32.mrf.mxu0
      %v3744 = vadd.f32 %v3680, %v3743
      %3745 = vmatmul.f32.gmra.mxu0 %v3547
      %v3746 = vpop.f32.mrf.mxu0
      %v3747 = vadd.f32 %v3680, %v3746
      %3748 = vdwg.mxu0
      %3749 = vmatpush.msra.mxu0 %v3676
      %3750 = vmatpush.msra.mxu0 %v3674
      %3751 = vmatpush.msra.mxu0 %v3672
      %3752 = vmatpush.msra.mxu0 %v3670
      %3753 = vmatpush.msra.mxu0 %v3668
      %3754 = vmatpush.msra.mxu0 %v3666
      %3755 = vmatpush.msra.mxu0 %v3664
      %3756 = vmatpush.msra.mxu0 %v3662
      %3757 = vmatpush.msra.mxu0 %v3660
      %3758 = vmatpush.msra.mxu0 %v3658
      %3759 = vmatpush.msra.mxu0 %v3656
      %3760 = vmatpush.msra.mxu0 %v3654
      %3761 = vmatpush.msra.mxu0 %v3652
      %3762 = vmatpush.msra.mxu0 %v3650
      %3763 = vmatpush.msra.mxu0 %v3648
      %3764 = vmatpush.msra.mxu0 %v3646
      %3765 = vmatmul.f32.gmra.mxu0 %v3567
      %v3766 = vpop.f32.mrf.mxu0
      %v3767 = vadd.f32 %v3702, %v3766
      %3768 = vmatmul.f32.gmra.mxu0 %v3570
      %v3769 = vpop.f32.mrf.mxu0
      %v3770 = vadd.f32 %v3705, %v3769
      %3771 = vmatmul.f32.gmra.mxu0 %v3573
      %v3772 = vpop.f32.mrf.mxu0
      %v3773 = vadd.f32 %v3708, %v3772
      %3774 = vmatmul.f32.gmra.mxu0 %v3576
      %v3775 = vpop.f32.mrf.mxu0
      %v3776 = vadd.f32 %v3711, %v3775
      %3777 = vmatmul.f32.gmra.mxu0 %v3579
      %v3778 = vpop.f32.mrf.mxu0
      %v3779 = vadd.f32 %v3714, %v3778
      %3780 = vmatmul.f32.gmra.mxu0 %v3582
      %v3781 = vpop.f32.mrf.mxu0
      %v3782 = vadd.f32 %v3717, %v3781
      %3783 = vmatmul.f32.gmra.mxu0 %v3585
      %v3784 = vpop.f32.mrf.mxu0
      %v3785 = vadd.f32 %v3720, %v3784
      %3786 = vmatmul.f32.gmra.mxu0 %v3588
      %v3787 = vpop.f32.mrf.mxu0
      %v3788 = vadd.f32 %v3723, %v3787
      %3789 = vmatmul.f32.gmra.mxu0 %v3591
      %v3790 = vpop.f32.mrf.mxu0
      %v3791 = vadd.f32 %v3726, %v3790
      %3792 = vmatmul.f32.gmra.mxu0 %v3594
      %v3793 = vpop.f32.mrf.mxu0
      %v3794 = vadd.f32 %v3729, %v3793
      %3795 = vmatmul.f32.gmra.mxu0 %v3597
      %v3796 = vpop.f32.mrf.mxu0
      %v3797 = vadd.f32 %v3732, %v3796
      %3798 = vmatmul.f32.gmra.mxu0 %v3600
      %v3799 = vpop.f32.mrf.mxu0
      %v3800 = vadd.f32 %v3735, %v3799
      %3801 = vmatmul.f32.gmra.mxu0 %v3603
      %v3802 = vpop.f32.mrf.mxu0
      %v3803 = vadd.f32 %v3738, %v3802
      %3804 = vmatmul.f32.gmra.mxu0 %v3606
      %v3805 = vpop.f32.mrf.mxu0
      %v3806 = vadd.f32 %v3741, %v3805
      %3807 = vmatmul.f32.gmra.mxu0 %v3609
      %v3808 = vpop.f32.mrf.mxu0
      %v3809 = vadd.f32 %v3744, %v3808
      %3810 = vmatmul.f32.gmra.mxu0 %v3612
      %v3811 = vpop.f32.mrf.mxu0
      %v3812 = vadd.f32 %v3747, %v3811
      %3813 = vdwg.mxu0
      %3814 = vmatpush.msra.mxu0 %v3645
      %3815 = vmatpush.msra.mxu0 %v3643
      %3816 = vmatpush.msra.mxu0 %v3641
      %3817 = vmatpush.msra.mxu0 %v3639
      %3818 = vmatpush.msra.mxu0 %v3637
      %3819 = vmatpush.msra.mxu0 %v3635
      %3820 = vmatpush.msra.mxu0 %v3633
      %3821 = vmatpush.msra.mxu0 %v3631
      %3822 = vmatpush.msra.mxu0 %v3629
      %3823 = vmatpush.msra.mxu0 %v3627
      %3824 = vmatpush.msra.mxu0 %v3625
      %3825 = vmatpush.msra.mxu0 %v3623
      %3826 = vmatpush.msra.mxu0 %v3621
      %3827 = vmatpush.msra.mxu0 %v3619
      %3828 = vmatpush.msra.mxu0 %v3617
      %3829 = vmatpush.msra.mxu0 %v3615
      %3830 = vmatmul.f32.gmra.mxu0 %v3502
      %v3831 = vpop.f32.mrf.mxu0
      %v3832 = vadd.f32 %v3681, %v3831
      %3833 = vmatmul.f32.gmra.mxu0 %v3505
      %v3834 = vpop.f32.mrf.mxu0
      %v3835 = vadd.f32 %v3681, %v3834
      %3836 = vmatmul.f32.gmra.mxu0 %v3508
      %v3837 = vpop.f32.mrf.mxu0
      %v3838 = vadd.f32 %v3681, %v3837
      %3839 = vmatmul.f32.gmra.mxu0 %v3511
      %v3840 = vpop.f32.mrf.mxu0
      %v3841 = vadd.f32 %v3681, %v3840
      %3842 = vmatmul.f32.gmra.mxu0 %v3514
      %v3843 = vpop.f32.mrf.mxu0
      %v3844 = vadd.f32 %v3681, %v3843
      %3845 = vmatmul.f32.gmra.mxu0 %v3517
      %v3846 = vpop.f32.mrf.mxu0
      %v3847 = vadd.f32 %v3681, %v3846
      %3848 = vmatmul.f32.gmra.mxu0 %v3520
      %v3849 = vpop.f32.mrf.mxu0
      %v3850 = vadd.f32 %v3681, %v3849
      %3851 = vmatmul.f32.gmra.mxu0 %v3523
      %v3852 = vpop.f32.mrf.mxu0
      %v3853 = vadd.f32 %v3681, %v3852
      %3854 = vmatmul.f32.gmra.mxu0 %v3526
      %v3855 = vpop.f32.mrf.mxu0
      %v3856 = vadd.f32 %v3681, %v3855
      %3857 = vmatmul.f32.gmra.mxu0 %v3529
      %v3858 = vpop.f32.mrf.mxu0
      %v3859 = vadd.f32 %v3681, %v3858
      %3860 = vmatmul.f32.gmra.mxu0 %v3532
      %v3861 = vpop.f32.mrf.mxu0
      %v3862 = vadd.f32 %v3681, %v3861
      %3863 = vmatmul.f32.gmra.mxu0 %v3535
      %v3864 = vpop.f32.mrf.mxu0
      %v3865 = vadd.f32 %v3681, %v3864
      %3866 = vmatmul.f32.gmra.mxu0 %v3538
      %v3867 = vpop.f32.mrf.mxu0
      %v3868 = vadd.f32 %v3681, %v3867
      %3869 = vmatmul.f32.gmra.mxu0 %v3541
      %v3870 = vpop.f32.mrf.mxu0
      %v3871 = vadd.f32 %v3681, %v3870
      %3872 = vmatmul.f32.gmra.mxu0 %v3544
      %v3873 = vpop.f32.mrf.mxu0
      %v3874 = vadd.f32 %v3681, %v3873
      %3875 = vmatmul.f32.gmra.mxu0 %v3547
      %v3876 = vpop.f32.mrf.mxu0
      %v3877 = vadd.f32 %v3681, %v3876
      %3878 = vdwg.mxu0
      %3879 = vmatpush.msra.mxu0 %v3677
      %3880 = vmatpush.msra.mxu0 %v3675
      %3881 = vmatpush.msra.mxu0 %v3673
      %3882 = vmatpush.msra.mxu0 %v3671
      %3883 = vmatpush.msra.mxu0 %v3669
      %3884 = vmatpush.msra.mxu0 %v3667
      %3885 = vmatpush.msra.mxu0 %v3665
      %3886 = vmatpush.msra.mxu0 %v3663
      %3887 = vmatpush.msra.mxu0 %v3661
      %3888 = vmatpush.msra.mxu0 %v3659
      %3889 = vmatpush.msra.mxu0 %v3657
      %3890 = vmatpush.msra.mxu0 %v3655
      %3891 = vmatpush.msra.mxu0 %v3653
      %3892 = vmatpush.msra.mxu0 %v3651
      %3893 = vmatpush.msra.mxu0 %v3649
      %3894 = vmatpush.msra.mxu0 %v3647
      %3895 = vmatmul.f32.gmra.mxu0 %v3567
      %v3896 = vpop.f32.mrf.mxu0
      %v3897 = vadd.f32 %v3832, %v3896
      %3898 = vmatmul.f32.gmra.mxu0 %v3570
      %v3899 = vpop.f32.mrf.mxu0
      %v3900 = vadd.f32 %v3835, %v3899
      %3901 = vmatmul.f32.gmra.mxu0 %v3573
      %v3902 = vpop.f32.mrf.mxu0
      %v3903 = vadd.f32 %v3838, %v3902
      %3904 = vmatmul.f32.gmra.mxu0 %v3576
      %v3905 = vpop.f32.mrf.mxu0
      %v3906 = vadd.f32 %v3841, %v3905
      %3907 = vmatmul.f32.gmra.mxu0 %v3579
      %v3908 = vpop.f32.mrf.mxu0
      %v3909 = vadd.f32 %v3844, %v3908
      %3910 = vmatmul.f32.gmra.mxu0 %v3582
      %v3911 = vpop.f32.mrf.mxu0
      %v3912 = vadd.f32 %v3847, %v3911
      %3913 = vmatmul.f32.gmra.mxu0 %v3585
      %v3914 = vpop.f32.mrf.mxu0
      %v3915 = vadd.f32 %v3850, %v3914
      %3916 = vmatmul.f32.gmra.mxu0 %v3588
      %v3917 = vpop.f32.mrf.mxu0
      %v3918 = vadd.f32 %v3853, %v3917
      %3919 = vmatmul.f32.gmra.mxu0 %v3591
      %v3920 = vpop.f32.mrf.mxu0
      %v3921 = vadd.f32 %v3856, %v3920
      %3922 = vmatmul.f32.gmra.mxu0 %v3594
      %v3923 = vpop.f32.mrf.mxu0
      %v3924 = vadd.f32 %v3859, %v3923
      %3925 = vmatmul.f32.gmra.mxu0 %v3597
      %v3926 = vpop.f32.mrf.mxu0
      %v3927 = vadd.f32 %v3862, %v3926
      %3928 = vmatmul.f32.gmra.mxu0 %v3600
      %v3929 = vpop.f32.mrf.mxu0
      %v3930 = vadd.f32 %v3865, %v3929
      %3931 = vmatmul.f32.gmra.mxu0 %v3603
      %v3932 = vpop.f32.mrf.mxu0
      %v3933 = vadd.f32 %v3868, %v3932
      %3934 = vmatmul.f32.gmra.mxu0 %v3606
      %v3935 = vpop.f32.mrf.mxu0
      %v3936 = vadd.f32 %v3871, %v3935
      %3937 = vmatmul.f32.gmra.mxu0 %v3609
      %v3938 = vpop.f32.mrf.mxu0
      %v3939 = vadd.f32 %v3874, %v3938
      %3940 = vmatmul.f32.gmra.mxu0 %v3612
      %v3941 = vpop.f32.mrf.mxu0
      %v3942 = vadd.f32 %v3877, %v3941
      %3943 = vdwg.mxu0
      %v3944 = vmax.f32 %v3767, 0.0
      %v3945 = vmax.f32 %v3897, 0.0
      %v3946 = vmax.f32 %v3770, 0.0
      %v3947 = vmax.f32 %v3900, 0.0
      %v3948 = vmax.f32 %v3773, 0.0
      %v3949 = vmax.f32 %v3903, 0.0
      %v3950 = vmax.f32 %v3776, 0.0
      %v3951 = vmax.f32 %v3906, 0.0
      %v3952 = vmax.f32 %v3779, 0.0
      %v3953 = vmax.f32 %v3909, 0.0
      %v3954 = vmax.f32 %v3782, 0.0
      %v3955 = vmax.f32 %v3912, 0.0
      %v3956 = vmax.f32 %v3785, 0.0
      %v3957 = vmax.f32 %v3915, 0.0
      %v3958 = vmax.f32 %v3788, 0.0
      %v3959 = vmax.f32 %v3918, 0.0
      %v3960 = vmax.f32 %v3791, 0.0
      %v3961 = vmax.f32 %v3921, 0.0
      %v3962 = vmax.f32 %v3794, 0.0
      %v3963 = vmax.f32 %v3924, 0.0
      %v3964 = vmax.f32 %v3797, 0.0
      %v3965 = vmax.f32 %v3927, 0.0
      %v3966 = vmax.f32 %v3800, 0.0
      %v3967 = vmax.f32 %v3930, 0.0
      %v3968 = vmax.f32 %v3803, 0.0
      %v3969 = vmax.f32 %v3933, 0.0
      %v3970 = vmax.f32 %v3806, 0.0
      %v3971 = vmax.f32 %v3936, 0.0
      %v3972 = vmax.f32 %v3809, 0.0
      %v3973 = vmax.f32 %v3939, 0.0
      %v3974 = vmax.f32 %v3812, 0.0
      %v3975 = vmax.f32 %v3942, 0.0
      %3976 = vmatpush.msra.mxu0 %v3974
      %3977 = vmatpush.msra.mxu0 %v3972
      %3978 = vmatpush.msra.mxu0 %v3970
      %3979 = vmatpush.msra.mxu0 %v3968
      %3980 = vmatpush.msra.mxu0 %v3966
      %3981 = vmatpush.msra.mxu0 %v3964
      %3982 = vmatpush.msra.mxu0 %v3962
      %3983 = vmatpush.msra.mxu0 %v3960
      %3984 = vmatpush.msra.mxu0 %v3958
      %3985 = vmatpush.msra.mxu0 %v3956
      %3986 = vmatpush.msra.mxu0 %v3954
      %3987 = vmatpush.msra.mxu0 %v3952
      %3988 = vmatpush.msra.mxu0 %v3950
      %3989 = vmatpush.msra.mxu0 %v3948
      %3990 = vmatpush.msra.mxu0 %v3946
      %3991 = vmatpush.msra.mxu0 %v3944
      %3992 = vmatmul.f32.gmra.mxu0 %v903
      %v3993 = vpop.f32.mrf.mxu0
      %v3994 = vadd.f32 0.0, %v3993
      %3995 = vmatmul.f32.gmra.mxu0 %v904
      %v3996 = vpop.f32.mrf.mxu0
      %v3997 = vadd.f32 0.0, %v3996
      %3998 = vmatmul.f32.gmra.mxu0 %v905
      %v3999 = vpop.f32.mrf.mxu0
      %v4000 = vadd.f32 0.0, %v3999
      %4001 = vmatmul.f32.gmra.mxu0 %v906
      %v4002 = vpop.f32.mrf.mxu0
      %v4003 = vadd.f32 0.0, %v4002
      %4004 = vmatmul.f32.gmra.mxu0 %v907
      %v4005 = vpop.f32.mrf.mxu0
      %v4006 = vadd.f32 0.0, %v4005
      %4007 = vmatmul.f32.gmra.mxu0 %v908
      %v4008 = vpop.f32.mrf.mxu0
      %v4009 = vadd.f32 0.0, %v4008
      %4010 = vmatmul.f32.gmra.mxu0 %v909
      %v4011 = vpop.f32.mrf.mxu0
      %v4012 = vadd.f32 0.0, %v4011
      %4013 = vmatmul.f32.gmra.mxu0 %v910
      %v4014 = vpop.f32.mrf.mxu0
      %v4015 = vadd.f32 0.0, %v4014
      %4016 = vmatmul.f32.gmra.mxu0 %v911
      %v4017 = vpop.f32.mrf.mxu0
      %v4018 = vadd.f32 0.0, %v4017
      %4019 = vmatmul.f32.gmra.mxu0 %v912
      %v4020 = vpop.f32.mrf.mxu0
      %v4021 = vadd.f32 0.0, %v4020
      %4022 = vmatmul.f32.gmra.mxu0 %v913
      %v4023 = vpop.f32.mrf.mxu0
      %v4024 = vadd.f32 0.0, %v4023
      %4025 = vmatmul.f32.gmra.mxu0 %v914
      %v4026 = vpop.f32.mrf.mxu0
      %v4027 = vadd.f32 0.0, %v4026
      %4028 = vmatmul.f32.gmra.mxu0 %v915
      %v4029 = vpop.f32.mrf.mxu0
      %v4030 = vadd.f32 0.0, %v4029
      %4031 = vmatmul.f32.gmra.mxu0 %v916
      %v4032 = vpop.f32.mrf.mxu0
      %v4033 = vadd.f32 0.0, %v4032
      %4034 = vmatmul.f32.gmra.mxu0 %v917
      %v4035 = vpop.f32.mrf.mxu0
      %v4036 = vadd.f32 0.0, %v4035
      %4037 = vmatmul.f32.gmra.mxu0 %v918
      %v4038 = vpop.f32.mrf.mxu0
      %v4039 = vadd.f32 0.0, %v4038
      %4040 = vdwg.mxu0
      %4041 = vmatpush.msra.mxu0 %v3975
      %4042 = vmatpush.msra.mxu0 %v3973
      %4043 = vmatpush.msra.mxu0 %v3971
      %4044 = vmatpush.msra.mxu0 %v3969
      %4045 = vmatpush.msra.mxu0 %v3967
      %4046 = vmatpush.msra.mxu0 %v3965
      %4047 = vmatpush.msra.mxu0 %v3963
      %4048 = vmatpush.msra.mxu0 %v3961
      %4049 = vmatpush.msra.mxu0 %v3959
      %4050 = vmatpush.msra.mxu0 %v3957
      %4051 = vmatpush.msra.mxu0 %v3955
      %4052 = vmatpush.msra.mxu0 %v3953
      %4053 = vmatpush.msra.mxu0 %v3951
      %4054 = vmatpush.msra.mxu0 %v3949
      %4055 = vmatpush.msra.mxu0 %v3947
      %4056 = vmatpush.msra.mxu0 %v3945
      %4057 = vmatmul.f32.gmra.mxu0 %v903
      %v4058 = vpop.f32.mrf.mxu0
      %v4059 = vadd.f32 0.0, %v4058
      %4060 = vmatmul.f32.gmra.mxu0 %v904
      %v4061 = vpop.f32.mrf.mxu0
      %v4062 = vadd.f32 0.0, %v4061
      %4063 = vmatmul.f32.gmra.mxu0 %v905
      %v4064 = vpop.f32.mrf.mxu0
      %v4065 = vadd.f32 0.0, %v4064
      %4066 = vmatmul.f32.gmra.mxu0 %v906
      %v4067 = vpop.f32.mrf.mxu0
      %v4068 = vadd.f32 0.0, %v4067
      %4069 = vmatmul.f32.gmra.mxu0 %v907
      %v4070 = vpop.f32.mrf.mxu0
      %v4071 = vadd.f32 0.0, %v4070
      %4072 = vmatmul.f32.gmra.mxu0 %v908
      %v4073 = vpop.f32.mrf.mxu0
      %v4074 = vadd.f32 0.0, %v4073
      %4075 = vmatmul.f32.gmra.mxu0 %v909
      %v4076 = vpop.f32.mrf.mxu0
      %v4077 = vadd.f32 0.0, %v4076
      %4078 = vmatmul.f32.gmra.mxu0 %v910
      %v4079 = vpop.f32.mrf.mxu0
      %v4080 = vadd.f32 0.0, %v4079
      %4081 = vmatmul.f32.gmra.mxu0 %v911
      %v4082 = vpop.f32.mrf.mxu0
      %v4083 = vadd.f32 0.0, %v4082
      %4084 = vmatmul.f32.gmra.mxu0 %v912
      %v4085 = vpop.f32.mrf.mxu0
      %v4086 = vadd.f32 0.0, %v4085
      %4087 = vmatmul.f32.gmra.mxu0 %v913
      %v4088 = vpop.f32.mrf.mxu0
      %v4089 = vadd.f32 0.0, %v4088
      %4090 = vmatmul.f32.gmra.mxu0 %v914
      %v4091 = vpop.f32.mrf.mxu0
      %v4092 = vadd.f32 0.0, %v4091
      %4093 = vmatmul.f32.gmra.mxu0 %v915
      %v4094 = vpop.f32.mrf.mxu0
      %v4095 = vadd.f32 0.0, %v4094
      %4096 = vmatmul.f32.gmra.mxu0 %v916
      %v4097 = vpop.f32.mrf.mxu0
      %v4098 = vadd.f32 0.0, %v4097
      %4099 = vmatmul.f32.gmra.mxu0 %v917
      %v4100 = vpop.f32.mrf.mxu0
      %v4101 = vadd.f32 0.0, %v4100
      %4102 = vmatmul.f32.gmra.mxu0 %v918
      %v4103 = vpop.f32.mrf.mxu0
      %v4104 = vadd.f32 0.0, %v4103
      %4105 = vdwg.mxu0
      %v4106 = vld [vmem:[%s25] sm:$0xff]
      %v4107 = vld [vmem:[%s25 + $0x8] sm:$0xff]
      %v4108 = vld [vmem:[%s25 + $0x10] sm:$0xff]
      %v4109 = vld [vmem:[%s25 + $0x18] sm:$0xff]
      %v4110 = vld [vmem:[%s25 + $0x20] sm:$0xff]
      %v4111 = vld [vmem:[%s25 + $0x28] sm:$0xff]
      %v4112 = vld [vmem:[%s25 + $0x30] sm:$0xff]
      %v4113 = vld [vmem:[%s25 + $0x38] sm:$0xff]
      %v4114 = vld [vmem:[%s25 + $0x40] sm:$0xff]
      %v4115 = vld [vmem:[%s25 + $0x48] sm:$0xff]
      %v4116 = vld [vmem:[%s25 + $0x50] sm:$0xff]
      %v4117 = vld [vmem:[%s25 + $0x58] sm:$0xff]
      %v4118 = vld [vmem:[%s25 + $0x60] sm:$0xff]
      %v4119 = vld [vmem:[%s25 + $0x68] sm:$0xff]
      %v4120 = vld [vmem:[%s25 + $0x70] sm:$0xff]
      %v4121 = vld [vmem:[%s25 + $0x78] sm:$0xff]
      %v4122 = vld [vmem:[%s25 + $0x80] sm:$0xff]
      %v4123 = vld [vmem:[%s25 + $0x88] sm:$0xff]
      %v4124 = vld [vmem:[%s25 + $0x90] sm:$0xff]
      %v4125 = vld [vmem:[%s25 + $0x98] sm:$0xff]
      %v4126 = vld [vmem:[%s25 + $0xa0] sm:$0xff]
      %v4127 = vld [vmem:[%s25 + $0xa8] sm:$0xff]
      %v4128 = vld [vmem:[%s25 + $0xb0] sm:$0xff]
      %v4129 = vld [vmem:[%s25 + $0xb8] sm:$0xff]
      %v4130 = vld [vmem:[%s25 + $0xc0] sm:$0xff]
      %v4131 = vld [vmem:[%s25 + $0xc8] sm:$0xff]
      %v4132 = vld [vmem:[%s25 + $0xd0] sm:$0xff]
      %v4133 = vld [vmem:[%s25 + $0xd8] sm:$0xff]
      %v4134 = vld [vmem:[%s25 + $0xe0] sm:$0xff]
      %v4135 = vld [vmem:[%s25 + $0xe8] sm:$0xff]
      %v4136 = vld [vmem:[%s25 + $0xf0] sm:$0xff]
      %v4137 = vld [vmem:[%s25 + $0xf8] sm:$0xff]
      %v4138 = vld [vmem:[%s25 + $0x100] sm:$0xff]
      %v4139 = vld [vmem:[%s25 + $0x108] sm:$0xff]
      %v4140 = vld [vmem:[%s25 + $0x110] sm:$0xff]
      %v4141 = vld [vmem:[%s25 + $0x118] sm:$0xff]
      %v4142 = vld [vmem:[%s25 + $0x120] sm:$0xff]
      %v4143 = vld [vmem:[%s25 + $0x128] sm:$0xff]
      %v4144 = vld [vmem:[%s25 + $0x130] sm:$0xff]
      %v4145 = vld [vmem:[%s25 + $0x138] sm:$0xff]
      %v4146 = vld [vmem:[%s25 + $0x140] sm:$0xff]
      %v4147 = vld [vmem:[%s25 + $0x148] sm:$0xff]
      %v4148 = vld [vmem:[%s25 + $0x150] sm:$0xff]
      %v4149 = vld [vmem:[%s25 + $0x158] sm:$0xff]
      %v4150 = vld [vmem:[%s25 + $0x160] sm:$0xff]
      %v4151 = vld [vmem:[%s25 + $0x168] sm:$0xff]
      %v4152 = vld [vmem:[%s25 + $0x170] sm:$0xff]
      %v4153 = vld [vmem:[%s25 + $0x178] sm:$0xff]
      %v4154 = vld [vmem:[%s25 + $0x180] sm:$0xff]
      %v4155 = vld [vmem:[%s25 + $0x188] sm:$0xff]
      %v4156 = vld [vmem:[%s25 + $0x190] sm:$0xff]
      %v4157 = vld [vmem:[%s25 + $0x198] sm:$0xff]
      %v4158 = vld [vmem:[%s25 + $0x1a0] sm:$0xff]
      %v4159 = vld [vmem:[%s25 + $0x1a8] sm:$0xff]
      %v4160 = vld [vmem:[%s25 + $0x1b0] sm:$0xff]
      %v4161 = vld [vmem:[%s25 + $0x1b8] sm:$0xff]
      %v4162 = vld [vmem:[%s25 + $0x1c0] sm:$0xff]
      %v4163 = vld [vmem:[%s25 + $0x1c8] sm:$0xff]
      %v4164 = vld [vmem:[%s25 + $0x1d0] sm:$0xff]
      %v4165 = vld [vmem:[%s25 + $0x1d8] sm:$0xff]
      %v4166 = vld [vmem:[%s25 + $0x1e0] sm:$0xff]
      %v4167 = vld [vmem:[%s25 + $0x1e8] sm:$0xff]
      %v4168 = vld [vmem:[%s25 + $0x1f0] sm:$0xff]
      %v4169 = vld [vmem:[%s25 + $0x1f8] sm:$0xff]
      %v4170 = vld [vmem:[%s49] sm:$0x3]
      %v4172 = vperm.slane %v4170, 0
      %v4173 = vperm.slane %v4170, 1
      %4176 = vmatpush.msra.mxu0 %v4136
      %4177 = vmatpush.msra.mxu0 %v4134
      %4178 = vmatpush.msra.mxu0 %v4132
      %4179 = vmatpush.msra.mxu0 %v4130
      %4180 = vmatpush.msra.mxu0 %v4128
      %4181 = vmatpush.msra.mxu0 %v4126
      %4182 = vmatpush.msra.mxu0 %v4124
      %4183 = vmatpush.msra.mxu0 %v4122
      %4184 = vmatpush.msra.mxu0 %v4120
      %4185 = vmatpush.msra.mxu0 %v4118
      %4186 = vmatpush.msra.mxu0 %v4116
      %4187 = vmatpush.msra.mxu0 %v4114
      %4188 = vmatpush.msra.mxu0 %v4112
      %4189 = vmatpush.msra.mxu0 %v4110
      %4190 = vmatpush.msra.mxu0 %v4108
      %4191 = vmatpush.msra.mxu0 %v4106
      %4192 = vmatmul.f32.gmra.mxu0 %v3994
      %v4193 = vpop.f32.mrf.mxu0
      %v4194 = vadd.f32 %v4172, %v4193
      %4195 = vmatmul.f32.gmra.mxu0 %v3997
      %v4196 = vpop.f32.mrf.mxu0
      %v4197 = vadd.f32 %v4172, %v4196
      %4198 = vmatmul.f32.gmra.mxu0 %v4000
      %v4199 = vpop.f32.mrf.mxu0
      %v4200 = vadd.f32 %v4172, %v4199
      %4201 = vmatmul.f32.gmra.mxu0 %v4003
      %v4202 = vpop.f32.mrf.mxu0
      %v4203 = vadd.f32 %v4172, %v4202
      %4204 = vmatmul.f32.gmra.mxu0 %v4006
      %v4205 = vpop.f32.mrf.mxu0
      %v4206 = vadd.f32 %v4172, %v4205
      %4207 = vmatmul.f32.gmra.mxu0 %v4009
      %v4208 = vpop.f32.mrf.mxu0
      %v4209 = vadd.f32 %v4172, %v4208
      %4210 = vmatmul.f32.gmra.mxu0 %v4012
      %v4211 = vpop.f32.mrf.mxu0
      %v4212 = vadd.f32 %v4172, %v4211
      %4213 = vmatmul.f32.gmra.mxu0 %v4015
      %v4214 = vpop.f32.mrf.mxu0
      %v4215 = vadd.f32 %v4172, %v4214
      %4216 = vmatmul.f32.gmra.mxu0 %v4018
      %v4217 = vpop.f32.mrf.mxu0
      %v4218 = vadd.f32 %v4172, %v4217
      %4219 = vmatmul.f32.gmra.mxu0 %v4021
      %v4220 = vpop.f32.mrf.mxu0
      %v4221 = vadd.f32 %v4172, %v4220
      %4222 = vmatmul.f32.gmra.mxu0 %v4024
      %v4223 = vpop.f32.mrf.mxu0
      %v4224 = vadd.f32 %v4172, %v4223
      %4225 = vmatmul.f32.gmra.mxu0 %v4027
      %v4226 = vpop.f32.mrf.mxu0
      %v4227 = vadd.f32 %v4172, %v4226
      %4228 = vmatmul.f32.gmra.mxu0 %v4030
      %v4229 = vpop.f32.mrf.mxu0
      %v4230 = vadd.f32 %v4172, %v4229
      %4231 = vmatmul.f32.gmra.mxu0 %v4033
      %v4232 = vpop.f32.mrf.mxu0
      %v4233 = vadd.f32 %v4172, %v4232
      %4234 = vmatmul.f32.gmra.mxu0 %v4036
      %v4235 = vpop.f32.mrf.mxu0
      %v4236 = vadd.f32 %v4172, %v4235
      %4237 = vmatmul.f32.gmra.mxu0 %v4039
      %v4238 = vpop.f32.mrf.mxu0
      %v4239 = vadd.f32 %v4172, %v4238
      %4240 = vdwg.mxu0
      %4241 = vmatpush.msra.mxu0 %v4168
      %4242 = vmatpush.msra.mxu0 %v4166
      %4243 = vmatpush.msra.mxu0 %v4164
      %4244 = vmatpush.msra.mxu0 %v4162
      %4245 = vmatpush.msra.mxu0 %v4160
      %4246 = vmatpush.msra.mxu0 %v4158
      %4247 = vmatpush.msra.mxu0 %v4156
      %4248 = vmatpush.msra.mxu0 %v4154
      %4249 = vmatpush.msra.mxu0 %v4152
      %4250 = vmatpush.msra.mxu0 %v4150
      %4251 = vmatpush.msra.mxu0 %v4148
      %4252 = vmatpush.msra.mxu0 %v4146
      %4253 = vmatpush.msra.mxu0 %v4144
      %4254 = vmatpush.msra.mxu0 %v4142
      %4255 = vmatpush.msra.mxu0 %v4140
      %4256 = vmatpush.msra.mxu0 %v4138
      %4257 = vmatmul.f32.gmra.mxu0 %v4059
      %v4258 = vpop.f32.mrf.mxu0
      %v4259 = vadd.f32 %v4194, %v4258
      %4260 = vmatmul.f32.gmra.mxu0 %v4062
      %v4261 = vpop.f32.mrf.mxu0
      %v4262 = vadd.f32 %v4197, %v4261
      %4263 = vmatmul.f32.gmra.mxu0 %v4065
      %v4264 = vpop.f32.mrf.mxu0
      %v4265 = vadd.f32 %v4200, %v4264
      %4266 = vmatmul.f32.gmra.mxu0 %v4068
      %v4267 = vpop.f32.mrf.mxu0
      %v4268 = vadd.f32 %v4203, %v4267
      %4269 = vmatmul.f32.gmra.mxu0 %v4071
      %v4270 = vpop.f32.mrf.mxu0
      %v4271 = vadd.f32 %v4206, %v4270
      %4272 = vmatmul.f32.gmra.mxu0 %v4074
      %v4273 = vpop.f32.mrf.mxu0
      %v4274 = vadd.f32 %v4209, %v4273
      %4275 = vmatmul.f32.gmra.mxu0 %v4077
      %v4276 = vpop.f32.mrf.mxu0
      %v4277 = vadd.f32 %v4212, %v4276
      %4278 = vmatmul.f32.gmra.mxu0 %v4080
      %v4279 = vpop.f32.mrf.mxu0
      %v4280 = vadd.f32 %v4215, %v4279
      %4281 = vmatmul.f32.gmra.mxu0 %v4083
      %v4282 = vpop.f32.mrf.mxu0
      %v4283 = vadd.f32 %v4218, %v4282
      %4284 = vmatmul.f32.gmra.mxu0 %v4086
      %v4285 = vpop.f32.mrf.mxu0
      %v4286 = vadd.f32 %v4221, %v4285
      %4287 = vmatmul.f32.gmra.mxu0 %v4089
      %v4288 = vpop.f32.mrf.mxu0
      %v4289 = vadd.f32 %v4224, %v4288
      %4290 = vmatmul.f32.gmra.mxu0 %v4092
      %v4291 = vpop.f32.mrf.mxu0
      %v4292 = vadd.f32 %v4227, %v4291
      %4293 = vmatmul.f32.gmra.mxu0 %v4095
      %v4294 = vpop.f32.mrf.mxu0
      %v4295 = vadd.f32 %v4230, %v4294
      %4296 = vmatmul.f32.gmra.mxu0 %v4098
      %v4297 = vpop.f32.mrf.mxu0
      %v4298 = vadd.f32 %v4233, %v4297
      %4299 = vmatmul.f32.gmra.mxu0 %v4101
      %v4300 = vpop.f32.mrf.mxu0
      %v4301 = vadd.f32 %v4236, %v4300
      %4302 = vmatmul.f32.gmra.mxu0 %v4104
      %v4303 = vpop.f32.mrf.mxu0
      %v4304 = vadd.f32 %v4239, %v4303
      %4305 = vdwg.mxu0
      %4306 = vmatpush.msra.mxu0 %v4137
      %4307 = vmatpush.msra.mxu0 %v4135
      %4308 = vmatpush.msra.mxu0 %v4133
      %4309 = vmatpush.msra.mxu0 %v4131
      %4310 = vmatpush.msra.mxu0 %v4129
      %4311 = vmatpush.msra.mxu0 %v4127
      %4312 = vmatpush.msra.mxu0 %v4125
      %4313 = vmatpush.msra.mxu0 %v4123
      %4314 = vmatpush.msra.mxu0 %v4121
      %4315 = vmatpush.msra.mxu0 %v4119
      %4316 = vmatpush.msra.mxu0 %v4117
      %4317 = vmatpush.msra.mxu0 %v4115
      %4318 = vmatpush.msra.mxu0 %v4113
      %4319 = vmatpush.msra.mxu0 %v4111
      %4320 = vmatpush.msra.mxu0 %v4109
      %4321 = vmatpush.msra.mxu0 %v4107
      %4322 = vmatmul.f32.gmra.mxu0 %v3994
      %v4323 = vpop.f32.mrf.mxu0
      %v4324 = vadd.f32 %v4173, %v4323
      %4325 = vmatmul.f32.gmra.mxu0 %v3997
      %v4326 = vpop.f32.mrf.mxu0
      %v4327 = vadd.f32 %v4173, %v4326
      %4328 = vmatmul.f32.gmra.mxu0 %v4000
      %v4329 = vpop.f32.mrf.mxu0
      %v4330 = vadd.f32 %v4173, %v4329
      %4331 = vmatmul.f32.gmra.mxu0 %v4003
      %v4332 = vpop.f32.mrf.mxu0
      %v4333 = vadd.f32 %v4173, %v4332
      %4334 = vmatmul.f32.gmra.mxu0 %v4006
      %v4335 = vpop.f32.mrf.mxu0
      %v4336 = vadd.f32 %v4173, %v4335
      %4337 = vmatmul.f32.gmra.mxu0 %v4009
      %v4338 = vpop.f32.mrf.mxu0
      %v4339 = vadd.f32 %v4173, %v4338
      %4340 = vmatmul.f32.gmra.mxu0 %v4012
      %v4341 = vpop.f32.mrf.mxu0
      %v4342 = vadd.f32 %v4173, %v4341
      %4343 = vmatmul.f32.gmra.mxu0 %v4015
      %v4344 = vpop.f32.mrf.mxu0
      %v4345 = vadd.f32 %v4173, %v4344
      %4346 = vmatmul.f32.gmra.mxu0 %v4018
      %v4347 = vpop.f32.mrf.mxu0
      %v4348 = vadd.f32 %v4173, %v4347
      %4349 = vmatmul.f32.gmra.mxu0 %v4021
      %v4350 = vpop.f32.mrf.mxu0
      %v4351 = vadd.f32 %v4173, %v4350
      %4352 = vmatmul.f32.gmra.mxu0 %v4024
      %v4353 = vpop.f32.mrf.mxu0
      %v4354 = vadd.f32 %v4173, %v4353
      %4355 = vmatmul.f32.gmra.mxu0 %v4027
      %v4356 = vpop.f32.mrf.mxu0
      %v4357 = vadd.f32 %v4173, %v4356
      %4358 = vmatmul.f32.gmra.mxu0 %v4030
      %v4359 = vpop.f32.mrf.mxu0
      %v4360 = vadd.f32 %v4173, %v4359
      %4361 = vmatmul.f32.gmra.mxu0 %v4033
      %v4362 = vpop.f32.mrf.mxu0
      %v4363 = vadd.f32 %v4173, %v4362
      %4364 = vmatmul.f32.gmra.mxu0 %v4036
      %v4365 = vpop.f32.mrf.mxu0
      %v4366 = vadd.f32 %v4173, %v4365
      %4367 = vmatmul.f32.gmra.mxu0 %v4039
      %v4368 = vpop.f32.mrf.mxu0
      %v4369 = vadd.f32 %v4173, %v4368
      %4370 = vdwg.mxu0
      %4371 = vmatpush.msra.mxu0 %v4169
      %4372 = vmatpush.msra.mxu0 %v4167
      %4373 = vmatpush.msra.mxu0 %v4165
      %4374 = vmatpush.msra.mxu0 %v4163
      %4375 = vmatpush.msra.mxu0 %v4161
      %4376 = vmatpush.msra.mxu0 %v4159
      %4377 = vmatpush.msra.mxu0 %v4157
      %4378 = vmatpush.msra.mxu0 %v4155
      %4379 = vmatpush.msra.mxu0 %v4153
      %4380 = vmatpush.msra.mxu0 %v4151
      %4381 = vmatpush.msra.mxu0 %v4149
      %4382 = vmatpush.msra.mxu0 %v4147
      %4383 = vmatpush.msra.mxu0 %v4145
      %4384 = vmatpush.msra.mxu0 %v4143
      %4385 = vmatpush.msra.mxu0 %v4141
      %4386 = vmatpush.msra.mxu0 %v4139
      %4387 = vmatmul.f32.gmra.mxu0 %v4059
      %v4388 = vpop.f32.mrf.mxu0
      %v4389 = vadd.f32 %v4324, %v4388
      %4390 = vmatmul.f32.gmra.mxu0 %v4062
      %v4391 = vpop.f32.mrf.mxu0
      %v4392 = vadd.f32 %v4327, %v4391
      %4393 = vmatmul.f32.gmra.mxu0 %v4065
      %v4394 = vpop.f32.mrf.mxu0
      %v4395 = vadd.f32 %v4330, %v4394
      %4396 = vmatmul.f32.gmra.mxu0 %v4068
      %v4397 = vpop.f32.mrf.mxu0
      %v4398 = vadd.f32 %v4333, %v4397
      %4399 = vmatmul.f32.gmra.mxu0 %v4071
      %v4400 = vpop.f32.mrf.mxu0
      %v4401 = vadd.f32 %v4336, %v4400
      %4402 = vmatmul.f32.gmra.mxu0 %v4074
      %v4403 = vpop.f32.mrf.mxu0
      %v4404 = vadd.f32 %v4339, %v4403
      %4405 = vmatmul.f32.gmra.mxu0 %v4077
      %v4406 = vpop.f32.mrf.mxu0
      %v4407 = vadd.f32 %v4342, %v4406
      %4408 = vmatmul.f32.gmra.mxu0 %v4080
      %v4409 = vpop.f32.mrf.mxu0
      %v4410 = vadd.f32 %v4345, %v4409
      %4411 = vmatmul.f32.gmra.mxu0 %v4083
      %v4412 = vpop.f32.mrf.mxu0
      %v4413 = vadd.f32 %v4348, %v4412
      %4414 = vmatmul.f32.gmra.mxu0 %v4086
      %v4415 = vpop.f32.mrf.mxu0
      %v4416 = vadd.f32 %v4351, %v4415
      %4417 = vmatmul.f32.gmra.mxu0 %v4089
      %v4418 = vpop.f32.mrf.mxu0
      %v4419 = vadd.f32 %v4354, %v4418
      %4420 = vmatmul.f32.gmra.mxu0 %v4092
      %v4421 = vpop.f32.mrf.mxu0
      %v4422 = vadd.f32 %v4357, %v4421
      %4423 = vmatmul.f32.gmra.mxu0 %v4095
      %v4424 = vpop.f32.mrf.mxu0
      %v4425 = vadd.f32 %v4360, %v4424
      %4426 = vmatmul.f32.gmra.mxu0 %v4098
      %v4427 = vpop.f32.mrf.mxu0
      %v4428 = vadd.f32 %v4363, %v4427
      %4429 = vmatmul.f32.gmra.mxu0 %v4101
      %v4430 = vpop.f32.mrf.mxu0
      %v4431 = vadd.f32 %v4366, %v4430
      %4432 = vmatmul.f32.gmra.mxu0 %v4104
      %v4433 = vpop.f32.mrf.mxu0
      %v4434 = vadd.f32 %v4369, %v4433
      %4435 = vdwg.mxu0
      %v4436 = vmax.f32 %v4259, 0.0
      %v4437 = vmax.f32 %v4389, 0.0
      %v4438 = vmax.f32 %v4262, 0.0
      %v4439 = vmax.f32 %v4392, 0.0
      %v4440 = vmax.f32 %v4265, 0.0
      %v4441 = vmax.f32 %v4395, 0.0
      %v4442 = vmax.f32 %v4268, 0.0
      %v4443 = vmax.f32 %v4398, 0.0
      %v4444 = vmax.f32 %v4271, 0.0
      %v4445 = vmax.f32 %v4401, 0.0
      %v4446 = vmax.f32 %v4274, 0.0
      %v4447 = vmax.f32 %v4404, 0.0
      %v4448 = vmax.f32 %v4277, 0.0
      %v4449 = vmax.f32 %v4407, 0.0
      %v4450 = vmax.f32 %v4280, 0.0
      %v4451 = vmax.f32 %v4410, 0.0
      %v4452 = vmax.f32 %v4283, 0.0
      %v4453 = vmax.f32 %v4413, 0.0
      %v4454 = vmax.f32 %v4286, 0.0
      %v4455 = vmax.f32 %v4416, 0.0
      %v4456 = vmax.f32 %v4289, 0.0
      %v4457 = vmax.f32 %v4419, 0.0
      %v4458 = vmax.f32 %v4292, 0.0
      %v4459 = vmax.f32 %v4422, 0.0
      %v4460 = vmax.f32 %v4295, 0.0
      %v4461 = vmax.f32 %v4425, 0.0
      %v4462 = vmax.f32 %v4298, 0.0
      %v4463 = vmax.f32 %v4428, 0.0
      %v4464 = vmax.f32 %v4301, 0.0
      %v4465 = vmax.f32 %v4431, 0.0
      %v4466 = vmax.f32 %v4304, 0.0
      %v4467 = vmax.f32 %v4434, 0.0
      %v4468 = vadd.f32 %v4436, %v3944
      %v4469 = vadd.f32 %v4437, %v3945
      %v4470 = vadd.f32 %v4438, %v3946
      %v4471 = vadd.f32 %v4439, %v3947
      %v4472 = vadd.f32 %v4440, %v3948
      %v4473 = vadd.f32 %v4441, %v3949
      %v4474 = vadd.f32 %v4442, %v3950
      %v4475 = vadd.f32 %v4443, %v3951
      %v4476 = vadd.f32 %v4444, %v3952
      %v4477 = vadd.f32 %v4445, %v3953
      %v4478 = vadd.f32 %v4446, %v3954
      %v4479 = vadd.f32 %v4447, %v3955
      %v4480 = vadd.f32 %v4448, %v3956
      %v4481 = vadd.f32 %v4449, %v3957
      %v4482 = vadd.f32 %v4450, %v3958
      %v4483 = vadd.f32 %v4451, %v3959
      %v4484 = vadd.f32 %v4452, %v3960
      %v4485 = vadd.f32 %v4453, %v3961
      %v4486 = vadd.f32 %v4454, %v3962
      %v4487 = vadd.f32 %v4455, %v3963
      %v4488 = vadd.f32 %v4456, %v3964
      %v4489 = vadd.f32 %v4457, %v3965
      %v4490 = vadd.f32 %v4458, %v3966
      %v4491 = vadd.f32 %v4459, %v3967
      %v4492 = vadd.f32 %v4460, %v3968
      %v4493 = vadd.f32 %v4461, %v3969
      %v4494 = vadd.f32 %v4462, %v3970
      %v4495 = vadd.f32 %v4463, %v3971
      %v4496 = vadd.f32 %v4464, %v3972
      %v4497 = vadd.f32 %v4465, %v3973
      %v4498 = vadd.f32 %v4466, %v3974
      %v4499 = vadd.f32 %v4467, %v3975
      %4500 = vmatpush.msra.mxu0 %v4498
      %4501 = vmatpush.msra.mxu0 %v4496
      %4502 = vmatpush.msra.mxu0 %v4494
      %4503 = vmatpush.msra.mxu0 %v4492
      %4504 = vmatpush.msra.mxu0 %v4490
      %4505 = vmatpush.msra.mxu0 %v4488
      %4506 = vmatpush.msra.mxu0 %v4486
      %4507 = vmatpush.msra.mxu0 %v4484
      %4508 = vmatpush.msra.mxu0 %v4482
      %4509 = vmatpush.msra.mxu0 %v4480
      %4510 = vmatpush.msra.mxu0 %v4478
      %4511 = vmatpush.msra.mxu0 %v4476
      %4512 = vmatpush.msra.mxu0 %v4474
      %4513 = vmatpush.msra.mxu0 %v4472
      %4514 = vmatpush.msra.mxu0 %v4470
      %4515 = vmatpush.msra.mxu0 %v4468
      %4516 = vmatmul.f32.gmra.mxu0 %v903
      %v4517 = vpop.f32.mrf.mxu0
      %v4518 = vadd.f32 0.0, %v4517
      %4519 = vmatmul.f32.gmra.mxu0 %v904
      %v4520 = vpop.f32.mrf.mxu0
      %v4521 = vadd.f32 0.0, %v4520
      %4522 = vmatmul.f32.gmra.mxu0 %v905
      %v4523 = vpop.f32.mrf.mxu0
      %v4524 = vadd.f32 0.0, %v4523
      %4525 = vmatmul.f32.gmra.mxu0 %v906
      %v4526 = vpop.f32.mrf.mxu0
      %v4527 = vadd.f32 0.0, %v4526
      %4528 = vmatmul.f32.gmra.mxu0 %v907
      %v4529 = vpop.f32.mrf.mxu0
      %v4530 = vadd.f32 0.0, %v4529
      %4531 = vmatmul.f32.gmra.mxu0 %v908
      %v4532 = vpop.f32.mrf.mxu0
      %v4533 = vadd.f32 0.0, %v4532
      %4534 = vmatmul.f32.gmra.mxu0 %v909
      %v4535 = vpop.f32.mrf.mxu0
      %v4536 = vadd.f32 0.0, %v4535
      %4537 = vmatmul.f32.gmra.mxu0 %v910
      %v4538 = vpop.f32.mrf.mxu0
      %v4539 = vadd.f32 0.0, %v4538
      %4540 = vmatmul.f32.gmra.mxu0 %v911
      %v4541 = vpop.f32.mrf.mxu0
      %v4542 = vadd.f32 0.0, %v4541
      %4543 = vmatmul.f32.gmra.mxu0 %v912
      %v4544 = vpop.f32.mrf.mxu0
      %v4545 = vadd.f32 0.0, %v4544
      %4546 = vmatmul.f32.gmra.mxu0 %v913
      %v4547 = vpop.f32.mrf.mxu0
      %v4548 = vadd.f32 0.0, %v4547
      %4549 = vmatmul.f32.gmra.mxu0 %v914
      %v4550 = vpop.f32.mrf.mxu0
      %v4551 = vadd.f32 0.0, %v4550
      %4552 = vmatmul.f32.gmra.mxu0 %v915
      %v4553 = vpop.f32.mrf.mxu0
      %v4554 = vadd.f32 0.0, %v4553
      %4555 = vmatmul.f32.gmra.mxu0 %v916
      %v4556 = vpop.f32.mrf.mxu0
      %v4557 = vadd.f32 0.0, %v4556
      %4558 = vmatmul.f32.gmra.mxu0 %v917
      %v4559 = vpop.f32.mrf.mxu0
      %v4560 = vadd.f32 0.0, %v4559
      %4561 = vmatmul.f32.gmra.mxu0 %v918
      %v4562 = vpop.f32.mrf.mxu0
      %v4563 = vadd.f32 0.0, %v4562
      %4564 = vdwg.mxu0
      %4565 = vmatpush.msra.mxu0 %v4499
      %4566 = vmatpush.msra.mxu0 %v4497
      %4567 = vmatpush.msra.mxu0 %v4495
      %4568 = vmatpush.msra.mxu0 %v4493
      %4569 = vmatpush.msra.mxu0 %v4491
      %4570 = vmatpush.msra.mxu0 %v4489
      %4571 = vmatpush.msra.mxu0 %v4487
      %4572 = vmatpush.msra.mxu0 %v4485
      %4573 = vmatpush.msra.mxu0 %v4483
      %4574 = vmatpush.msra.mxu0 %v4481
      %4575 = vmatpush.msra.mxu0 %v4479
      %4576 = vmatpush.msra.mxu0 %v4477
      %4577 = vmatpush.msra.mxu0 %v4475
      %4578 = vmatpush.msra.mxu0 %v4473
      %4579 = vmatpush.msra.mxu0 %v4471
      %4580 = vmatpush.msra.mxu0 %v4469
      %4581 = vmatmul.f32.gmra.mxu0 %v903
      %v4582 = vpop.f32.mrf.mxu0
      %v4583 = vadd.f32 0.0, %v4582
      %4584 = vmatmul.f32.gmra.mxu0 %v904
      %v4585 = vpop.f32.mrf.mxu0
      %v4586 = vadd.f32 0.0, %v4585
      %4587 = vmatmul.f32.gmra.mxu0 %v905
      %v4588 = vpop.f32.mrf.mxu0
      %v4589 = vadd.f32 0.0, %v4588
      %4590 = vmatmul.f32.gmra.mxu0 %v906
      %v4591 = vpop.f32.mrf.mxu0
      %v4592 = vadd.f32 0.0, %v4591
      %4593 = vmatmul.f32.gmra.mxu0 %v907
      %v4594 = vpop.f32.mrf.mxu0
      %v4595 = vadd.f32 0.0, %v4594
      %4596 = vmatmul.f32.gmra.mxu0 %v908
      %v4597 = vpop.f32.mrf.mxu0
      %v4598 = vadd.f32 0.0, %v4597
      %4599 = vmatmul.f32.gmra.mxu0 %v909
      %v4600 = vpop.f32.mrf.mxu0
      %v4601 = vadd.f32 0.0, %v4600
      %4602 = vmatmul.f32.gmra.mxu0 %v910
      %v4603 = vpop.f32.mrf.mxu0
      %v4604 = vadd.f32 0.0, %v4603
      %4605 = vmatmul.f32.gmra.mxu0 %v911
      %v4606 = vpop.f32.mrf.mxu0
      %v4607 = vadd.f32 0.0, %v4606
      %4608 = vmatmul.f32.gmra.mxu0 %v912
      %v4609 = vpop.f32.mrf.mxu0
      %v4610 = vadd.f32 0.0, %v4609
      %4611 = vmatmul.f32.gmra.mxu0 %v913
      %v4612 = vpop.f32.mrf.mxu0
      %v4613 = vadd.f32 0.0, %v4612
      %4614 = vmatmul.f32.gmra.mxu0 %v914
      %v4615 = vpop.f32.mrf.mxu0
      %v4616 = vadd.f32 0.0, %v4615
      %4617 = vmatmul.f32.gmra.mxu0 %v915
      %v4618 = vpop.f32.mrf.mxu0
      %v4619 = vadd.f32 0.0, %v4618
      %4620 = vmatmul.f32.gmra.mxu0 %v916
      %v4621 = vpop.f32.mrf.mxu0
      %v4622 = vadd.f32 0.0, %v4621
      %4623 = vmatmul.f32.gmra.mxu0 %v917
      %v4624 = vpop.f32.mrf.mxu0
      %v4625 = vadd.f32 0.0, %v4624
      %4626 = vmatmul.f32.gmra.mxu0 %v918
      %v4627 = vpop.f32.mrf.mxu0
      %v4628 = vadd.f32 0.0, %v4627
      %4629 = vdwg.mxu0
      %v4630 = vld [vmem:[%s27] sm:$0xff]
      %v4631 = vld [vmem:[%s27 + $0x8] sm:$0xff]
      %v4632 = vld [vmem:[%s27 + $0x10] sm:$0xff]
      %v4633 = vld [vmem:[%s27 + $0x18] sm:$0xff]
      %v4634 = vld [vmem:[%s27 + $0x20] sm:$0xff]
      %v4635 = vld [vmem:[%s27 + $0x28] sm:$0xff]
      %v4636 = vld [vmem:[%s27 + $0x30] sm:$0xff]
      %v4637 = vld [vmem:[%s27 + $0x38] sm:$0xff]
      %v4638 = vld [vmem:[%s27 + $0x40] sm:$0xff]
      %v4639 = vld [vmem:[%s27 + $0x48] sm:$0xff]
      %v4640 = vld [vmem:[%s27 + $0x50] sm:$0xff]
      %v4641 = vld [vmem:[%s27 + $0x58] sm:$0xff]
      %v4642 = vld [vmem:[%s27 + $0x60] sm:$0xff]
      %v4643 = vld [vmem:[%s27 + $0x68] sm:$0xff]
      %v4644 = vld [vmem:[%s27 + $0x70] sm:$0xff]
      %v4645 = vld [vmem:[%s27 + $0x78] sm:$0xff]
      %v4646 = vld [vmem:[%s27 + $0x80] sm:$0xff]
      %v4647 = vld [vmem:[%s27 + $0x88] sm:$0xff]
      %v4648 = vld [vmem:[%s27 + $0x90] sm:$0xff]
      %v4649 = vld [vmem:[%s27 + $0x98] sm:$0xff]
      %v4650 = vld [vmem:[%s27 + $0xa0] sm:$0xff]
      %v4651 = vld [vmem:[%s27 + $0xa8] sm:$0xff]
      %v4652 = vld [vmem:[%s27 + $0xb0] sm:$0xff]
      %v4653 = vld [vmem:[%s27 + $0xb8] sm:$0xff]
      %v4654 = vld [vmem:[%s27 + $0xc0] sm:$0xff]
      %v4655 = vld [vmem:[%s27 + $0xc8] sm:$0xff]
      %v4656 = vld [vmem:[%s27 + $0xd0] sm:$0xff]
      %v4657 = vld [vmem:[%s27 + $0xd8] sm:$0xff]
      %v4658 = vld [vmem:[%s27 + $0xe0] sm:$0xff]
      %v4659 = vld [vmem:[%s27 + $0xe8] sm:$0xff]
      %v4660 = vld [vmem:[%s27 + $0xf0] sm:$0xff]
      %v4661 = vld [vmem:[%s27 + $0xf8] sm:$0xff]
      %v4662 = vld [vmem:[%s27 + $0x100] sm:$0xff]
      %v4663 = vld [vmem:[%s27 + $0x108] sm:$0xff]
      %v4664 = vld [vmem:[%s27 + $0x110] sm:$0xff]
      %v4665 = vld [vmem:[%s27 + $0x118] sm:$0xff]
      %v4666 = vld [vmem:[%s27 + $0x120] sm:$0xff]
      %v4667 = vld [vmem:[%s27 + $0x128] sm:$0xff]
      %v4668 = vld [vmem:[%s27 + $0x130] sm:$0xff]
      %v4669 = vld [vmem:[%s27 + $0x138] sm:$0xff]
      %v4670 = vld [vmem:[%s27 + $0x140] sm:$0xff]
      %v4671 = vld [vmem:[%s27 + $0x148] sm:$0xff]
      %v4672 = vld [vmem:[%s27 + $0x150] sm:$0xff]
      %v4673 = vld [vmem:[%s27 + $0x158] sm:$0xff]
      %v4674 = vld [vmem:[%s27 + $0x160] sm:$0xff]
      %v4675 = vld [vmem:[%s27 + $0x168] sm:$0xff]
      %v4676 = vld [vmem:[%s27 + $0x170] sm:$0xff]
      %v4677 = vld [vmem:[%s27 + $0x178] sm:$0xff]
      %v4678 = vld [vmem:[%s27 + $0x180] sm:$0xff]
      %v4679 = vld [vmem:[%s27 + $0x188] sm:$0xff]
      %v4680 = vld [vmem:[%s27 + $0x190] sm:$0xff]
      %v4681 = vld [vmem:[%s27 + $0x198] sm:$0xff]
      %v4682 = vld [vmem:[%s27 + $0x1a0] sm:$0xff]
      %v4683 = vld [vmem:[%s27 + $0x1a8] sm:$0xff]
      %v4684 = vld [vmem:[%s27 + $0x1b0] sm:$0xff]
      %v4685 = vld [vmem:[%s27 + $0x1b8] sm:$0xff]
      %v4686 = vld [vmem:[%s27 + $0x1c0] sm:$0xff]
      %v4687 = vld [vmem:[%s27 + $0x1c8] sm:$0xff]
      %v4688 = vld [vmem:[%s27 + $0x1d0] sm:$0xff]
      %v4689 = vld [vmem:[%s27 + $0x1d8] sm:$0xff]
      %v4690 = vld [vmem:[%s27 + $0x1e0] sm:$0xff]
      %v4691 = vld [vmem:[%s27 + $0x1e8] sm:$0xff]
      %v4692 = vld [vmem:[%s27 + $0x1f0] sm:$0xff]
      %v4693 = vld [vmem:[%s27 + $0x1f8] sm:$0xff]
      %v4694 = vld [vmem:[%s51] sm:$0x3]
      %v4696 = vperm.slane %v4694, 0
      %v4697 = vperm.slane %v4694, 1
      %4700 = vmatpush.msra.mxu0 %v4660
      %4701 = vmatpush.msra.mxu0 %v4658
      %4702 = vmatpush.msra.mxu0 %v4656
      %4703 = vmatpush.msra.mxu0 %v4654
      %4704 = vmatpush.msra.mxu0 %v4652
      %4705 = vmatpush.msra.mxu0 %v4650
      %4706 = vmatpush.msra.mxu0 %v4648
      %4707 = vmatpush.msra.mxu0 %v4646
      %4708 = vmatpush.msra.mxu0 %v4644
      %4709 = vmatpush.msra.mxu0 %v4642
      %4710 = vmatpush.msra.mxu0 %v4640
      %4711 = vmatpush.msra.mxu0 %v4638
      %4712 = vmatpush.msra.mxu0 %v4636
      %4713 = vmatpush.msra.mxu0 %v4634
      %4714 = vmatpush.msra.mxu0 %v4632
      %4715 = vmatpush.msra.mxu0 %v4630
      %4716 = vmatmul.f32.gmra.mxu0 %v4518
      %v4717 = vpop.f32.mrf.mxu0
      %v4718 = vadd.f32 %v4696, %v4717
      %4719 = vmatmul.f32.gmra.mxu0 %v4521
      %v4720 = vpop.f32.mrf.mxu0
      %v4721 = vadd.f32 %v4696, %v4720
      %4722 = vmatmul.f32.gmra.mxu0 %v4524
      %v4723 = vpop.f32.mrf.mxu0
      %v4724 = vadd.f32 %v4696, %v4723
      %4725 = vmatmul.f32.gmra.mxu0 %v4527
      %v4726 = vpop.f32.mrf.mxu0
      %v4727 = vadd.f32 %v4696, %v4726
      %4728 = vmatmul.f32.gmra.mxu0 %v4530
      %v4729 = vpop.f32.mrf.mxu0
      %v4730 = vadd.f32 %v4696, %v4729
      %4731 = vmatmul.f32.gmra.mxu0 %v4533
      %v4732 = vpop.f32.mrf.mxu0
      %v4733 = vadd.f32 %v4696, %v4732
      %4734 = vmatmul.f32.gmra.mxu0 %v4536
      %v4735 = vpop.f32.mrf.mxu0
      %v4736 = vadd.f32 %v4696, %v4735
      %4737 = vmatmul.f32.gmra.mxu0 %v4539
      %v4738 = vpop.f32.mrf.mxu0
      %v4739 = vadd.f32 %v4696, %v4738
      %4740 = vmatmul.f32.gmra.mxu0 %v4542
      %v4741 = vpop.f32.mrf.mxu0
      %v4742 = vadd.f32 %v4696, %v4741
      %4743 = vmatmul.f32.gmra.mxu0 %v4545
      %v4744 = vpop.f32.mrf.mxu0
      %v4745 = vadd.f32 %v4696, %v4744
      %4746 = vmatmul.f32.gmra.mxu0 %v4548
      %v4747 = vpop.f32.mrf.mxu0
      %v4748 = vadd.f32 %v4696, %v4747
      %4749 = vmatmul.f32.gmra.mxu0 %v4551
      %v4750 = vpop.f32.mrf.mxu0
      %v4751 = vadd.f32 %v4696, %v4750
      %4752 = vmatmul.f32.gmra.mxu0 %v4554
      %v4753 = vpop.f32.mrf.mxu0
      %v4754 = vadd.f32 %v4696, %v4753
      %4755 = vmatmul.f32.gmra.mxu0 %v4557
      %v4756 = vpop.f32.mrf.mxu0
      %v4757 = vadd.f32 %v4696, %v4756
      %4758 = vmatmul.f32.gmra.mxu0 %v4560
      %v4759 = vpop.f32.mrf.mxu0
      %v4760 = vadd.f32 %v4696, %v4759
      %4761 = vmatmul.f32.gmra.mxu0 %v4563
      %v4762 = vpop.f32.mrf.mxu0
      %v4763 = vadd.f32 %v4696, %v4762
      %4764 = vdwg.mxu0
      %4765 = vmatpush.msra.mxu0 %v4692
      %4766 = vmatpush.msra.mxu0 %v4690
      %4767 = vmatpush.msra.mxu0 %v4688
      %4768 = vmatpush.msra.mxu0 %v4686
      %4769 = vmatpush.msra.mxu0 %v4684
      %4770 = vmatpush.msra.mxu0 %v4682
      %4771 = vmatpush.msra.mxu0 %v4680
      %4772 = vmatpush.msra.mxu0 %v4678
      %4773 = vmatpush.msra.mxu0 %v4676
      %4774 = vmatpush.msra.mxu0 %v4674
      %4775 = vmatpush.msra.mxu0 %v4672
      %4776 = vmatpush.msra.mxu0 %v4670
      %4777 = vmatpush.msra.mxu0 %v4668
      %4778 = vmatpush.msra.mxu0 %v4666
      %4779 = vmatpush.msra.mxu0 %v4664
      %4780 = vmatpush.msra.mxu0 %v4662
      %4781 = vmatmul.f32.gmra.mxu0 %v4583
      %v4782 = vpop.f32.mrf.mxu0
      %v4783 = vadd.f32 %v4718, %v4782
      %4784 = vmatmul.f32.gmra.mxu0 %v4586
      %v4785 = vpop.f32.mrf.mxu0
      %v4786 = vadd.f32 %v4721, %v4785
      %4787 = vmatmul.f32.gmra.mxu0 %v4589
      %v4788 = vpop.f32.mrf.mxu0
      %v4789 = vadd.f32 %v4724, %v4788
      %4790 = vmatmul.f32.gmra.mxu0 %v4592
      %v4791 = vpop.f32.mrf.mxu0
      %v4792 = vadd.f32 %v4727, %v4791
      %4793 = vmatmul.f32.gmra.mxu0 %v4595
      %v4794 = vpop.f32.mrf.mxu0
      %v4795 = vadd.f32 %v4730, %v4794
      %4796 = vmatmul.f32.gmra.mxu0 %v4598
      %v4797 = vpop.f32.mrf.mxu0
      %v4798 = vadd.f32 %v4733, %v4797
      %4799 = vmatmul.f32.gmra.mxu0 %v4601
      %v4800 = vpop.f32.mrf.mxu0
      %v4801 = vadd.f32 %v4736, %v4800
      %4802 = vmatmul.f32.gmra.mxu0 %v4604
      %v4803 = vpop.f32.mrf.mxu0
      %v4804 = vadd.f32 %v4739, %v4803
      %4805 = vmatmul.f32.gmra.mxu0 %v4607
      %v4806 = vpop.f32.mrf.mxu0
      %v4807 = vadd.f32 %v4742, %v4806
      %4808 = vmatmul.f32.gmra.mxu0 %v4610
      %v4809 = vpop.f32.mrf.mxu0
      %v4810 = vadd.f32 %v4745, %v4809
      %4811 = vmatmul.f32.gmra.mxu0 %v4613
      %v4812 = vpop.f32.mrf.mxu0
      %v4813 = vadd.f32 %v4748, %v4812
      %4814 = vmatmul.f32.gmra.mxu0 %v4616
      %v4815 = vpop.f32.mrf.mxu0
      %v4816 = vadd.f32 %v4751, %v4815
      %4817 = vmatmul.f32.gmra.mxu0 %v4619
      %v4818 = vpop.f32.mrf.mxu0
      %v4819 = vadd.f32 %v4754, %v4818
      %4820 = vmatmul.f32.gmra.mxu0 %v4622
      %v4821 = vpop.f32.mrf.mxu0
      %v4822 = vadd.f32 %v4757, %v4821
      %4823 = vmatmul.f32.gmra.mxu0 %v4625
      %v4824 = vpop.f32.mrf.mxu0
      %v4825 = vadd.f32 %v4760, %v4824
      %4826 = vmatmul.f32.gmra.mxu0 %v4628
      %v4827 = vpop.f32.mrf.mxu0
      %v4828 = vadd.f32 %v4763, %v4827
      %4829 = vdwg.mxu0
      %4830 = vmatpush.msra.mxu0 %v4661
      %4831 = vmatpush.msra.mxu0 %v4659
      %4832 = vmatpush.msra.mxu0 %v4657
      %4833 = vmatpush.msra.mxu0 %v4655
      %4834 = vmatpush.msra.mxu0 %v4653
      %4835 = vmatpush.msra.mxu0 %v4651
      %4836 = vmatpush.msra.mxu0 %v4649
      %4837 = vmatpush.msra.mxu0 %v4647
      %4838 = vmatpush.msra.mxu0 %v4645
      %4839 = vmatpush.msra.mxu0 %v4643
      %4840 = vmatpush.msra.mxu0 %v4641
      %4841 = vmatpush.msra.mxu0 %v4639
      %4842 = vmatpush.msra.mxu0 %v4637
      %4843 = vmatpush.msra.mxu0 %v4635
      %4844 = vmatpush.msra.mxu0 %v4633
      %4845 = vmatpush.msra.mxu0 %v4631
      %4846 = vmatmul.f32.gmra.mxu0 %v4518
      %v4847 = vpop.f32.mrf.mxu0
      %v4848 = vadd.f32 %v4697, %v4847
      %4849 = vmatmul.f32.gmra.mxu0 %v4521
      %v4850 = vpop.f32.mrf.mxu0
      %v4851 = vadd.f32 %v4697, %v4850
      %4852 = vmatmul.f32.gmra.mxu0 %v4524
      %v4853 = vpop.f32.mrf.mxu0
      %v4854 = vadd.f32 %v4697, %v4853
      %4855 = vmatmul.f32.gmra.mxu0 %v4527
      %v4856 = vpop.f32.mrf.mxu0
      %v4857 = vadd.f32 %v4697, %v4856
      %4858 = vmatmul.f32.gmra.mxu0 %v4530
      %v4859 = vpop.f32.mrf.mxu0
      %v4860 = vadd.f32 %v4697, %v4859
      %4861 = vmatmul.f32.gmra.mxu0 %v4533
      %v4862 = vpop.f32.mrf.mxu0
      %v4863 = vadd.f32 %v4697, %v4862
      %4864 = vmatmul.f32.gmra.mxu0 %v4536
      %v4865 = vpop.f32.mrf.mxu0
      %v4866 = vadd.f32 %v4697, %v4865
      %4867 = vmatmul.f32.gmra.mxu0 %v4539
      %v4868 = vpop.f32.mrf.mxu0
      %v4869 = vadd.f32 %v4697, %v4868
      %4870 = vmatmul.f32.gmra.mxu0 %v4542
      %v4871 = vpop.f32.mrf.mxu0
      %v4872 = vadd.f32 %v4697, %v4871
      %4873 = vmatmul.f32.gmra.mxu0 %v4545
      %v4874 = vpop.f32.mrf.mxu0
      %v4875 = vadd.f32 %v4697, %v4874
      %4876 = vmatmul.f32.gmra.mxu0 %v4548
      %v4877 = vpop.f32.mrf.mxu0
      %v4878 = vadd.f32 %v4697, %v4877
      %4879 = vmatmul.f32.gmra.mxu0 %v4551
      %v4880 = vpop.f32.mrf.mxu0
      %v4881 = vadd.f32 %v4697, %v4880
      %4882 = vmatmul.f32.gmra.mxu0 %v4554
      %v4883 = vpop.f32.mrf.mxu0
      %v4884 = vadd.f32 %v4697, %v4883
      %4885 = vmatmul.f32.gmra.mxu0 %v4557
      %v4886 = vpop.f32.mrf.mxu0
      %v4887 = vadd.f32 %v4697, %v4886
      %4888 = vmatmul.f32.gmra.mxu0 %v4560
      %v4889 = vpop.f32.mrf.mxu0
      %v4890 = vadd.f32 %v4697, %v4889
      %4891 = vmatmul.f32.gmra.mxu0 %v4563
      %v4892 = vpop.f32.mrf.mxu0
      %v4893 = vadd.f32 %v4697, %v4892
      %4894 = vdwg.mxu0
      %4895 = vmatpush.msra.mxu0 %v4693
      %4896 = vmatpush.msra.mxu0 %v4691
      %4897 = vmatpush.msra.mxu0 %v4689
      %4898 = vmatpush.msra.mxu0 %v4687
      %4899 = vmatpush.msra.mxu0 %v4685
      %4900 = vmatpush.msra.mxu0 %v4683
      %4901 = vmatpush.msra.mxu0 %v4681
      %4902 = vmatpush.msra.mxu0 %v4679
      %4903 = vmatpush.msra.mxu0 %v4677
      %4904 = vmatpush.msra.mxu0 %v4675
      %4905 = vmatpush.msra.mxu0 %v4673
      %4906 = vmatpush.msra.mxu0 %v4671
      %4907 = vmatpush.msra.mxu0 %v4669
      %4908 = vmatpush.msra.mxu0 %v4667
      %4909 = vmatpush.msra.mxu0 %v4665
      %4910 = vmatpush.msra.mxu0 %v4663
      %4911 = vmatmul.f32.gmra.mxu0 %v4583
      %v4912 = vpop.f32.mrf.mxu0
      %v4913 = vadd.f32 %v4848, %v4912
      %4914 = vmatmul.f32.gmra.mxu0 %v4586
      %v4915 = vpop.f32.mrf.mxu0
      %v4916 = vadd.f32 %v4851, %v4915
      %4917 = vmatmul.f32.gmra.mxu0 %v4589
      %v4918 = vpop.f32.mrf.mxu0
      %v4919 = vadd.f32 %v4854, %v4918
      %4920 = vmatmul.f32.gmra.mxu0 %v4592
      %v4921 = vpop.f32.mrf.mxu0
      %v4922 = vadd.f32 %v4857, %v4921
      %4923 = vmatmul.f32.gmra.mxu0 %v4595
      %v4924 = vpop.f32.mrf.mxu0
      %v4925 = vadd.f32 %v4860, %v4924
      %4926 = vmatmul.f32.gmra.mxu0 %v4598
      %v4927 = vpop.f32.mrf.mxu0
      %v4928 = vadd.f32 %v4863, %v4927
      %4929 = vmatmul.f32.gmra.mxu0 %v4601
      %v4930 = vpop.f32.mrf.mxu0
      %v4931 = vadd.f32 %v4866, %v4930
      %4932 = vmatmul.f32.gmra.mxu0 %v4604
      %v4933 = vpop.f32.mrf.mxu0
      %v4934 = vadd.f32 %v4869, %v4933
      %4935 = vmatmul.f32.gmra.mxu0 %v4607
      %v4936 = vpop.f32.mrf.mxu0
      %v4937 = vadd.f32 %v4872, %v4936
      %4938 = vmatmul.f32.gmra.mxu0 %v4610
      %v4939 = vpop.f32.mrf.mxu0
      %v4940 = vadd.f32 %v4875, %v4939
      %4941 = vmatmul.f32.gmra.mxu0 %v4613
      %v4942 = vpop.f32.mrf.mxu0
      %v4943 = vadd.f32 %v4878, %v4942
      %4944 = vmatmul.f32.gmra.mxu0 %v4616
      %v4945 = vpop.f32.mrf.mxu0
      %v4946 = vadd.f32 %v4881, %v4945
      %4947 = vmatmul.f32.gmra.mxu0 %v4619
      %v4948 = vpop.f32.mrf.mxu0
      %v4949 = vadd.f32 %v4884, %v4948
      %4950 = vmatmul.f32.gmra.mxu0 %v4622
      %v4951 = vpop.f32.mrf.mxu0
      %v4952 = vadd.f32 %v4887, %v4951
      %4953 = vmatmul.f32.gmra.mxu0 %v4625
      %v4954 = vpop.f32.mrf.mxu0
      %v4955 = vadd.f32 %v4890, %v4954
      %4956 = vmatmul.f32.gmra.mxu0 %v4628
      %v4957 = vpop.f32.mrf.mxu0
      %v4958 = vadd.f32 %v4893, %v4957
      %4959 = vdwg.mxu0
      %v4960 = vmax.f32 %v4783, 0.0
      %v4961 = vmax.f32 %v4913, 0.0
      %v4962 = vmax.f32 %v4786, 0.0
      %v4963 = vmax.f32 %v4916, 0.0
      %v4964 = vmax.f32 %v4789, 0.0
      %v4965 = vmax.f32 %v4919, 0.0
      %v4966 = vmax.f32 %v4792, 0.0
      %v4967 = vmax.f32 %v4922, 0.0
      %v4968 = vmax.f32 %v4795, 0.0
      %v4969 = vmax.f32 %v4925, 0.0
      %v4970 = vmax.f32 %v4798, 0.0
      %v4971 = vmax.f32 %v4928, 0.0
      %v4972 = vmax.f32 %v4801, 0.0
      %v4973 = vmax.f32 %v4931, 0.0
      %v4974 = vmax.f32 %v4804, 0.0
      %v4975 = vmax.f32 %v4934, 0.0
      %v4976 = vmax.f32 %v4807, 0.0
      %v4977 = vmax.f32 %v4937, 0.0
      %v4978 = vmax.f32 %v4810, 0.0
      %v4979 = vmax.f32 %v4940, 0.0
      %v4980 = vmax.f32 %v4813, 0.0
      %v4981 = vmax.f32 %v4943, 0.0
      %v4982 = vmax.f32 %v4816, 0.0
      %v4983 = vmax.f32 %v4946, 0.0
      %v4984 = vmax.f32 %v4819, 0.0
      %v4985 = vmax.f32 %v4949, 0.0
      %v4986 = vmax.f32 %v4822, 0.0
      %v4987 = vmax.f32 %v4952, 0.0
      %v4988 = vmax.f32 %v4825, 0.0
      %v4989 = vmax.f32 %v4955, 0.0
      %v4990 = vmax.f32 %v4828, 0.0
      %v4991 = vmax.f32 %v4958, 0.0
      %v4992 = vadd.f32 %v4960, %v4468
      %v4993 = vadd.f32 %v4961, %v4469
      %v4994 = vadd.f32 %v4962, %v4470
      %v4995 = vadd.f32 %v4963, %v4471
      %v4996 = vadd.f32 %v4964, %v4472
      %v4997 = vadd.f32 %v4965, %v4473
      %v4998 = vadd.f32 %v4966, %v4474
      %v4999 = vadd.f32 %v4967, %v4475
      %v5000 = vadd.f32 %v4968, %v4476
      %v5001 = vadd.f32 %v4969, %v4477
      %v5002 = vadd.f32 %v4970, %v4478
      %v5003 = vadd.f32 %v4971, %v4479
      %v5004 = vadd.f32 %v4972, %v4480
      %v5005 = vadd.f32 %v4973, %v4481
      %v5006 = vadd.f32 %v4974, %v4482
      %v5007 = vadd.f32 %v4975, %v4483
      %v5008 = vadd.f32 %v4976, %v4484
      %v5009 = vadd.f32 %v4977, %v4485
      %v5010 = vadd.f32 %v4978, %v4486
      %v5011 = vadd.f32 %v4979, %v4487
      %v5012 = vadd.f32 %v4980, %v4488
      %v5013 = vadd.f32 %v4981, %v4489
      %v5014 = vadd.f32 %v4982, %v4490
      %v5015 = vadd.f32 %v4983, %v4491
      %v5016 = vadd.f32 %v4984, %v4492
      %v5017 = vadd.f32 %v4985, %v4493
      %v5018 = vadd.f32 %v4986, %v4494
      %v5019 = vadd.f32 %v4987, %v4495
      %v5020 = vadd.f32 %v4988, %v4496
      %v5021 = vadd.f32 %v4989, %v4497
      %v5022 = vadd.f32 %v4990, %v4498
      %v5023 = vadd.f32 %v4991, %v4499
      %5024 = vmatpush.msra.mxu0 %v5022
      %5025 = vmatpush.msra.mxu0 %v5020
      %5026 = vmatpush.msra.mxu0 %v5018
      %5027 = vmatpush.msra.mxu0 %v5016
      %5028 = vmatpush.msra.mxu0 %v5014
      %5029 = vmatpush.msra.mxu0 %v5012
      %5030 = vmatpush.msra.mxu0 %v5010
      %5031 = vmatpush.msra.mxu0 %v5008
      %5032 = vmatpush.msra.mxu0 %v5006
      %5033 = vmatpush.msra.mxu0 %v5004
      %5034 = vmatpush.msra.mxu0 %v5002
      %5035 = vmatpush.msra.mxu0 %v5000
      %5036 = vmatpush.msra.mxu0 %v4998
      %5037 = vmatpush.msra.mxu0 %v4996
      %5038 = vmatpush.msra.mxu0 %v4994
      %5039 = vmatpush.msra.mxu0 %v4992
      %5040 = vmatmul.f32.gmra.mxu0 %v903
      %v5041 = vpop.f32.mrf.mxu0
      %v5042 = vadd.f32 0.0, %v5041
      %5043 = vmatmul.f32.gmra.mxu0 %v904
      %v5044 = vpop.f32.mrf.mxu0
      %v5045 = vadd.f32 0.0, %v5044
      %5046 = vmatmul.f32.gmra.mxu0 %v905
      %v5047 = vpop.f32.mrf.mxu0
      %v5048 = vadd.f32 0.0, %v5047
      %5049 = vmatmul.f32.gmra.mxu0 %v906
      %v5050 = vpop.f32.mrf.mxu0
      %v5051 = vadd.f32 0.0, %v5050
      %5052 = vmatmul.f32.gmra.mxu0 %v907
      %v5053 = vpop.f32.mrf.mxu0
      %v5054 = vadd.f32 0.0, %v5053
      %5055 = vmatmul.f32.gmra.mxu0 %v908
      %v5056 = vpop.f32.mrf.mxu0
      %v5057 = vadd.f32 0.0, %v5056
      %5058 = vmatmul.f32.gmra.mxu0 %v909
      %v5059 = vpop.f32.mrf.mxu0
      %v5060 = vadd.f32 0.0, %v5059
      %5061 = vmatmul.f32.gmra.mxu0 %v910
      %v5062 = vpop.f32.mrf.mxu0
      %v5063 = vadd.f32 0.0, %v5062
      %5064 = vmatmul.f32.gmra.mxu0 %v911
      %v5065 = vpop.f32.mrf.mxu0
      %v5066 = vadd.f32 0.0, %v5065
      %5067 = vmatmul.f32.gmra.mxu0 %v912
      %v5068 = vpop.f32.mrf.mxu0
      %v5069 = vadd.f32 0.0, %v5068
      %5070 = vmatmul.f32.gmra.mxu0 %v913
      %v5071 = vpop.f32.mrf.mxu0
      %v5072 = vadd.f32 0.0, %v5071
      %5073 = vmatmul.f32.gmra.mxu0 %v914
      %v5074 = vpop.f32.mrf.mxu0
      %v5075 = vadd.f32 0.0, %v5074
      %5076 = vmatmul.f32.gmra.mxu0 %v915
      %v5077 = vpop.f32.mrf.mxu0
      %v5078 = vadd.f32 0.0, %v5077
      %5079 = vmatmul.f32.gmra.mxu0 %v916
      %v5080 = vpop.f32.mrf.mxu0
      %v5081 = vadd.f32 0.0, %v5080
      %5082 = vmatmul.f32.gmra.mxu0 %v917
      %v5083 = vpop.f32.mrf.mxu0
      %v5084 = vadd.f32 0.0, %v5083
      %5085 = vmatmul.f32.gmra.mxu0 %v918
      %v5086 = vpop.f32.mrf.mxu0
      %v5087 = vadd.f32 0.0, %v5086
      %5088 = vdwg.mxu0
      %5089 = vmatpush.msra.mxu0 %v5023
      %5090 = vmatpush.msra.mxu0 %v5021
      %5091 = vmatpush.msra.mxu0 %v5019
      %5092 = vmatpush.msra.mxu0 %v5017
      %5093 = vmatpush.msra.mxu0 %v5015
      %5094 = vmatpush.msra.mxu0 %v5013
      %5095 = vmatpush.msra.mxu0 %v5011
      %5096 = vmatpush.msra.mxu0 %v5009
      %5097 = vmatpush.msra.mxu0 %v5007
      %5098 = vmatpush.msra.mxu0 %v5005
      %5099 = vmatpush.msra.mxu0 %v5003
      %5100 = vmatpush.msra.mxu0 %v5001
      %5101 = vmatpush.msra.mxu0 %v4999
      %5102 = vmatpush.msra.mxu0 %v4997
      %5103 = vmatpush.msra.mxu0 %v4995
      %5104 = vmatpush.msra.mxu0 %v4993
      %5105 = vmatmul.f32.gmra.mxu0 %v903
      %v5106 = vpop.f32.mrf.mxu0
      %v5107 = vadd.f32 0.0, %v5106
      %5108 = vmatmul.f32.gmra.mxu0 %v904
      %v5109 = vpop.f32.mrf.mxu0
      %v5110 = vadd.f32 0.0, %v5109
      %5111 = vmatmul.f32.gmra.mxu0 %v905
      %v5112 = vpop.f32.mrf.mxu0
      %v5113 = vadd.f32 0.0, %v5112
      %5114 = vmatmul.f32.gmra.mxu0 %v906
      %v5115 = vpop.f32.mrf.mxu0
      %v5116 = vadd.f32 0.0, %v5115
      %5117 = vmatmul.f32.gmra.mxu0 %v907
      %v5118 = vpop.f32.mrf.mxu0
      %v5119 = vadd.f32 0.0, %v5118
      %5120 = vmatmul.f32.gmra.mxu0 %v908
      %v5121 = vpop.f32.mrf.mxu0
      %v5122 = vadd.f32 0.0, %v5121
      %5123 = vmatmul.f32.gmra.mxu0 %v909
      %v5124 = vpop.f32.mrf.mxu0
      %v5125 = vadd.f32 0.0, %v5124
      %5126 = vmatmul.f32.gmra.mxu0 %v910
      %v5127 = vpop.f32.mrf.mxu0
      %v5128 = vadd.f32 0.0, %v5127
      %5129 = vmatmul.f32.gmra.mxu0 %v911
      %v5130 = vpop.f32.mrf.mxu0
      %v5131 = vadd.f32 0.0, %v5130
      %5132 = vmatmul.f32.gmra.mxu0 %v912
      %v5133 = vpop.f32.mrf.mxu0
      %v5134 = vadd.f32 0.0, %v5133
      %5135 = vmatmul.f32.gmra.mxu0 %v913
      %v5136 = vpop.f32.mrf.mxu0
      %v5137 = vadd.f32 0.0, %v5136
      %5138 = vmatmul.f32.gmra.mxu0 %v914
      %v5139 = vpop.f32.mrf.mxu0
      %v5140 = vadd.f32 0.0, %v5139
      %5141 = vmatmul.f32.gmra.mxu0 %v915
      %v5142 = vpop.f32.mrf.mxu0
      %v5143 = vadd.f32 0.0, %v5142
      %5144 = vmatmul.f32.gmra.mxu0 %v916
      %v5145 = vpop.f32.mrf.mxu0
      %v5146 = vadd.f32 0.0, %v5145
      %5147 = vmatmul.f32.gmra.mxu0 %v917
      %v5148 = vpop.f32.mrf.mxu0
      %v5149 = vadd.f32 0.0, %v5148
      %5150 = vmatmul.f32.gmra.mxu0 %v918
      %v5151 = vpop.f32.mrf.mxu0
      %v5152 = vadd.f32 0.0, %v5151
      %5153 = vdwg.mxu0
      %v5154 = vld [vmem:[%s29] sm:$0xff]
      %v5155 = vld [vmem:[%s29 + $0x8] sm:$0xff]
      %v5156 = vld [vmem:[%s29 + $0x10] sm:$0xff]
      %v5157 = vld [vmem:[%s29 + $0x18] sm:$0xff]
      %v5158 = vld [vmem:[%s29 + $0x20] sm:$0xff]
      %v5159 = vld [vmem:[%s29 + $0x28] sm:$0xff]
      %v5160 = vld [vmem:[%s29 + $0x30] sm:$0xff]
      %v5161 = vld [vmem:[%s29 + $0x38] sm:$0xff]
      %v5162 = vld [vmem:[%s29 + $0x40] sm:$0xff]
      %v5163 = vld [vmem:[%s29 + $0x48] sm:$0xff]
      %v5164 = vld [vmem:[%s29 + $0x50] sm:$0xff]
      %v5165 = vld [vmem:[%s29 + $0x58] sm:$0xff]
      %v5166 = vld [vmem:[%s29 + $0x60] sm:$0xff]
      %v5167 = vld [vmem:[%s29 + $0x68] sm:$0xff]
      %v5168 = vld [vmem:[%s29 + $0x70] sm:$0xff]
      %v5169 = vld [vmem:[%s29 + $0x78] sm:$0xff]
      %v5170 = vld [vmem:[%s29 + $0x80] sm:$0xff]
      %v5171 = vld [vmem:[%s29 + $0x88] sm:$0xff]
      %v5172 = vld [vmem:[%s29 + $0x90] sm:$0xff]
      %v5173 = vld [vmem:[%s29 + $0x98] sm:$0xff]
      %v5174 = vld [vmem:[%s29 + $0xa0] sm:$0xff]
      %v5175 = vld [vmem:[%s29 + $0xa8] sm:$0xff]
      %v5176 = vld [vmem:[%s29 + $0xb0] sm:$0xff]
      %v5177 = vld [vmem:[%s29 + $0xb8] sm:$0xff]
      %v5178 = vld [vmem:[%s29 + $0xc0] sm:$0xff]
      %v5179 = vld [vmem:[%s29 + $0xc8] sm:$0xff]
      %v5180 = vld [vmem:[%s29 + $0xd0] sm:$0xff]
      %v5181 = vld [vmem:[%s29 + $0xd8] sm:$0xff]
      %v5182 = vld [vmem:[%s29 + $0xe0] sm:$0xff]
      %v5183 = vld [vmem:[%s29 + $0xe8] sm:$0xff]
      %v5184 = vld [vmem:[%s29 + $0xf0] sm:$0xff]
      %v5185 = vld [vmem:[%s29 + $0xf8] sm:$0xff]
      %v5186 = vld [vmem:[%s29 + $0x100] sm:$0xff]
      %v5187 = vld [vmem:[%s29 + $0x108] sm:$0xff]
      %v5188 = vld [vmem:[%s29 + $0x110] sm:$0xff]
      %v5189 = vld [vmem:[%s29 + $0x118] sm:$0xff]
      %v5190 = vld [vmem:[%s29 + $0x120] sm:$0xff]
      %v5191 = vld [vmem:[%s29 + $0x128] sm:$0xff]
      %v5192 = vld [vmem:[%s29 + $0x130] sm:$0xff]
      %v5193 = vld [vmem:[%s29 + $0x138] sm:$0xff]
      %v5194 = vld [vmem:[%s29 + $0x140] sm:$0xff]
      %v5195 = vld [vmem:[%s29 + $0x148] sm:$0xff]
      %v5196 = vld [vmem:[%s29 + $0x150] sm:$0xff]
      %v5197 = vld [vmem:[%s29 + $0x158] sm:$0xff]
      %v5198 = vld [vmem:[%s29 + $0x160] sm:$0xff]
      %v5199 = vld [vmem:[%s29 + $0x168] sm:$0xff]
      %v5200 = vld [vmem:[%s29 + $0x170] sm:$0xff]
      %v5201 = vld [vmem:[%s29 + $0x178] sm:$0xff]
      %v5202 = vld [vmem:[%s29 + $0x180] sm:$0xff]
      %v5203 = vld [vmem:[%s29 + $0x188] sm:$0xff]
      %v5204 = vld [vmem:[%s29 + $0x190] sm:$0xff]
      %v5205 = vld [vmem:[%s29 + $0x198] sm:$0xff]
      %v5206 = vld [vmem:[%s29 + $0x1a0] sm:$0xff]
      %v5207 = vld [vmem:[%s29 + $0x1a8] sm:$0xff]
      %v5208 = vld [vmem:[%s29 + $0x1b0] sm:$0xff]
      %v5209 = vld [vmem:[%s29 + $0x1b8] sm:$0xff]
      %v5210 = vld [vmem:[%s29 + $0x1c0] sm:$0xff]
      %v5211 = vld [vmem:[%s29 + $0x1c8] sm:$0xff]
      %v5212 = vld [vmem:[%s29 + $0x1d0] sm:$0xff]
      %v5213 = vld [vmem:[%s29 + $0x1d8] sm:$0xff]
      %v5214 = vld [vmem:[%s29 + $0x1e0] sm:$0xff]
      %v5215 = vld [vmem:[%s29 + $0x1e8] sm:$0xff]
      %v5216 = vld [vmem:[%s29 + $0x1f0] sm:$0xff]
      %v5217 = vld [vmem:[%s29 + $0x1f8] sm:$0xff]
      %v5218 = vld [vmem:[%s53] sm:$0x3]
      %v5220 = vperm.slane %v5218, 0
      %v5221 = vperm.slane %v5218, 1
      %5224 = vmatpush.msra.mxu0 %v5184
      %5225 = vmatpush.msra.mxu0 %v5182
      %5226 = vmatpush.msra.mxu0 %v5180
      %5227 = vmatpush.msra.mxu0 %v5178
      %5228 = vmatpush.msra.mxu0 %v5176
      %5229 = vmatpush.msra.mxu0 %v5174
      %5230 = vmatpush.msra.mxu0 %v5172
      %5231 = vmatpush.msra.mxu0 %v5170
      %5232 = vmatpush.msra.mxu0 %v5168
      %5233 = vmatpush.msra.mxu0 %v5166
      %5234 = vmatpush.msra.mxu0 %v5164
      %5235 = vmatpush.msra.mxu0 %v5162
      %5236 = vmatpush.msra.mxu0 %v5160
      %5237 = vmatpush.msra.mxu0 %v5158
      %5238 = vmatpush.msra.mxu0 %v5156
      %5239 = vmatpush.msra.mxu0 %v5154
      %5240 = vmatmul.f32.gmra.mxu0 %v5042
      %v5241 = vpop.f32.mrf.mxu0
      %v5242 = vadd.f32 %v5220, %v5241
      %5243 = vmatmul.f32.gmra.mxu0 %v5045
      %v5244 = vpop.f32.mrf.mxu0
      %v5245 = vadd.f32 %v5220, %v5244
      %5246 = vmatmul.f32.gmra.mxu0 %v5048
      %v5247 = vpop.f32.mrf.mxu0
      %v5248 = vadd.f32 %v5220, %v5247
      %5249 = vmatmul.f32.gmra.mxu0 %v5051
      %v5250 = vpop.f32.mrf.mxu0
      %v5251 = vadd.f32 %v5220, %v5250
      %5252 = vmatmul.f32.gmra.mxu0 %v5054
      %v5253 = vpop.f32.mrf.mxu0
      %v5254 = vadd.f32 %v5220, %v5253
      %5255 = vmatmul.f32.gmra.mxu0 %v5057
      %v5256 = vpop.f32.mrf.mxu0
      %v5257 = vadd.f32 %v5220, %v5256
      %5258 = vmatmul.f32.gmra.mxu0 %v5060
      %v5259 = vpop.f32.mrf.mxu0
      %v5260 = vadd.f32 %v5220, %v5259
      %5261 = vmatmul.f32.gmra.mxu0 %v5063
      %v5262 = vpop.f32.mrf.mxu0
      %v5263 = vadd.f32 %v5220, %v5262
      %5264 = vmatmul.f32.gmra.mxu0 %v5066
      %v5265 = vpop.f32.mrf.mxu0
      %v5266 = vadd.f32 %v5220, %v5265
      %5267 = vmatmul.f32.gmra.mxu0 %v5069
      %v5268 = vpop.f32.mrf.mxu0
      %v5269 = vadd.f32 %v5220, %v5268
      %5270 = vmatmul.f32.gmra.mxu0 %v5072
      %v5271 = vpop.f32.mrf.mxu0
      %v5272 = vadd.f32 %v5220, %v5271
      %5273 = vmatmul.f32.gmra.mxu0 %v5075
      %v5274 = vpop.f32.mrf.mxu0
      %v5275 = vadd.f32 %v5220, %v5274
      %5276 = vmatmul.f32.gmra.mxu0 %v5078
      %v5277 = vpop.f32.mrf.mxu0
      %v5278 = vadd.f32 %v5220, %v5277
      %5279 = vmatmul.f32.gmra.mxu0 %v5081
      %v5280 = vpop.f32.mrf.mxu0
      %v5281 = vadd.f32 %v5220, %v5280
      %5282 = vmatmul.f32.gmra.mxu0 %v5084
      %v5283 = vpop.f32.mrf.mxu0
      %v5284 = vadd.f32 %v5220, %v5283
      %5285 = vmatmul.f32.gmra.mxu0 %v5087
      %v5286 = vpop.f32.mrf.mxu0
      %v5287 = vadd.f32 %v5220, %v5286
      %5288 = vdwg.mxu0
      %5289 = vmatpush.msra.mxu0 %v5216
      %5290 = vmatpush.msra.mxu0 %v5214
      %5291 = vmatpush.msra.mxu0 %v5212
      %5292 = vmatpush.msra.mxu0 %v5210
      %5293 = vmatpush.msra.mxu0 %v5208
      %5294 = vmatpush.msra.mxu0 %v5206
      %5295 = vmatpush.msra.mxu0 %v5204
      %5296 = vmatpush.msra.mxu0 %v5202
      %5297 = vmatpush.msra.mxu0 %v5200
      %5298 = vmatpush.msra.mxu0 %v5198
      %5299 = vmatpush.msra.mxu0 %v5196
      %5300 = vmatpush.msra.mxu0 %v5194
      %5301 = vmatpush.msra.mxu0 %v5192
      %5302 = vmatpush.msra.mxu0 %v5190
      %5303 = vmatpush.msra.mxu0 %v5188
      %5304 = vmatpush.msra.mxu0 %v5186
      %5305 = vmatmul.f32.gmra.mxu0 %v5107
      %v5306 = vpop.f32.mrf.mxu0
      %v5307 = vadd.f32 %v5242, %v5306
      %5308 = vmatmul.f32.gmra.mxu0 %v5110
      %v5309 = vpop.f32.mrf.mxu0
      %v5310 = vadd.f32 %v5245, %v5309
      %5311 = vmatmul.f32.gmra.mxu0 %v5113
      %v5312 = vpop.f32.mrf.mxu0
      %v5313 = vadd.f32 %v5248, %v5312
      %5314 = vmatmul.f32.gmra.mxu0 %v5116
      %v5315 = vpop.f32.mrf.mxu0
      %v5316 = vadd.f32 %v5251, %v5315
      %5317 = vmatmul.f32.gmra.mxu0 %v5119
      %v5318 = vpop.f32.mrf.mxu0
      %v5319 = vadd.f32 %v5254, %v5318
      %5320 = vmatmul.f32.gmra.mxu0 %v5122
      %v5321 = vpop.f32.mrf.mxu0
      %v5322 = vadd.f32 %v5257, %v5321
      %5323 = vmatmul.f32.gmra.mxu0 %v5125
      %v5324 = vpop.f32.mrf.mxu0
      %v5325 = vadd.f32 %v5260, %v5324
      %5326 = vmatmul.f32.gmra.mxu0 %v5128
      %v5327 = vpop.f32.mrf.mxu0
      %v5328 = vadd.f32 %v5263, %v5327
      %5329 = vmatmul.f32.gmra.mxu0 %v5131
      %v5330 = vpop.f32.mrf.mxu0
      %v5331 = vadd.f32 %v5266, %v5330
      %5332 = vmatmul.f32.gmra.mxu0 %v5134
      %v5333 = vpop.f32.mrf.mxu0
      %v5334 = vadd.f32 %v5269, %v5333
      %5335 = vmatmul.f32.gmra.mxu0 %v5137
      %v5336 = vpop.f32.mrf.mxu0
      %v5337 = vadd.f32 %v5272, %v5336
      %5338 = vmatmul.f32.gmra.mxu0 %v5140
      %v5339 = vpop.f32.mrf.mxu0
      %v5340 = vadd.f32 %v5275, %v5339
      %5341 = vmatmul.f32.gmra.mxu0 %v5143
      %v5342 = vpop.f32.mrf.mxu0
      %v5343 = vadd.f32 %v5278, %v5342
      %5344 = vmatmul.f32.gmra.mxu0 %v5146
      %v5345 = vpop.f32.mrf.mxu0
      %v5346 = vadd.f32 %v5281, %v5345
      %5347 = vmatmul.f32.gmra.mxu0 %v5149
      %v5348 = vpop.f32.mrf.mxu0
      %v5349 = vadd.f32 %v5284, %v5348
      %5350 = vmatmul.f32.gmra.mxu0 %v5152
      %v5351 = vpop.f32.mrf.mxu0
      %v5352 = vadd.f32 %v5287, %v5351
      %5353 = vdwg.mxu0
      %5354 = vmatpush.msra.mxu0 %v5185
      %5355 = vmatpush.msra.mxu0 %v5183
      %5356 = vmatpush.msra.mxu0 %v5181
      %5357 = vmatpush.msra.mxu0 %v5179
      %5358 = vmatpush.msra.mxu0 %v5177
      %5359 = vmatpush.msra.mxu0 %v5175
      %5360 = vmatpush.msra.mxu0 %v5173
      %5361 = vmatpush.msra.mxu0 %v5171
      %5362 = vmatpush.msra.mxu0 %v5169
      %5363 = vmatpush.msra.mxu0 %v5167
      %5364 = vmatpush.msra.mxu0 %v5165
      %5365 = vmatpush.msra.mxu0 %v5163
      %5366 = vmatpush.msra.mxu0 %v5161
      %5367 = vmatpush.msra.mxu0 %v5159
      %5368 = vmatpush.msra.mxu0 %v5157
      %5369 = vmatpush.msra.mxu0 %v5155
      %5370 = vmatmul.f32.gmra.mxu0 %v5042
      %v5371 = vpop.f32.mrf.mxu0
      %v5372 = vadd.f32 %v5221, %v5371
      %5373 = vmatmul.f32.gmra.mxu0 %v5045
      %v5374 = vpop.f32.mrf.mxu0
      %v5375 = vadd.f32 %v5221, %v5374
      %5376 = vmatmul.f32.gmra.mxu0 %v5048
      %v5377 = vpop.f32.mrf.mxu0
      %v5378 = vadd.f32 %v5221, %v5377
      %5379 = vmatmul.f32.gmra.mxu0 %v5051
      %v5380 = vpop.f32.mrf.mxu0
      %v5381 = vadd.f32 %v5221, %v5380
      %5382 = vmatmul.f32.gmra.mxu0 %v5054
      %v5383 = vpop.f32.mrf.mxu0
      %v5384 = vadd.f32 %v5221, %v5383
      %5385 = vmatmul.f32.gmra.mxu0 %v5057
      %v5386 = vpop.f32.mrf.mxu0
      %v5387 = vadd.f32 %v5221, %v5386
      %5388 = vmatmul.f32.gmra.mxu0 %v5060
      %v5389 = vpop.f32.mrf.mxu0
      %v5390 = vadd.f32 %v5221, %v5389
      %5391 = vmatmul.f32.gmra.mxu0 %v5063
      %v5392 = vpop.f32.mrf.mxu0
      %v5393 = vadd.f32 %v5221, %v5392
      %5394 = vmatmul.f32.gmra.mxu0 %v5066
      %v5395 = vpop.f32.mrf.mxu0
      %v5396 = vadd.f32 %v5221, %v5395
      %5397 = vmatmul.f32.gmra.mxu0 %v5069
      %v5398 = vpop.f32.mrf.mxu0
      %v5399 = vadd.f32 %v5221, %v5398
      %5400 = vmatmul.f32.gmra.mxu0 %v5072
      %v5401 = vpop.f32.mrf.mxu0
      %v5402 = vadd.f32 %v5221, %v5401
      %5403 = vmatmul.f32.gmra.mxu0 %v5075
      %v5404 = vpop.f32.mrf.mxu0
      %v5405 = vadd.f32 %v5221, %v5404
      %5406 = vmatmul.f32.gmra.mxu0 %v5078
      %v5407 = vpop.f32.mrf.mxu0
      %v5408 = vadd.f32 %v5221, %v5407
      %5409 = vmatmul.f32.gmra.mxu0 %v5081
      %v5410 = vpop.f32.mrf.mxu0
      %v5411 = vadd.f32 %v5221, %v5410
      %5412 = vmatmul.f32.gmra.mxu0 %v5084
      %v5413 = vpop.f32.mrf.mxu0
      %v5414 = vadd.f32 %v5221, %v5413
      %5415 = vmatmul.f32.gmra.mxu0 %v5087
      %v5416 = vpop.f32.mrf.mxu0
      %v5417 = vadd.f32 %v5221, %v5416
      %5418 = vdwg.mxu0
      %5419 = vmatpush.msra.mxu0 %v5217
      %5420 = vmatpush.msra.mxu0 %v5215
      %5421 = vmatpush.msra.mxu0 %v5213
      %5422 = vmatpush.msra.mxu0 %v5211
      %5423 = vmatpush.msra.mxu0 %v5209
      %5424 = vmatpush.msra.mxu0 %v5207
      %5425 = vmatpush.msra.mxu0 %v5205
      %5426 = vmatpush.msra.mxu0 %v5203
      %5427 = vmatpush.msra.mxu0 %v5201
      %5428 = vmatpush.msra.mxu0 %v5199
      %5429 = vmatpush.msra.mxu0 %v5197
      %5430 = vmatpush.msra.mxu0 %v5195
      %5431 = vmatpush.msra.mxu0 %v5193
      %5432 = vmatpush.msra.mxu0 %v5191
      %5433 = vmatpush.msra.mxu0 %v5189
      %5434 = vmatpush.msra.mxu0 %v5187
      %5435 = vmatmul.f32.gmra.mxu0 %v5107
      %v5436 = vpop.f32.mrf.mxu0
      %v5437 = vadd.f32 %v5372, %v5436
      %5438 = vmatmul.f32.gmra.mxu0 %v5110
      %v5439 = vpop.f32.mrf.mxu0
      %v5440 = vadd.f32 %v5375, %v5439
      %5441 = vmatmul.f32.gmra.mxu0 %v5113
      %v5442 = vpop.f32.mrf.mxu0
      %v5443 = vadd.f32 %v5378, %v5442
      %5444 = vmatmul.f32.gmra.mxu0 %v5116
      %v5445 = vpop.f32.mrf.mxu0
      %v5446 = vadd.f32 %v5381, %v5445
      %5447 = vmatmul.f32.gmra.mxu0 %v5119
      %v5448 = vpop.f32.mrf.mxu0
      %v5449 = vadd.f32 %v5384, %v5448
      %5450 = vmatmul.f32.gmra.mxu0 %v5122
      %v5451 = vpop.f32.mrf.mxu0
      %v5452 = vadd.f32 %v5387, %v5451
      %5453 = vmatmul.f32.gmra.mxu0 %v5125
      %v5454 = vpop.f32.mrf.mxu0
      %v5455 = vadd.f32 %v5390, %v5454
      %5456 = vmatmul.f32.gmra.mxu0 %v5128
      %v5457 = vpop.f32.mrf.mxu0
      %v5458 = vadd.f32 %v5393, %v5457
      %5459 = vmatmul.f32.gmra.mxu0 %v5131
      %v5460 = vpop.f32.mrf.mxu0
      %v5461 = vadd.f32 %v5396, %v5460
      %5462 = vmatmul.f32.gmra.mxu0 %v5134
      %v5463 = vpop.f32.mrf.mxu0
      %v5464 = vadd.f32 %v5399, %v5463
      %5465 = vmatmul.f32.gmra.mxu0 %v5137
      %v5466 = vpop.f32.mrf.mxu0
      %v5467 = vadd.f32 %v5402, %v5466
      %5468 = vmatmul.f32.gmra.mxu0 %v5140
      %v5469 = vpop.f32.mrf.mxu0
      %v5470 = vadd.f32 %v5405, %v5469
      %5471 = vmatmul.f32.gmra.mxu0 %v5143
      %v5472 = vpop.f32.mrf.mxu0
      %v5473 = vadd.f32 %v5408, %v5472
      %5474 = vmatmul.f32.gmra.mxu0 %v5146
      %v5475 = vpop.f32.mrf.mxu0
      %v5476 = vadd.f32 %v5411, %v5475
      %5477 = vmatmul.f32.gmra.mxu0 %v5149
      %v5478 = vpop.f32.mrf.mxu0
      %v5479 = vadd.f32 %v5414, %v5478
      %5480 = vmatmul.f32.gmra.mxu0 %v5152
      %v5481 = vpop.f32.mrf.mxu0
      %v5482 = vadd.f32 %v5417, %v5481
      %5483 = vdwg.mxu0
      %v5484 = vmax.f32 %v5307, 0.0
      %v5485 = vmax.f32 %v5437, 0.0
      %v5486 = vmax.f32 %v5310, 0.0
      %v5487 = vmax.f32 %v5440, 0.0
      %v5488 = vmax.f32 %v5313, 0.0
      %v5489 = vmax.f32 %v5443, 0.0
      %v5490 = vmax.f32 %v5316, 0.0
      %v5491 = vmax.f32 %v5446, 0.0
      %v5492 = vmax.f32 %v5319, 0.0
      %v5493 = vmax.f32 %v5449, 0.0
      %v5494 = vmax.f32 %v5322, 0.0
      %v5495 = vmax.f32 %v5452, 0.0
      %v5496 = vmax.f32 %v5325, 0.0
      %v5497 = vmax.f32 %v5455, 0.0
      %v5498 = vmax.f32 %v5328, 0.0
      %v5499 = vmax.f32 %v5458, 0.0
      %v5500 = vmax.f32 %v5331, 0.0
      %v5501 = vmax.f32 %v5461, 0.0
      %v5502 = vmax.f32 %v5334, 0.0
      %v5503 = vmax.f32 %v5464, 0.0
      %v5504 = vmax.f32 %v5337, 0.0
      %v5505 = vmax.f32 %v5467, 0.0
      %v5506 = vmax.f32 %v5340, 0.0
      %v5507 = vmax.f32 %v5470, 0.0
      %v5508 = vmax.f32 %v5343, 0.0
      %v5509 = vmax.f32 %v5473, 0.0
      %v5510 = vmax.f32 %v5346, 0.0
      %v5511 = vmax.f32 %v5476, 0.0
      %v5512 = vmax.f32 %v5349, 0.0
      %v5513 = vmax.f32 %v5479, 0.0
      %v5514 = vmax.f32 %v5352, 0.0
      %v5515 = vmax.f32 %v5482, 0.0
      %v5516 = vadd.f32 %v5484, %v4992
      %v5517 = vadd.f32 %v5485, %v4993
      %v5518 = vadd.f32 %v5486, %v4994
      %v5519 = vadd.f32 %v5487, %v4995
      %v5520 = vadd.f32 %v5488, %v4996
      %v5521 = vadd.f32 %v5489, %v4997
      %v5522 = vadd.f32 %v5490, %v4998
      %v5523 = vadd.f32 %v5491, %v4999
      %v5524 = vadd.f32 %v5492, %v5000
      %v5525 = vadd.f32 %v5493, %v5001
      %v5526 = vadd.f32 %v5494, %v5002
      %v5527 = vadd.f32 %v5495, %v5003
      %v5528 = vadd.f32 %v5496, %v5004
      %v5529 = vadd.f32 %v5497, %v5005
      %v5530 = vadd.f32 %v5498, %v5006
      %v5531 = vadd.f32 %v5499, %v5007
      %v5532 = vadd.f32 %v5500, %v5008
      %v5533 = vadd.f32 %v5501, %v5009
      %v5534 = vadd.f32 %v5502, %v5010
      %v5535 = vadd.f32 %v5503, %v5011
      %v5536 = vadd.f32 %v5504, %v5012
      %v5537 = vadd.f32 %v5505, %v5013
      %v5538 = vadd.f32 %v5506, %v5014
      %v5539 = vadd.f32 %v5507, %v5015
      %v5540 = vadd.f32 %v5508, %v5016
      %v5541 = vadd.f32 %v5509, %v5017
      %v5542 = vadd.f32 %v5510, %v5018
      %v5543 = vadd.f32 %v5511, %v5019
      %v5544 = vadd.f32 %v5512, %v5020
      %v5545 = vadd.f32 %v5513, %v5021
      %v5546 = vadd.f32 %v5514, %v5022
      %v5547 = vadd.f32 %v5515, %v5023
      %v5548 = vld [vmem:[%s3] sm:$0xff]
      %5549 = vmatpush.msra.mxu0 %v5546
      %5550 = vmatpush.msra.mxu0 %v5544
      %5551 = vmatpush.msra.mxu0 %v5542
      %5552 = vmatpush.msra.mxu0 %v5540
      %5553 = vmatpush.msra.mxu0 %v5538
      %5554 = vmatpush.msra.mxu0 %v5536
      %5555 = vmatpush.msra.mxu0 %v5534
      %5556 = vmatpush.msra.mxu0 %v5532
      %5557 = vmatpush.msra.mxu0 %v5530
      %5558 = vmatpush.msra.mxu0 %v5528
      %5559 = vmatpush.msra.mxu0 %v5526
      %5560 = vmatpush.msra.mxu0 %v5524
      %5561 = vmatpush.msra.mxu0 %v5522
      %5562 = vmatpush.msra.mxu0 %v5520
      %5563 = vmatpush.msra.mxu0 %v5518
      %5564 = vmatpush.msra.mxu0 %v5516
      %5565 = vmatmul.f32.gmra.mxu0 %v5548
      %v5566 = vpop.f32.mrf.mxu0
      %v5567 = vadd.f32 0.0, %v5566
      %5568 = vdwg.mxu0
      %5569 = vmatpush.msra.mxu0 %v5547
      %5570 = vmatpush.msra.mxu0 %v5545
      %5571 = vmatpush.msra.mxu0 %v5543
      %5572 = vmatpush.msra.mxu0 %v5541
      %5573 = vmatpush.msra.mxu0 %v5539
      %5574 = vmatpush.msra.mxu0 %v5537
      %5575 = vmatpush.msra.mxu0 %v5535
      %5576 = vmatpush.msra.mxu0 %v5533
      %5577 = vmatpush.msra.mxu0 %v5531
      %5578 = vmatpush.msra.mxu0 %v5529
      %5579 = vmatpush.msra.mxu0 %v5527
      %5580 = vmatpush.msra.mxu0 %v5525
      %5581 = vmatpush.msra.mxu0 %v5523
      %5582 = vmatpush.msra.mxu0 %v5521
      %5583 = vmatpush.msra.mxu0 %v5519
      %5584 = vmatpush.msra.mxu0 %v5517
      %5585 = vmatmul.f32.gmra.mxu0 %v5548
      %v5586 = vpop.f32.mrf.mxu0
      %v5587 = vadd.f32 0.0, %v5586
      %5588 = vdwg.mxu0
      %v5589 = vld [vmem:[%s55] sm:$0xff]
      %v5590 = vld [vmem:[%s55 + $0x8] sm:$0xff]
      %v5591 = vld [vmem:[%s55 + $0x10] sm:$0xff]
      %v5592 = vld [vmem:[%s55 + $0x18] sm:$0xff]
      %v5593 = vld [vmem:[%s55 + $0x20] sm:$0xff]
      %v5594 = vld [vmem:[%s55 + $0x28] sm:$0xff]
      %v5595 = vld [vmem:[%s55 + $0x30] sm:$0xff]
      %v5596 = vld [vmem:[%s55 + $0x38] sm:$0xff]
      %v5597 = vld [vmem:[%s55 + $0x40] sm:$0xff]
      %v5598 = vld [vmem:[%s55 + $0x48] sm:$0xff]
      %v5599 = vld [vmem:[%s55 + $0x50] sm:$0xff]
      %v5600 = vld [vmem:[%s55 + $0x58] sm:$0xff]
      %v5601 = vld [vmem:[%s55 + $0x60] sm:$0xff]
      %v5602 = vld [vmem:[%s55 + $0x68] sm:$0xff]
      %v5603 = vld [vmem:[%s55 + $0x70] sm:$0xff]
      %v5604 = vld [vmem:[%s55 + $0x78] sm:$0xff]
      %v5605 = vld [vmem:[%s55 + $0x80] sm:$0xff]
      %v5606 = vld [vmem:[%s55 + $0x88] sm:$0xff]
      %v5607 = vld [vmem:[%s55 + $0x90] sm:$0xff]
      %v5608 = vld [vmem:[%s55 + $0x98] sm:$0xff]
      %v5609 = vld [vmem:[%s55 + $0xa0] sm:$0xff]
      %v5610 = vld [vmem:[%s55 + $0xa8] sm:$0xff]
      %v5611 = vld [vmem:[%s55 + $0xb0] sm:$0xff]
      %v5612 = vld [vmem:[%s55 + $0xb8] sm:$0xff]
      %v5613 = vld [vmem:[%s55 + $0xc0] sm:$0xff]
      %v5614 = vld [vmem:[%s55 + $0xc8] sm:$0xff]
      %v5615 = vld [vmem:[%s55 + $0xd0] sm:$0xff]
      %v5616 = vld [vmem:[%s55 + $0xd8] sm:$0xff]
      %v5617 = vld [vmem:[%s55 + $0xe0] sm:$0xff]
      %v5618 = vld [vmem:[%s55 + $0xe8] sm:$0xff]
      %v5619 = vld [vmem:[%s55 + $0xf0] sm:$0xff]
      %v5620 = vld [vmem:[%s55 + $0xf8] sm:$0xff]
      %v5621 = vld [vmem:[%s57] sm:$0x1]
      %v5623 = vperm.slane %v5621, 0
      %5625 = vmatpush.msra.mxu0 %v5604
      %5626 = vmatpush.msra.mxu0 %v5603
      %5627 = vmatpush.msra.mxu0 %v5602
      %5628 = vmatpush.msra.mxu0 %v5601
      %5629 = vmatpush.msra.mxu0 %v5600
      %5630 = vmatpush.msra.mxu0 %v5599
      %5631 = vmatpush.msra.mxu0 %v5598
      %5632 = vmatpush.msra.mxu0 %v5597
      %5633 = vmatpush.msra.mxu0 %v5596
      %5634 = vmatpush.msra.mxu0 %v5595
      %5635 = vmatpush.msra.mxu0 %v5594
      %5636 = vmatpush.msra.mxu0 %v5593
      %5637 = vmatpush.msra.mxu0 %v5592
      %5638 = vmatpush.msra.mxu0 %v5591
      %5639 = vmatpush.msra.mxu0 %v5590
      %5640 = vmatpush.msra.mxu0 %v5589
      %5641 = vmatmul.f32.gmra.mxu0 %v5567
      %v5642 = vpop.f32.mrf.mxu0
      %v5643 = vadd.f32 %v5623, %v5642
      %5644 = vdwg.mxu0
      %5645 = vmatpush.msra.mxu0 %v5620
      %5646 = vmatpush.msra.mxu0 %v5619
      %5647 = vmatpush.msra.mxu0 %v5618
      %5648 = vmatpush.msra.mxu0 %v5617
      %5649 = vmatpush.msra.mxu0 %v5616
      %5650 = vmatpush.msra.mxu0 %v5615
      %5651 = vmatpush.msra.mxu0 %v5614
      %5652 = vmatpush.msra.mxu0 %v5613
      %5653 = vmatpush.msra.mxu0 %v5612
      %5654 = vmatpush.msra.mxu0 %v5611
      %5655 = vmatpush.msra.mxu0 %v5610
      %5656 = vmatpush.msra.mxu0 %v5609
      %5657 = vmatpush.msra.mxu0 %v5608
      %5658 = vmatpush.msra.mxu0 %v5607
      %5659 = vmatpush.msra.mxu0 %v5606
      %5660 = vmatpush.msra.mxu0 %v5605
      %5661 = vmatmul.f32.gmra.mxu0 %v5587
      %v5662 = vpop.f32.mrf.mxu0
      %v5663 = vadd.f32 %v5643, %v5662
      %5664 = vdwg.mxu0
      %vm5665 = vcmask 64512
      %v5666 = vsel %vm5665, %v5663, -inf
      %5667 = vmax.xlane.f32.xlu0 %v5666
      %v5668 = vpop.xlane.xlu0 %5667
      %v5669 = vsub.f32 %v5663, %v5668
      %v5670 = vmul.f32 %v5669, 1.442695
      %v5671 = vpow.pop %v5670
      %v5672 = vsel %vm5665, %v5671, 0.0
      %5673 = vadd.xlane.f32.xlu0 %v5672
      %v5674 = vpop.xlane.xlu0 %5673
      %v5675 = vlog2.pop %v5674
      %v5676 = vmul.f32 %v5675, 0.6931472
      %v5677 = vadd.f32 %v5676, %v5668
      %v5678 = vsub.f32 %v5663, %v5677
      %5679 = vst.msk [vmem:[%s902] sm:$0xff] %vm5665, %v5678
      %p5680 = scmp.lt.s32.totalorder %s70, 1
      %s5681 = scalar_select %p5680, %s70, 1
      %s5682 = smul.addr %s5681, 8
      %s5683 = scalar_lea.vmem %s59, %s5682
      // Predicated region
      $region137: #{st_gcn_forward.1} parent=135 // pred_check
        %p5684 = pneg %p702
      $region138: #{st_gcn_forward.1} parent=135 // pred_check_branch
        %5686 = sbr.rel (%p5684) target = $region140
      $region139: #{st_gcn_forward.1} parent=135 // pred_region
        _
      $region140: #{st_gcn_forward.1} parent=135 // pred_fallthru
        _
    $region136: #{st_gcn_forward.1} parent=5 // pred_fallthru
      _
    %p5687 = scmp.le.s32.totalorder 2, %s65
    // Predicated region
    $region141: #{st_gcn_forward.1} parent=5 // pred_check
      %p5688 = pneg %p5687
    $region142: #{st_gcn_forward.1} parent=5 // pred_check_branch
      %5690 = sbr.rel (%p5688) target = $region144
    $region143: #{st_gcn_forward.1} parent=5 // pred_region
      %s5691 = ssub.s32 %s65, 2
      // Predicated region
      $region145: #{st_gcn_forward.1} parent=143 // pred_check
        %p5692 = pneg %p708
      $region146: #{st_gcn_forward.1} parent=143 // pred_check_branch
        %5694 = sbr.rel (%p5692) target = $region148
      $region147: #{st_gcn_forward.1} parent=143 // pred_region
        %p5695 = scmp.lt.s32.totalorder %s71, 1
        %s5696 = scalar_select %p5695, %s71, 1
        %s5697 = smul.addr %s5696, 8
        %s5698 = scalar_lea.vmem %s59, %s5697
      $region148: #{st_gcn_forward.1} parent=143 // pred_fallthru
        _
    $region144: #{st_gcn_forward.1} parent=5 // pred_fallthru
      _
  $region6: #{st_gcn_forward.1} parent=0 // loop_footer
    %s69 = sadd.s32 1, %s65
  $region7: #{st_gcn_forward.1} parent=0 // loop_footer_branch
    %64 = sbr.rel target = $region3
  $region8: #{st_gcn_forward.1} parent=0 // loop_exit
    _

</llo_original>
